<compile_context>
chip_gen: v6e
topology: v6e:2x2x1
jax: 0.10.0
libtpu: 0.0.40
codegen_flags: <defaults>
</compile_context>

<pallas_src>
import numpy as np
import jax
import jax.numpy as jnp
from jax.experimental import pallas as pl
from jax.experimental.pallas import tpu as pltpu


def _downsample_conv_kernel(x_ref, sel_ref, w_ref, o_ref):
    # x_ref:   (1, Cin, 2*TD, H, W)   VMEM input slab
    # sel_ref: (2, W, Wo)             VMEM resident 0/1 even/odd lane-selection matrices
    # w_ref:   (Cout, Cin)            SMEM scalar conv weights (fp32)
    # o_ref:   (1, Cout, TD, Ho, Wo)  VMEM output slab
    _, cin, _, H, W = x_ref.shape
    _, cout, td, ho, wo = o_ref.shape

    x = x_ref[0]                                               # (Cin, 2TD, H, W)

    # --- max-pool over D (major axis): split 2TD -> (TD, 2), elementwise max ------------
    x5 = x.reshape(cin, td, 2, H, W)
    xd = jnp.maximum(x5[:, :, 0], x5[:, :, 1])                 # (Cin, TD, H, W)

    # --- max-pool over H (sublane axis): split H -> (Ho, 2), elementwise max ------------
    xh5 = xd.reshape(cin, td, ho, 2, W)
    xh = jnp.maximum(xh5[:, :, :, 0, :], xh5[:, :, :, 1, :])   # (Cin, TD, Ho, W)

    # --- max-pool over W (lane axis): compact even/odd lanes with 0/1 selection matmuls -
    # Exact for any float dtype: each output column has exactly one 1.0, f32 accumulation.
    rows = cin * td * ho
    m2 = xh.reshape(rows, W)                                   # lane dim unchanged
    even = jnp.dot(m2, sel_ref[0], preferred_element_type=jnp.float32)   # (rows, Wo)
    odd = jnp.dot(m2, sel_ref[1], preferred_element_type=jnp.float32)    # (rows, Wo)
    pooled = jnp.maximum(even, odd).reshape(cin, td, ho, wo)   # (Cin, TD, Ho, Wo) f32

    # --- 1x1x1 conv (bias-free) as VPU FMAs over the tiny channel dims, then ReLU -------
    for co in range(cout):
        acc = pooled[0] * w_ref[co, 0]
        for ci in range(1, cin):
            acc = acc + pooled[ci] * w_ref[co, ci]
        o_ref[0, co] = jnp.maximum(acc, 0.0).astype(o_ref.dtype)


def downsampling_block_forward(x, conv_weight, *, block_bytes_limit=2 * 1024 * 1024):
    """x: (N, Cin, D, H, W); conv_weight: (Cout, Cin, 1, 1, 1).
    Returns ReLU(Conv1x1x1(MaxPool3d_2x2x2(x))) with shape (N, Cout, D//2, H//2, W//2)."""
    N, Cin, D, H, W = x.shape
    assert D % 2 == 0 and H % 2 == 0 and W % 2 == 0, "even spatial dims required"
    Cout = conv_weight.shape[0]
    Do, Ho, Wo = D // 2, H // 2, W // 2

    w2 = conv_weight.reshape(Cout, Cin).astype(jnp.float32)
    itemsize = x.dtype.itemsize

    # Even/odd lane-selection matrices, kept resident in VMEM (constant index_map).
    r = np.arange(W)[:, None]
    c = np.arange(Wo)[None, :]
    sel = jnp.asarray(np.stack([r == 2 * c, r == 2 * c + 1]).astype(np.float32),
                      dtype=x.dtype)                                  # (2, W, Wo)

    # Largest D-slab (in output-depth rows) whose in+out block fits the budget
    # (comfortably inside v7x's smaller scoped VMEM even when double-buffered);
    # keep >= 2 total grid steps so both v7x TensorCores get work.
    per_td_bytes = (Cin * 2 * H * W + Cout * Ho * Wo) * itemsize
    td = 1
    for cand in range(1, Do + 1):
        if Do % cand == 0 and cand * per_td_bytes <= block_bytes_limit:
            td = cand
    while N * (Do // td) < 2 and td > 1:
        td = max(cc for cc in range(1, td) if Do % cc == 0)
    grid = (N, Do // td)

    flops = (2 * N * Cout * Cin * Do * Ho * Wo              # 1x1x1 conv
             + 2 * 2 * N * Cin * Do * Ho * W * Wo)          # even/odd lane-selection matmuls
    bytes_accessed = ((N * Cin * D * H * W + N * Cout * Do * Ho * Wo) * itemsize
                      + 2 * W * Wo * itemsize + Cout * Cin * 4)

    return pl.pallas_call(
        _downsample_conv_kernel,
        out_shape=jax.ShapeDtypeStruct((N, Cout, Do, Ho, Wo), x.dtype),
        grid_spec=pltpu.PrefetchScalarGridSpec(
            num_scalar_prefetch=0,
            grid=grid,
            in_specs=[
                pl.BlockSpec((1, Cin, 2 * td, H, W), lambda n, j: (n, 0, j, 0, 0)),
                pl.BlockSpec((2, W, Wo), lambda n, j: (0, 0, 0)),      # resident constants
                pl.BlockSpec(memory_space=pltpu.MemorySpace.SMEM),
            ],
            out_specs=pl.BlockSpec((1, Cout, td, Ho, Wo), lambda n, j: (n, 0, j, 0, 0)),
        ),
        compiler_params=pltpu.CompilerParams(
            dimension_semantics=("parallel", "parallel")),
        cost_estimate=pl.CostEstimate(flops=flops, transcendentals=0,
                                      bytes_accessed=bytes_accessed),
    )(x, sel, w2)


def reference_forward(x, conv_weight):
    # Pure-JAX reference of the PyTorch forward: maxpool2 -> 1x1x1 conv -> ReLU.
    N, Cin, D, H, W = x.shape
    Cout = conv_weight.shape[0]
    pooled = x.reshape(N, Cin, D // 2, 2, H // 2, 2, W // 2, 2).max(axis=(3, 5, 7))
    y = jnp.einsum('ncdhw,oc->nodhw', pooled, conv_weight.reshape(Cout, Cin))
    return jnp.maximum(y, 0.0)


if __name__ == "__main__":
    key = jax.random.PRNGKey(0)
    kx, kw = jax.random.split(key)

    N, Cin, Cout, D, H, W = 2, 4, 8, 16, 16, 16
    x = jax.random.normal(kx, (N, Cin, D, H, W), dtype=jnp.float32)
    # Conv3d weight shape: (Cout, Cin, 1, 1, 1), bias=False
    fan_in = Cin * 1 * 1 * 1
    conv_weight = jax.random.normal(kw, (Cout, Cin, 1, 1, 1),
                                    dtype=jnp.float32) * (1.0 / np.sqrt(fan_in))

    out = jax.block_until_ready(downsampling_block_forward(x, conv_weight))
    ref = jax.block_until_ready(reference_forward(x, conv_weight))

    assert out.shape == (N, Cout, D // 2, H // 2, W // 2), out.shape
    np.testing.assert_allclose(np.asarray(out), np.asarray(ref), rtol=1e-5, atol=1e-5)
    print("KERNEL_OK")
</pallas_src>

<mosaic_0001>
module attributes {stable_mosaic.version = 11 : i64} {
  func.func @_downsample_conv_kernel(%arg0: i32, %arg1: i32, %arg2: memref<1x4x16x16x16xf32, #tpu.memory_space<vmem>>, %arg3: memref<2x16x8xf32, #tpu.memory_space<vmem>>, %arg4: memref<8x4xf32, #tpu.memory_space<smem>>, %arg5: memref<1x8x8x8x8xf32, #tpu.memory_space<vmem>>) attributes {dimension_semantics = [#tpu.dimension_semantics<parallel>, #tpu.dimension_semantics<parallel>], iteration_bounds = array<i64: 2, 1>, scalar_prefetch = 0 : i64, scratch_operands = 0 : i64, tpu.core_type = #tpu.core_type<tc>, window_params = [{transform_indices = @transform_0, window_bounds = array<i64: 1, 4, 16, 16, 16>}, {pipeline_mode = #tpu.pipeline_mode<synchronous>, transform_indices = @transform_1, window_bounds = array<i64: 2, 16, 8>}, {transform_indices = @transform_2, window_bounds = array<i64: 8, 4>}, {transform_indices = @transform_3, window_bounds = array<i64: 1, 8, 8, 8, 8>}]} {
    %c0 = arith.constant 0 : index
    %c0_0 = arith.constant 0 : index
    %c0_1 = arith.constant 0 : index
    %c0_2 = arith.constant 0 : index
    %c0_3 = arith.constant 0 : index
    %0 = vector.load %arg2[%c0, %c0_0, %c0_1, %c0_2, %c0_3] : memref<1x4x16x16x16xf32, #tpu.memory_space<vmem>>, vector<1x4x16x16x16xf32>
    %1 = vector.shape_cast %0 : vector<1x4x16x16x16xf32> to vector<4x16x16x16xf32>
    %2 = vector.shape_cast %1 : vector<4x16x16x16xf32> to vector<4x8x2x16x16xf32>
    %3 = vector.extract_strided_slice %2 {offsets = [0, 0, 0, 0, 0], sizes = [4, 8, 1, 16, 16], strides = [1, 1, 1, 1, 1]} : vector<4x8x2x16x16xf32> to vector<4x8x1x16x16xf32>
    %4 = vector.shape_cast %3 : vector<4x8x1x16x16xf32> to vector<4x8x16x16xf32>
    %5 = vector.extract_strided_slice %2 {offsets = [0, 0, 1, 0, 0], sizes = [4, 8, 1, 16, 16], strides = [1, 1, 1, 1, 1]} : vector<4x8x2x16x16xf32> to vector<4x8x1x16x16xf32>
    %6 = vector.shape_cast %5 : vector<4x8x1x16x16xf32> to vector<4x8x16x16xf32>
    %7 = arith.maximumf %4, %6 : vector<4x8x16x16xf32>
    %8 = vector.shape_cast %7 : vector<4x8x16x16xf32> to vector<4x8x8x2x16xf32>
    %9 = vector.extract_strided_slice %8 {offsets = [0, 0, 0, 0, 0], sizes = [4, 8, 8, 1, 16], strides = [1, 1, 1, 1, 1]} : vector<4x8x8x2x16xf32> to vector<4x8x8x1x16xf32>
    %10 = vector.shape_cast %9 : vector<4x8x8x1x16xf32> to vector<4x8x8x16xf32>
    %11 = vector.extract_strided_slice %8 {offsets = [0, 0, 0, 1, 0], sizes = [4, 8, 8, 1, 16], strides = [1, 1, 1, 1, 1]} : vector<4x8x8x2x16xf32> to vector<4x8x8x1x16xf32>
    %12 = vector.shape_cast %11 : vector<4x8x8x1x16xf32> to vector<4x8x8x16xf32>
    %13 = arith.maximumf %10, %12 : vector<4x8x8x16xf32>
    %14 = vector.shape_cast %13 : vector<4x8x8x16xf32> to vector<256x16xf32>
    %c0_4 = arith.constant 0 : index
    %c0_5 = arith.constant 0 : index
    %c0_6 = arith.constant 0 : index
    %15 = vector.load %arg3[%c0_4, %c0_5, %c0_6] : memref<2x16x8xf32, #tpu.memory_space<vmem>>, vector<1x16x8xf32>
    %16 = vector.shape_cast %15 : vector<1x16x8xf32> to vector<16x8xf32>
    %cst = arith.constant dense<0.000000e+00> : vector<256x8xf32>
    %17 = tpu.matmul %14, %16, %cst {dimension_numbers = #tpu.dot_dimension_numbers<[1], [0], [0], [1], [0, 0, 1, 1], [], []>} : vector<256x16xf32>, vector<16x8xf32>, vector<256x8xf32> -> vector<256x8xf32>
    %c1 = arith.constant 1 : index
    %c0_7 = arith.constant 0 : index
    %c0_8 = arith.constant 0 : index
    %18 = vector.load %arg3[%c1, %c0_7, %c0_8] : memref<2x16x8xf32, #tpu.memory_space<vmem>>, vector<1x16x8xf32>
    %19 = vector.shape_cast %18 : vector<1x16x8xf32> to vector<16x8xf32>
    %cst_9 = arith.constant dense<0.000000e+00> : vector<256x8xf32>
    %20 = tpu.matmul %14, %19, %cst_9 {dimension_numbers = #tpu.dot_dimension_numbers<[1], [0], [0], [1], [0, 0, 1, 1], [], []>} : vector<256x16xf32>, vector<16x8xf32>, vector<256x8xf32> -> vector<256x8xf32>
    %21 = arith.maximumf %17, %20 : vector<256x8xf32>
    %22 = vector.shape_cast %21 : vector<256x8xf32> to vector<4x8x8x8xf32>
    %23 = vector.extract_strided_slice %22 {offsets = [0, 0, 0, 0], sizes = [1, 8, 8, 8], strides = [1, 1, 1, 1]} : vector<4x8x8x8xf32> to vector<1x8x8x8xf32>
    %24 = vector.shape_cast %23 : vector<1x8x8x8xf32> to vector<8x8x8xf32>
    %c0_10 = arith.constant 0 : index
    %c0_11 = arith.constant 0 : index
    %25 = memref.load %arg4[%c0_10, %c0_11] : memref<8x4xf32, #tpu.memory_space<smem>>
    %26 = vector.broadcast %25 : f32 to vector<8x8x8xf32>
    %27 = arith.mulf %24, %26 : vector<8x8x8xf32>
    %28 = vector.extract_strided_slice %22 {offsets = [1, 0, 0, 0], sizes = [1, 8, 8, 8], strides = [1, 1, 1, 1]} : vector<4x8x8x8xf32> to vector<1x8x8x8xf32>
    %29 = vector.shape_cast %28 : vector<1x8x8x8xf32> to vector<8x8x8xf32>
    %c0_12 = arith.constant 0 : index
    %c1_13 = arith.constant 1 : index
    %30 = memref.load %arg4[%c0_12, %c1_13] : memref<8x4xf32, #tpu.memory_space<smem>>
    %31 = vector.broadcast %30 : f32 to vector<8x8x8xf32>
    %32 = arith.mulf %29, %31 : vector<8x8x8xf32>
    %33 = arith.addf %27, %32 : vector<8x8x8xf32>
    %34 = vector.extract_strided_slice %22 {offsets = [2, 0, 0, 0], sizes = [1, 8, 8, 8], strides = [1, 1, 1, 1]} : vector<4x8x8x8xf32> to vector<1x8x8x8xf32>
    %35 = vector.shape_cast %34 : vector<1x8x8x8xf32> to vector<8x8x8xf32>
    %c0_14 = arith.constant 0 : index
    %c2 = arith.constant 2 : index
    %36 = memref.load %arg4[%c0_14, %c2] : memref<8x4xf32, #tpu.memory_space<smem>>
    %37 = vector.broadcast %36 : f32 to vector<8x8x8xf32>
    %38 = arith.mulf %35, %37 : vector<8x8x8xf32>
    %39 = arith.addf %33, %38 : vector<8x8x8xf32>
    %40 = vector.extract_strided_slice %22 {offsets = [3, 0, 0, 0], sizes = [1, 8, 8, 8], strides = [1, 1, 1, 1]} : vector<4x8x8x8xf32> to vector<1x8x8x8xf32>
    %41 = vector.shape_cast %40 : vector<1x8x8x8xf32> to vector<8x8x8xf32>
    %c0_15 = arith.constant 0 : index
    %c3 = arith.constant 3 : index
    %42 = memref.load %arg4[%c0_15, %c3] : memref<8x4xf32, #tpu.memory_space<smem>>
    %43 = vector.broadcast %42 : f32 to vector<8x8x8xf32>
    %44 = arith.mulf %41, %43 : vector<8x8x8xf32>
    %45 = arith.addf %39, %44 : vector<8x8x8xf32>
    %cst_16 = arith.constant 0.000000e+00 : f32
    %46 = vector.broadcast %cst_16 : f32 to vector<8x8x8xf32>
    %47 = arith.maximumf %45, %46 : vector<8x8x8xf32>
    %c0_17 = arith.constant 0 : index
    %c0_18 = arith.constant 0 : index
    %c0_19 = arith.constant 0 : index
    %c0_20 = arith.constant 0 : index
    %c0_21 = arith.constant 0 : index
    %48 = vector.load %arg5[%c0_17, %c0_18, %c0_19, %c0_20, %c0_21] : memref<1x8x8x8x8xf32, #tpu.memory_space<vmem>>, vector<1x1x8x8x8xf32>
    %49 = vector.shape_cast %48 : vector<1x1x8x8x8xf32> to vector<8x8x8xf32>
    %50 = vector.shape_cast %47 : vector<8x8x8xf32> to vector<1x1x8x8x8xf32>
    tpu.vector_store %arg5[%c0_17, %c0_18, %c0_19, %c0_20, %c0_21], %50 {strides = array<i32>} : memref<1x8x8x8x8xf32, #tpu.memory_space<vmem>>, vector<1x1x8x8x8xf32>,
    %51 = vector.extract_strided_slice %22 {offsets = [0, 0, 0, 0], sizes = [1, 8, 8, 8], strides = [1, 1, 1, 1]} : vector<4x8x8x8xf32> to vector<1x8x8x8xf32>
    %52 = vector.shape_cast %51 : vector<1x8x8x8xf32> to vector<8x8x8xf32>
    %c1_22 = arith.constant 1 : index
    %c0_23 = arith.constant 0 : index
    %53 = memref.load %arg4[%c1_22, %c0_23] : memref<8x4xf32, #tpu.memory_space<smem>>
    %54 = vector.broadcast %53 : f32 to vector<8x8x8xf32>
    %55 = arith.mulf %52, %54 : vector<8x8x8xf32>
    %56 = vector.extract_strided_slice %22 {offsets = [1, 0, 0, 0], sizes = [1, 8, 8, 8], strides = [1, 1, 1, 1]} : vector<4x8x8x8xf32> to vector<1x8x8x8xf32>
    %57 = vector.shape_cast %56 : vector<1x8x8x8xf32> to vector<8x8x8xf32>
    %c1_24 = arith.constant 1 : index
    %c1_25 = arith.constant 1 : index
    %58 = memref.load %arg4[%c1_24, %c1_25] : memref<8x4xf32, #tpu.memory_space<smem>>
    %59 = vector.broadcast %58 : f32 to vector<8x8x8xf32>
    %60 = arith.mulf %57, %59 : vector<8x8x8xf32>
    %61 = arith.addf %55, %60 : vector<8x8x8xf32>
    %62 = vector.extract_strided_slice %22 {offsets = [2, 0, 0, 0], sizes = [1, 8, 8, 8], strides = [1, 1, 1, 1]} : vector<4x8x8x8xf32> to vector<1x8x8x8xf32>
    %63 = vector.shape_cast %62 : vector<1x8x8x8xf32> to vector<8x8x8xf32>
    %c1_26 = arith.constant 1 : index
    %c2_27 = arith.constant 2 : index
    %64 = memref.load %arg4[%c1_26, %c2_27] : memref<8x4xf32, #tpu.memory_space<smem>>
    %65 = vector.broadcast %64 : f32 to vector<8x8x8xf32>
    %66 = arith.mulf %63, %65 : vector<8x8x8xf32>
    %67 = arith.addf %61, %66 : vector<8x8x8xf32>
    %68 = vector.extract_strided_slice %22 {offsets = [3, 0, 0, 0], sizes = [1, 8, 8, 8], strides = [1, 1, 1, 1]} : vector<4x8x8x8xf32> to vector<1x8x8x8xf32>
    %69 = vector.shape_cast %68 : vector<1x8x8x8xf32> to vector<8x8x8xf32>
    %c1_28 = arith.constant 1 : index
    %c3_29 = arith.constant 3 : index
    %70 = memref.load %arg4[%c1_28, %c3_29] : memref<8x4xf32, #tpu.memory_space<smem>>
    %71 = vector.broadcast %70 : f32 to vector<8x8x8xf32>
    %72 = arith.mulf %69, %71 : vector<8x8x8xf32>
    %73 = arith.addf %67, %72 : vector<8x8x8xf32>
    %cst_30 = arith.constant 0.000000e+00 : f32
    %74 = vector.broadcast %cst_30 : f32 to vector<8x8x8xf32>
    %75 = arith.maximumf %73, %74 : vector<8x8x8xf32>
    %c0_31 = arith.constant 0 : index
    %c1_32 = arith.constant 1 : index
    %c0_33 = arith.constant 0 : index
    %c0_34 = arith.constant 0 : index
    %c0_35 = arith.constant 0 : index
    %76 = vector.load %arg5[%c0_31, %c1_32, %c0_33, %c0_34, %c0_35] : memref<1x8x8x8x8xf32, #tpu.memory_space<vmem>>, vector<1x1x8x8x8xf32>
    %77 = vector.shape_cast %76 : vector<1x1x8x8x8xf32> to vector<8x8x8xf32>
    %78 = vector.shape_cast %75 : vector<8x8x8xf32> to vector<1x1x8x8x8xf32>
    tpu.vector_store %arg5[%c0_31, %c1_32, %c0_33, %c0_34, %c0_35], %78 {strides = array<i32>} : memref<1x8x8x8x8xf32, #tpu.memory_space<vmem>>, vector<1x1x8x8x8xf32>,
    %79 = vector.extract_strided_slice %22 {offsets = [0, 0, 0, 0], sizes = [1, 8, 8, 8], strides = [1, 1, 1, 1]} : vector<4x8x8x8xf32> to vector<1x8x8x8xf32>
    %80 = vector.shape_cast %79 : vector<1x8x8x8xf32> to vector<8x8x8xf32>
    %c2_36 = arith.constant 2 : index
    %c0_37 = arith.constant 0 : index
    %81 = memref.load %arg4[%c2_36, %c0_37] : memref<8x4xf32, #tpu.memory_space<smem>>
    %82 = vector.broadcast %81 : f32 to vector<8x8x8xf32>
    %83 = arith.mulf %80, %82 : vector<8x8x8xf32>
    %84 = vector.extract_strided_slice %22 {offsets = [1, 0, 0, 0], sizes = [1, 8, 8, 8], strides = [1, 1, 1, 1]} : vector<4x8x8x8xf32> to vector<1x8x8x8xf32>
    %85 = vector.shape_cast %84 : vector<1x8x8x8xf32> to vector<8x8x8xf32>
    %c2_38 = arith.constant 2 : index
    %c1_39 = arith.constant 1 : index
    %86 = memref.load %arg4[%c2_38, %c1_39] : memref<8x4xf32, #tpu.memory_space<smem>>
    %87 = vector.broadcast %86 : f32 to vector<8x8x8xf32>
    %88 = arith.mulf %85, %87 : vector<8x8x8xf32>
    %89 = arith.addf %83, %88 : vector<8x8x8xf32>
    %90 = vector.extract_strided_slice %22 {offsets = [2, 0, 0, 0], sizes = [1, 8, 8, 8], strides = [1, 1, 1, 1]} : vector<4x8x8x8xf32> to vector<1x8x8x8xf32>
    %91 = vector.shape_cast %90 : vector<1x8x8x8xf32> to vector<8x8x8xf32>
    %c2_40 = arith.constant 2 : index
    %c2_41 = arith.constant 2 : index
    %92 = memref.load %arg4[%c2_40, %c2_41] : memref<8x4xf32, #tpu.memory_space<smem>>
    %93 = vector.broadcast %92 : f32 to vector<8x8x8xf32>
    %94 = arith.mulf %91, %93 : vector<8x8x8xf32>
    %95 = arith.addf %89, %94 : vector<8x8x8xf32>
    %96 = vector.extract_strided_slice %22 {offsets = [3, 0, 0, 0], sizes = [1, 8, 8, 8], strides = [1, 1, 1, 1]} : vector<4x8x8x8xf32> to vector<1x8x8x8xf32>
    %97 = vector.shape_cast %96 : vector<1x8x8x8xf32> to vector<8x8x8xf32>
    %c2_42 = arith.constant 2 : index
    %c3_43 = arith.constant 3 : index
    %98 = memref.load %arg4[%c2_42, %c3_43] : memref<8x4xf32, #tpu.memory_space<smem>>
    %99 = vector.broadcast %98 : f32 to vector<8x8x8xf32>
    %100 = arith.mulf %97, %99 : vector<8x8x8xf32>
    %101 = arith.addf %95, %100 : vector<8x8x8xf32>
    %cst_44 = arith.constant 0.000000e+00 : f32
    %102 = vector.broadcast %cst_44 : f32 to vector<8x8x8xf32>
    %103 = arith.maximumf %101, %102 : vector<8x8x8xf32>
    %c0_45 = arith.constant 0 : index
    %c2_46 = arith.constant 2 : index
    %c0_47 = arith.constant 0 : index
    %c0_48 = arith.constant 0 : index
    %c0_49 = arith.constant 0 : index
    %104 = vector.load %arg5[%c0_45, %c2_46, %c0_47, %c0_48, %c0_49] : memref<1x8x8x8x8xf32, #tpu.memory_space<vmem>>, vector<1x1x8x8x8xf32>
    %105 = vector.shape_cast %104 : vector<1x1x8x8x8xf32> to vector<8x8x8xf32>
    %106 = vector.shape_cast %103 : vector<8x8x8xf32> to vector<1x1x8x8x8xf32>
    tpu.vector_store %arg5[%c0_45, %c2_46, %c0_47, %c0_48, %c0_49], %106 {strides = array<i32>} : memref<1x8x8x8x8xf32, #tpu.memory_space<vmem>>, vector<1x1x8x8x8xf32>,
    %107 = vector.extract_strided_slice %22 {offsets = [0, 0, 0, 0], sizes = [1, 8, 8, 8], strides = [1, 1, 1, 1]} : vector<4x8x8x8xf32> to vector<1x8x8x8xf32>
    %108 = vector.shape_cast %107 : vector<1x8x8x8xf32> to vector<8x8x8xf32>
    %c3_50 = arith.constant 3 : index
    %c0_51 = arith.constant 0 : index
    %109 = memref.load %arg4[%c3_50, %c0_51] : memref<8x4xf32, #tpu.memory_space<smem>>
    %110 = vector.broadcast %109 : f32 to vector<8x8x8xf32>
    %111 = arith.mulf %108, %110 : vector<8x8x8xf32>
    %112 = vector.extract_strided_slice %22 {offsets = [1, 0, 0, 0], sizes = [1, 8, 8, 8], strides = [1, 1, 1, 1]} : vector<4x8x8x8xf32> to vector<1x8x8x8xf32>
    %113 = vector.shape_cast %112 : vector<1x8x8x8xf32> to vector<8x8x8xf32>
    %c3_52 = arith.constant 3 : index
    %c1_53 = arith.constant 1 : index
    %114 = memref.load %arg4[%c3_52, %c1_53] : memref<8x4xf32, #tpu.memory_space<smem>>
    %115 = vector.broadcast %114 : f32 to vector<8x8x8xf32>
    %116 = arith.mulf %113, %115 : vector<8x8x8xf32>
    %117 = arith.addf %111, %116 : vector<8x8x8xf32>
    %118 = vector.extract_strided_slice %22 {offsets = [2, 0, 0, 0], sizes = [1, 8, 8, 8], strides = [1, 1, 1, 1]} : vector<4x8x8x8xf32> to vector<1x8x8x8xf32>
    %119 = vector.shape_cast %118 : vector<1x8x8x8xf32> to vector<8x8x8xf32>
    %c3_54 = arith.constant 3 : index
    %c2_55 = arith.constant 2 : index
    %120 = memref.load %arg4[%c3_54, %c2_55] : memref<8x4xf32, #tpu.memory_space<smem>>
    %121 = vector.broadcast %120 : f32 to vector<8x8x8xf32>
    %122 = arith.mulf %119, %121 : vector<8x8x8xf32>
    %123 = arith.addf %117, %122 : vector<8x8x8xf32>
    %124 = vector.extract_strided_slice %22 {offsets = [3, 0, 0, 0], sizes = [1, 8, 8, 8], strides = [1, 1, 1, 1]} : vector<4x8x8x8xf32> to vector<1x8x8x8xf32>
    %125 = vector.shape_cast %124 : vector<1x8x8x8xf32> to vector<8x8x8xf32>
    %c3_56 = arith.constant 3 : index
    %c3_57 = arith.constant 3 : index
    %126 = memref.load %arg4[%c3_56, %c3_57] : memref<8x4xf32, #tpu.memory_space<smem>>
    %127 = vector.broadcast %126 : f32 to vector<8x8x8xf32>
    %128 = arith.mulf %125, %127 : vector<8x8x8xf32>
    %129 = arith.addf %123, %128 : vector<8x8x8xf32>
    %cst_58 = arith.constant 0.000000e+00 : f32
    %130 = vector.broadcast %cst_58 : f32 to vector<8x8x8xf32>
    %131 = arith.maximumf %129, %130 : vector<8x8x8xf32>
    %c0_59 = arith.constant 0 : index
    %c3_60 = arith.constant 3 : index
    %c0_61 = arith.constant 0 : index
    %c0_62 = arith.constant 0 : index
    %c0_63 = arith.constant 0 : index
    %132 = vector.load %arg5[%c0_59, %c3_60, %c0_61, %c0_62, %c0_63] : memref<1x8x8x8x8xf32, #tpu.memory_space<vmem>>, vector<1x1x8x8x8xf32>
    %133 = vector.shape_cast %132 : vector<1x1x8x8x8xf32> to vector<8x8x8xf32>
    %134 = vector.shape_cast %131 : vector<8x8x8xf32> to vector<1x1x8x8x8xf32>
    tpu.vector_store %arg5[%c0_59, %c3_60, %c0_61, %c0_62, %c0_63], %134 {strides = array<i32>} : memref<1x8x8x8x8xf32, #tpu.memory_space<vmem>>, vector<1x1x8x8x8xf32>,
    %135 = vector.extract_strided_slice %22 {offsets = [0, 0, 0, 0], sizes = [1, 8, 8, 8], strides = [1, 1, 1, 1]} : vector<4x8x8x8xf32> to vector<1x8x8x8xf32>
    %136 = vector.shape_cast %135 : vector<1x8x8x8xf32> to vector<8x8x8xf32>
    %c4 = arith.constant 4 : index
    %c0_64 = arith.constant 0 : index
    %137 = memref.load %arg4[%c4, %c0_64] : memref<8x4xf32, #tpu.memory_space<smem>>
    %138 = vector.broadcast %137 : f32 to vector<8x8x8xf32>
    %139 = arith.mulf %136, %138 : vector<8x8x8xf32>
    %140 = vector.extract_strided_slice %22 {offsets = [1, 0, 0, 0], sizes = [1, 8, 8, 8], strides = [1, 1, 1, 1]} : vector<4x8x8x8xf32> to vector<1x8x8x8xf32>
    %141 = vector.shape_cast %140 : vector<1x8x8x8xf32> to vector<8x8x8xf32>
    %c4_65 = arith.constant 4 : index
    %c1_66 = arith.constant 1 : index
    %142 = memref.load %arg4[%c4_65, %c1_66] : memref<8x4xf32, #tpu.memory_space<smem>>
    %143 = vector.broadcast %142 : f32 to vector<8x8x8xf32>
    %144 = arith.mulf %141, %143 : vector<8x8x8xf32>
    %145 = arith.addf %139, %144 : vector<8x8x8xf32>
    %146 = vector.extract_strided_slice %22 {offsets = [2, 0, 0, 0], sizes = [1, 8, 8, 8], strides = [1, 1, 1, 1]} : vector<4x8x8x8xf32> to vector<1x8x8x8xf32>
    %147 = vector.shape_cast %146 : vector<1x8x8x8xf32> to vector<8x8x8xf32>
    %c4_67 = arith.constant 4 : index
    %c2_68 = arith.constant 2 : index
    %148 = memref.load %arg4[%c4_67, %c2_68] : memref<8x4xf32, #tpu.memory_space<smem>>
    %149 = vector.broadcast %148 : f32 to vector<8x8x8xf32>
    %150 = arith.mulf %147, %149 : vector<8x8x8xf32>
    %151 = arith.addf %145, %150 : vector<8x8x8xf32>
    %152 = vector.extract_strided_slice %22 {offsets = [3, 0, 0, 0], sizes = [1, 8, 8, 8], strides = [1, 1, 1, 1]} : vector<4x8x8x8xf32> to vector<1x8x8x8xf32>
    %153 = vector.shape_cast %152 : vector<1x8x8x8xf32> to vector<8x8x8xf32>
    %c4_69 = arith.constant 4 : index
    %c3_70 = arith.constant 3 : index
    %154 = memref.load %arg4[%c4_69, %c3_70] : memref<8x4xf32, #tpu.memory_space<smem>>
    %155 = vector.broadcast %154 : f32 to vector<8x8x8xf32>
    %156 = arith.mulf %153, %155 : vector<8x8x8xf32>
    %157 = arith.addf %151, %156 : vector<8x8x8xf32>
    %cst_71 = arith.constant 0.000000e+00 : f32
    %158 = vector.broadcast %cst_71 : f32 to vector<8x8x8xf32>
    %159 = arith.maximumf %157, %158 : vector<8x8x8xf32>
    %c0_72 = arith.constant 0 : index
    %c4_73 = arith.constant 4 : index
    %c0_74 = arith.constant 0 : index
    %c0_75 = arith.constant 0 : index
    %c0_76 = arith.constant 0 : index
    %160 = vector.load %arg5[%c0_72, %c4_73, %c0_74, %c0_75, %c0_76] : memref<1x8x8x8x8xf32, #tpu.memory_space<vmem>>, vector<1x1x8x8x8xf32>
    %161 = vector.shape_cast %160 : vector<1x1x8x8x8xf32> to vector<8x8x8xf32>
    %162 = vector.shape_cast %159 : vector<8x8x8xf32> to vector<1x1x8x8x8xf32>
    tpu.vector_store %arg5[%c0_72, %c4_73, %c0_74, %c0_75, %c0_76], %162 {strides = array<i32>} : memref<1x8x8x8x8xf32, #tpu.memory_space<vmem>>, vector<1x1x8x8x8xf32>,
    %163 = vector.extract_strided_slice %22 {offsets = [0, 0, 0, 0], sizes = [1, 8, 8, 8], strides = [1, 1, 1, 1]} : vector<4x8x8x8xf32> to vector<1x8x8x8xf32>
    %164 = vector.shape_cast %163 : vector<1x8x8x8xf32> to vector<8x8x8xf32>
    %c5 = arith.constant 5 : index
    %c0_77 = arith.constant 0 : index
    %165 = memref.load %arg4[%c5, %c0_77] : memref<8x4xf32, #tpu.memory_space<smem>>
    %166 = vector.broadcast %165 : f32 to vector<8x8x8xf32>
    %167 = arith.mulf %164, %166 : vector<8x8x8xf32>
    %168 = vector.extract_strided_slice %22 {offsets = [1, 0, 0, 0], sizes = [1, 8, 8, 8], strides = [1, 1, 1, 1]} : vector<4x8x8x8xf32> to vector<1x8x8x8xf32>
    %169 = vector.shape_cast %168 : vector<1x8x8x8xf32> to vector<8x8x8xf32>
    %c5_78 = arith.constant 5 : index
    %c1_79 = arith.constant 1 : index
    %170 = memref.load %arg4[%c5_78, %c1_79] : memref<8x4xf32, #tpu.memory_space<smem>>
    %171 = vector.broadcast %170 : f32 to vector<8x8x8xf32>
    %172 = arith.mulf %169, %171 : vector<8x8x8xf32>
    %173 = arith.addf %167, %172 : vector<8x8x8xf32>
    %174 = vector.extract_strided_slice %22 {offsets = [2, 0, 0, 0], sizes = [1, 8, 8, 8], strides = [1, 1, 1, 1]} : vector<4x8x8x8xf32> to vector<1x8x8x8xf32>
    %175 = vector.shape_cast %174 : vector<1x8x8x8xf32> to vector<8x8x8xf32>
    %c5_80 = arith.constant 5 : index
    %c2_81 = arith.constant 2 : index
    %176 = memref.load %arg4[%c5_80, %c2_81] : memref<8x4xf32, #tpu.memory_space<smem>>
    %177 = vector.broadcast %176 : f32 to vector<8x8x8xf32>
    %178 = arith.mulf %175, %177 : vector<8x8x8xf32>
    %179 = arith.addf %173, %178 : vector<8x8x8xf32>
    %180 = vector.extract_strided_slice %22 {offsets = [3, 0, 0, 0], sizes = [1, 8, 8, 8], strides = [1, 1, 1, 1]} : vector<4x8x8x8xf32> to vector<1x8x8x8xf32>
    %181 = vector.shape_cast %180 : vector<1x8x8x8xf32> to vector<8x8x8xf32>
    %c5_82 = arith.constant 5 : index
    %c3_83 = arith.constant 3 : index
    %182 = memref.load %arg4[%c5_82, %c3_83] : memref<8x4xf32, #tpu.memory_space<smem>>
    %183 = vector.broadcast %182 : f32 to vector<8x8x8xf32>
    %184 = arith.mulf %181, %183 : vector<8x8x8xf32>
    %185 = arith.addf %179, %184 : vector<8x8x8xf32>
    %cst_84 = arith.constant 0.000000e+00 : f32
    %186 = vector.broadcast %cst_84 : f32 to vector<8x8x8xf32>
    %187 = arith.maximumf %185, %186 : vector<8x8x8xf32>
    %c0_85 = arith.constant 0 : index
    %c5_86 = arith.constant 5 : index
    %c0_87 = arith.constant 0 : index
    %c0_88 = arith.constant 0 : index
    %c0_89 = arith.constant 0 : index
    %188 = vector.load %arg5[%c0_85, %c5_86, %c0_87, %c0_88, %c0_89] : memref<1x8x8x8x8xf32, #tpu.memory_space<vmem>>, vector<1x1x8x8x8xf32>
    %189 = vector.shape_cast %188 : vector<1x1x8x8x8xf32> to vector<8x8x8xf32>
    %190 = vector.shape_cast %187 : vector<8x8x8xf32> to vector<1x1x8x8x8xf32>
    tpu.vector_store %arg5[%c0_85, %c5_86, %c0_87, %c0_88, %c0_89], %190 {strides = array<i32>} : memref<1x8x8x8x8xf32, #tpu.memory_space<vmem>>, vector<1x1x8x8x8xf32>,
    %191 = vector.extract_strided_slice %22 {offsets = [0, 0, 0, 0], sizes = [1, 8, 8, 8], strides = [1, 1, 1, 1]} : vector<4x8x8x8xf32> to vector<1x8x8x8xf32>
    %192 = vector.shape_cast %191 : vector<1x8x8x8xf32> to vector<8x8x8xf32>
    %c6 = arith.constant 6 : index
    %c0_90 = arith.constant 0 : index
    %193 = memref.load %arg4[%c6, %c0_90] : memref<8x4xf32, #tpu.memory_space<smem>>
    %194 = vector.broadcast %193 : f32 to vector<8x8x8xf32>
    %195 = arith.mulf %192, %194 : vector<8x8x8xf32>
    %196 = vector.extract_strided_slice %22 {offsets = [1, 0, 0, 0], sizes = [1, 8, 8, 8], strides = [1, 1, 1, 1]} : vector<4x8x8x8xf32> to vector<1x8x8x8xf32>
    %197 = vector.shape_cast %196 : vector<1x8x8x8xf32> to vector<8x8x8xf32>
    %c6_91 = arith.constant 6 : index
    %c1_92 = arith.constant 1 : index
    %198 = memref.load %arg4[%c6_91, %c1_92] : memref<8x4xf32, #tpu.memory_space<smem>>
    %199 = vector.broadcast %198 : f32 to vector<8x8x8xf32>
    %200 = arith.mulf %197, %199 : vector<8x8x8xf32>
    %201 = arith.addf %195, %200 : vector<8x8x8xf32>
    %202 = vector.extract_strided_slice %22 {offsets = [2, 0, 0, 0], sizes = [1, 8, 8, 8], strides = [1, 1, 1, 1]} : vector<4x8x8x8xf32> to vector<1x8x8x8xf32>
    %203 = vector.shape_cast %202 : vector<1x8x8x8xf32> to vector<8x8x8xf32>
    %c6_93 = arith.constant 6 : index
    %c2_94 = arith.constant 2 : index
    %204 = memref.load %arg4[%c6_93, %c2_94] : memref<8x4xf32, #tpu.memory_space<smem>>
    %205 = vector.broadcast %204 : f32 to vector<8x8x8xf32>
    %206 = arith.mulf %203, %205 : vector<8x8x8xf32>
    %207 = arith.addf %201, %206 : vector<8x8x8xf32>
    %208 = vector.extract_strided_slice %22 {offsets = [3, 0, 0, 0], sizes = [1, 8, 8, 8], strides = [1, 1, 1, 1]} : vector<4x8x8x8xf32> to vector<1x8x8x8xf32>
    %209 = vector.shape_cast %208 : vector<1x8x8x8xf32> to vector<8x8x8xf32>
    %c6_95 = arith.constant 6 : index
    %c3_96 = arith.constant 3 : index
    %210 = memref.load %arg4[%c6_95, %c3_96] : memref<8x4xf32, #tpu.memory_space<smem>>
    %211 = vector.broadcast %210 : f32 to vector<8x8x8xf32>
    %212 = arith.mulf %209, %211 : vector<8x8x8xf32>
    %213 = arith.addf %207, %212 : vector<8x8x8xf32>
    %cst_97 = arith.constant 0.000000e+00 : f32
    %214 = vector.broadcast %cst_97 : f32 to vector<8x8x8xf32>
    %215 = arith.maximumf %213, %214 : vector<8x8x8xf32>
    %c0_98 = arith.constant 0 : index
    %c6_99 = arith.constant 6 : index
    %c0_100 = arith.constant 0 : index
    %c0_101 = arith.constant 0 : index
    %c0_102 = arith.constant 0 : index
    %216 = vector.load %arg5[%c0_98, %c6_99, %c0_100, %c0_101, %c0_102] : memref<1x8x8x8x8xf32, #tpu.memory_space<vmem>>, vector<1x1x8x8x8xf32>
    %217 = vector.shape_cast %216 : vector<1x1x8x8x8xf32> to vector<8x8x8xf32>
    %218 = vector.shape_cast %215 : vector<8x8x8xf32> to vector<1x1x8x8x8xf32>
    tpu.vector_store %arg5[%c0_98, %c6_99, %c0_100, %c0_101, %c0_102], %218 {strides = array<i32>} : memref<1x8x8x8x8xf32, #tpu.memory_space<vmem>>, vector<1x1x8x8x8xf32>,
    %219 = vector.extract_strided_slice %22 {offsets = [0, 0, 0, 0], sizes = [1, 8, 8, 8], strides = [1, 1, 1, 1]} : vector<4x8x8x8xf32> to vector<1x8x8x8xf32>
    %220 = vector.shape_cast %219 : vector<1x8x8x8xf32> to vector<8x8x8xf32>
    %c7 = arith.constant 7 : index
    %c0_103 = arith.constant 0 : index
    %221 = memref.load %arg4[%c7, %c0_103] : memref<8x4xf32, #tpu.memory_space<smem>>
    %222 = vector.broadcast %221 : f32 to vector<8x8x8xf32>
    %223 = arith.mulf %220, %222 : vector<8x8x8xf32>
    %224 = vector.extract_strided_slice %22 {offsets = [1, 0, 0, 0], sizes = [1, 8, 8, 8], strides = [1, 1, 1, 1]} : vector<4x8x8x8xf32> to vector<1x8x8x8xf32>
    %225 = vector.shape_cast %224 : vector<1x8x8x8xf32> to vector<8x8x8xf32>
    %c7_104 = arith.constant 7 : index
    %c1_105 = arith.constant 1 : index
    %226 = memref.load %arg4[%c7_104, %c1_105] : memref<8x4xf32, #tpu.memory_space<smem>>
    %227 = vector.broadcast %226 : f32 to vector<8x8x8xf32>
    %228 = arith.mulf %225, %227 : vector<8x8x8xf32>
    %229 = arith.addf %223, %228 : vector<8x8x8xf32>
    %230 = vector.extract_strided_slice %22 {offsets = [2, 0, 0, 0], sizes = [1, 8, 8, 8], strides = [1, 1, 1, 1]} : vector<4x8x8x8xf32> to vector<1x8x8x8xf32>
    %231 = vector.shape_cast %230 : vector<1x8x8x8xf32> to vector<8x8x8xf32>
    %c7_106 = arith.constant 7 : index
    %c2_107 = arith.constant 2 : index
    %232 = memref.load %arg4[%c7_106, %c2_107] : memref<8x4xf32, #tpu.memory_space<smem>>
    %233 = vector.broadcast %232 : f32 to vector<8x8x8xf32>
    %234 = arith.mulf %231, %233 : vector<8x8x8xf32>
    %235 = arith.addf %229, %234 : vector<8x8x8xf32>
    %236 = vector.extract_strided_slice %22 {offsets = [3, 0, 0, 0], sizes = [1, 8, 8, 8], strides = [1, 1, 1, 1]} : vector<4x8x8x8xf32> to vector<1x8x8x8xf32>
    %237 = vector.shape_cast %236 : vector<1x8x8x8xf32> to vector<8x8x8xf32>
    %c7_108 = arith.constant 7 : index
    %c3_109 = arith.constant 3 : index
    %238 = memref.load %arg4[%c7_108, %c3_109] : memref<8x4xf32, #tpu.memory_space<smem>>
    %239 = vector.broadcast %238 : f32 to vector<8x8x8xf32>
    %240 = arith.mulf %237, %239 : vector<8x8x8xf32>
    %241 = arith.addf %235, %240 : vector<8x8x8xf32>
    %cst_110 = arith.constant 0.000000e+00 : f32
    %242 = vector.broadcast %cst_110 : f32 to vector<8x8x8xf32>
    %243 = arith.maximumf %241, %242 : vector<8x8x8xf32>
    %c0_111 = arith.constant 0 : index
    %c7_112 = arith.constant 7 : index
    %c0_113 = arith.constant 0 : index
    %c0_114 = arith.constant 0 : index
    %c0_115 = arith.constant 0 : index
    %244 = vector.load %arg5[%c0_111, %c7_112, %c0_113, %c0_114, %c0_115] : memref<1x8x8x8x8xf32, #tpu.memory_space<vmem>>, vector<1x1x8x8x8xf32>
    %245 = vector.shape_cast %244 : vector<1x1x8x8x8xf32> to vector<8x8x8xf32>
    %246 = vector.shape_cast %243 : vector<8x8x8xf32> to vector<1x1x8x8x8xf32>
    tpu.vector_store %arg5[%c0_111, %c7_112, %c0_113, %c0_114, %c0_115], %246 {strides = array<i32>} : memref<1x8x8x8x8xf32, #tpu.memory_space<vmem>>, vector<1x1x8x8x8xf32>,
    return
  }
  func.func @transform_0(%arg0: i32, %arg1: i32) -> (i32, i32, i32, i32, i32) {
    %c0_i32 = arith.constant 0 : i32
    %c0_i32_0 = arith.constant 0 : i32
    %c0_i32_1 = arith.constant 0 : i32
    %c0_i32_2 = arith.constant 0 : i32
    return %arg0, %c0_i32, %arg1, %c0_i32_0, %c0_i32_1 : i32, i32, i32, i32, i32
  }
  func.func @transform_1(%arg0: i32, %arg1: i32) -> (i32, i32, i32) {
    %c0_i32 = arith.constant 0 : i32
    %c0_i32_0 = arith.constant 0 : i32
    %c0_i32_1 = arith.constant 0 : i32
    %c0_i32_2 = arith.constant 0 : i32
    return %c0_i32, %c0_i32_0, %c0_i32_1 : i32, i32, i32
  }
  func.func @transform_2(%arg0: i32, %arg1: i32) -> (i32, i32) {
    %c0_i32 = arith.constant 0 : i32
    %c0_i32_0 = arith.constant 0 : i32
    %c0_i32_1 = arith.constant 0 : i32
    return %c0_i32, %c0_i32_0 : i32, i32
  }
  func.func @transform_3(%arg0: i32, %arg1: i32) -> (i32, i32, i32, i32, i32) {
    %c0_i32 = arith.constant 0 : i32
    %c0_i32_0 = arith.constant 0 : i32
    %c0_i32_1 = arith.constant 0 : i32
    %c0_i32_2 = arith.constant 0 : i32
    return %arg0, %c0_i32, %arg1, %c0_i32_0, %c0_i32_1 : i32, i32, i32, i32, i32
  }
}

</mosaic_0001>

<llo_original>
// kernel: tpu_custom_call.1
$region0: #{tpu_custom_call.1}
  #allocation0 [shape = 'u32[]', space=smem, size = 0x4, offset = 0x4, fixed_abs, tag = 'smem constant byte address 0x4 - core index']
  #allocation1 [shape = 'u32[144,128]{1,0:T(1,128)}', space=vmem, size = 0x12000, scoped, tag = 'internal scratch']
  %s0 = inlined_call_operand.hbm [shape: f32[2,4,16,16,16], index: 0, kind: input, shape index: {}]
  %s1 = inlined_call_operand.vmem [shape: f32[2,16,8], index: 1, kind: input, shape index: {}]
  %s2 = inlined_call_operand.vmem [shape: f32[8,4], index: 2, kind: input, shape index: {}]
  %s3 = inlined_call_operand.hbm [shape: f32[2,8,8,8,8], index: 3, kind: output, shape index: {}]
  %s4 = sld [smem:[#allocation0]]
  $region53: #{tpu_custom_call.1} parent=0
    _
  %s6 = ssub.s32 1, %s4
  %s7 = scalar_select 0, %s6, %s4
  $region1: #{tpu_custom_call.1} parent=0
    #allocation2 [shape = 'u8[1048576]{0}', space=vmem, size = 0x100000, scoped, tag = 'input window, operand 0']
    #allocation3 [shape = 's32[2]{0}', space=sflag, size = 0x8, scoped, tag = 'scoped memory for tpu_custom_call.1']
    #allocation4 [shape = 's32[2]{0}', space=sflag, size = 0x8, scoped, tag = 'scoped memory for tpu_custom_call.1']
    #allocation5 [shape = 's32[2]{0}', space=sflag, size = 0x8, scoped, tag = 'scoped memory for tpu_custom_call.1']
    #allocation6 [shape = 'u8[4096]{0}', space=smem, size = 0x1000, scoped, tag = 'input window, operand 2, single buffered']
    #allocation7 [shape = 'u8[524288]{0}', space=vmem, size = 0x80000, scoped, tag = 'output window, operand 0']
    %8 = vsyncpa [#allocation3], 0
    %s9 = scalar_lea.sflag [#allocation3], 1
    %10 = vsyncpa %s9, 0
    %11 = vsyncpa [#allocation5], 0
    %12 = vsyncpa [#allocation4], 0
    %s13 = scalar_lea.sflag [#allocation4], 1
    %14 = vsyncpa %s13, 0
    loop: start=0, step=1, limit=4
    $region2: #{tpu_custom_call.1} parent=1 // loop_pre_header
      _
    $region3: #{tpu_custom_call.1} parent=1 // loop_header
      %s16 = sphi 0, %s20
      %p17 = scmp.ge.s32.totalorder %s16, 4
      %s23 = sphi 0, %s35
      %s24 = sphi 0, %s31
      %s25 = sphi 0, %s23
      %s26 = sphi 0, %s24
      %s27 = sphi 0, %s25
      %s28 = sphi 0, %s26
      %s40 = sphi 0, %s42
      %s43 = sphi 0, %s40
      %s44 = sphi 0, %s43
      %s60 = sphi 0, %s44
      %s64 = sphi 0, %s64
      %s66 = sphi 0, %s64
      %s67 = sphi 0, %s66
      %s81 = sphi 0, %s67
      %s85 = sphi 0, %s85
      %s87 = sphi 0, %s85
      %s88 = sphi 0, %s87
      %s102 = sphi 0, %s88
      %s110 = sphi 0, %s112
      %s113 = sphi 0, %s110
      %s114 = sphi 0, %s113
      %s130 = sphi 0, %s114
    $region4: #{tpu_custom_call.1} parent=1 // loop_header_branch
      %19 = sbr.rel (%p17) target = $region8
    $region5: #{tpu_custom_call.1} parent=1 // loop_body
      %s21 = ssub.s32 %s16, 1
      %s22 = ssub.s32 %s16, 2
      %s29 = sadd.s32 1, %s24
      %p30 = scmp.ge.s32.totalorder %s29, 1
      %s31 = scalar_select %p30, 0, %s29
      %s32 = sadd.s32 1, %s23
      %s33 = scalar_select %p30, %s32, %s23
      %p34 = scmp.ge.s32.totalorder %s33, 2
      %s35 = scalar_select %p34, 0, %s33
      %s36 = ssub.s32 %s23, %s35
      %s37 = ssub.s32 %s24, %s31
      %s38 = sor.u32 %s36, %s37
      %p39 = scmp.eq.s32.totalorder %s38, 0
      %s41 = sadd.s32 %s40, 1
      %s42 = scalar_select %p39, %s40, %s41
      %p45 = pneg %p39
      %p46 = scmp.eq.s32.totalorder %s16, 1
      %p47 = por %p45, %p46
      %p48 = scmp.ne.s32.totalorder %s40, %s43
      %p49 = scmp.eq.s32.totalorder %s16, 0
      %p50 = por %p48, %p49
      %p51 = scmp.ne.s32.totalorder %s40, %s43
      %p52 = scmp.eq.s32.totalorder %s21, 1
      %p53 = por %p51, %p52
      %p54 = scmp.ne.s32.totalorder %s43, %s44
      %p55 = scmp.eq.s32.totalorder %s21, 0
      %p56 = por %p54, %p55
      %p57 = scmp.ne.s32.totalorder %s43, %s44
      %p58 = scmp.eq.s32.totalorder %s22, 1
      %p59 = por %p57, %p58
      %p61 = scmp.ne.s32.totalorder %s44, %s60
      %p62 = scmp.eq.s32.totalorder %s22, 0
      %p63 = por %p61, %p62
      %s65 = sadd.s32 %s64, 1
      %p68 = scmp.eq.s32.totalorder %s16, 1
      %p69 = scmp.ne.s32.totalorder %s64, %s66
      %p70 = scmp.eq.s32.totalorder %s16, 0
      %p71 = por %p69, %p70
      %p72 = scmp.ne.s32.totalorder %s64, %s66
      %p73 = scmp.eq.s32.totalorder %s21, 1
      %p74 = por %p72, %p73
      %p75 = scmp.ne.s32.totalorder %s66, %s67
      %p76 = scmp.eq.s32.totalorder %s21, 0
      %p77 = por %p75, %p76
      %p78 = scmp.ne.s32.totalorder %s66, %s67
      %p79 = scmp.eq.s32.totalorder %s22, 1
      %p80 = por %p78, %p79
      %p82 = scmp.ne.s32.totalorder %s67, %s81
      %p83 = scmp.eq.s32.totalorder %s22, 0
      %p84 = por %p82, %p83
      %s86 = sadd.s32 %s85, 1
      %p89 = scmp.eq.s32.totalorder %s16, 1
      %p90 = scmp.ne.s32.totalorder %s85, %s87
      %p91 = scmp.eq.s32.totalorder %s16, 0
      %p92 = por %p90, %p91
      %p93 = scmp.ne.s32.totalorder %s85, %s87
      %p94 = scmp.eq.s32.totalorder %s21, 1
      %p95 = por %p93, %p94
      %p96 = scmp.ne.s32.totalorder %s87, %s88
      %p97 = scmp.eq.s32.totalorder %s21, 0
      %p98 = por %p96, %p97
      %p99 = scmp.ne.s32.totalorder %s87, %s88
      %p100 = scmp.eq.s32.totalorder %s22, 1
      %p101 = por %p99, %p100
      %p103 = scmp.ne.s32.totalorder %s88, %s102
      %p104 = scmp.eq.s32.totalorder %s22, 0
      %p105 = por %p103, %p104
      %s106 = ssub.s32 %s23, %s35
      %s107 = ssub.s32 %s24, %s31
      %s108 = sor.u32 %s106, %s107
      %p109 = scmp.eq.s32.totalorder %s108, 0
      %s111 = sadd.s32 %s110, 1
      %s112 = scalar_select %p109, %s110, %s111
      %p115 = pneg %p109
      %p116 = scmp.eq.s32.totalorder %s16, 1
      %p117 = por %p115, %p116
      %p118 = scmp.ne.s32.totalorder %s110, %s113
      %p119 = scmp.eq.s32.totalorder %s16, 0
      %p120 = por %p118, %p119
      %p121 = scmp.ne.s32.totalorder %s110, %s113
      %p122 = scmp.eq.s32.totalorder %s21, 1
      %p123 = por %p121, %p122
      %p124 = scmp.ne.s32.totalorder %s113, %s114
      %p125 = scmp.eq.s32.totalorder %s21, 0
      %p126 = por %p124, %p125
      %p127 = scmp.ne.s32.totalorder %s113, %s114
      %p128 = scmp.eq.s32.totalorder %s22, 1
      %p129 = por %p127, %p128
      %p131 = scmp.ne.s32.totalorder %s114, %s130
      %p132 = scmp.eq.s32.totalorder %s22, 0
      %p133 = por %p131, %p132
      %p134 = scmp.le.s32.totalorder 1, %s16
      %p135 = scmp.lt.s32.totalorder %s16, 3
      %p136 = pnand %p134, %p135
      %p137 = pneg %p136
      // Predicated region
      $region9: #{tpu_custom_call.1} parent=5 // pred_check
        _
      $region10: #{tpu_custom_call.1} parent=5 // pred_check_branch
        %139 = sbr.rel (%p136) target = $region12
      $region11: #{tpu_custom_call.1} parent=5 // pred_region
        %s140 = ssub.s32 %s16, 1
        // Predicated region
        $region13: #{tpu_custom_call.1} parent=11 // pred_check
          %p141 = pneg %p77
        $region14: #{tpu_custom_call.1} parent=11 // pred_check_branch
          %143 = sbr.rel (%p141) target = $region16
        $region15: #{tpu_custom_call.1} parent=11 // pred_region
          _
        $region16: #{tpu_custom_call.1} parent=11 // pred_fallthru
          _
        // Predicated region
        $region17: #{tpu_custom_call.1} parent=11 // pred_check
          %p144 = pneg %p98
        $region18: #{tpu_custom_call.1} parent=11 // pred_check_branch
          %146 = sbr.rel (%p144) target = $region20
        $region19: #{tpu_custom_call.1} parent=11 // pred_region
          %s148 = ssub.s32 128, 128
          %149 = vsyncadd [#allocation5], %s148
          %s151 = sshll.u32 %s2, 4
          %s152 = int_to_ptr.vmem [resolvable:$true] %s151
          %154 = dma.vmem_to_smem %s152, 128, [#allocation6], [#allocation5]
        $region20: #{tpu_custom_call.1} parent=11 // pred_fallthru
          _
      $region12: #{tpu_custom_call.1} parent=5 // pred_fallthru
        _
      %p155 = scmp.lt.s32.totalorder %s16, 2
      // Predicated region
      $region21: #{tpu_custom_call.1} parent=5 // pred_check
        %p156 = pneg %p155
      $region22: #{tpu_custom_call.1} parent=5 // pred_check_branch
        %158 = sbr.rel (%p156) target = $region24
      $region23: #{tpu_custom_call.1} parent=5 // pred_region
        // Predicated region
        $region25: #{tpu_custom_call.1} parent=23 // pred_check
          %p159 = pneg %p50
        $region26: #{tpu_custom_call.1} parent=23 // pred_check_branch
          %161 = sbr.rel (%p159) target = $region28
        $region27: #{tpu_custom_call.1} parent=23 // pred_region
          %s162 = sand.u32 %s40, 1
          %s163 = scalar_lea.sflag [#allocation3], %s162
          %s164 = sand.u32 %s40, 1
          %s165 = smul.addr %s164, 1024
          %s166 = scalar_lea.vmem [#allocation2], %s165
          %s167 = smul.u32 16, %s24
          %s169 = ssub.s32 16384, 16384
          %170 = vsyncadd %s163, %s169
          %s171 = smul.addr %s167, 2
          %s172 = smul.addr %s23, 128
          %s173 = sadd.s32 %s171, %s172
          %s174 = smul.addr %s173, 128
          %s175 = scalar_lea.hbm %s0, %s174
          %s176 = sshll.u32 %s166, 4
          %s177 = int_to_ptr.vmem [resolvable:$true] %s176
          %182 = dma.hbm_to_vmem [thread:$0]  %s175, 16384, %s177, %s163, 128, 128, 8
        $region28: #{tpu_custom_call.1} parent=23 // pred_fallthru
          _
      $region24: #{tpu_custom_call.1} parent=5 // pred_fallthru
        _
      %p183 = scmp.le.s32.totalorder 1, %s16
      %p184 = scmp.lt.s32.totalorder %s16, 3
      %p185 = pnand %p183, %p184
      %p186 = pneg %p185
      // Predicated region
      $region29: #{tpu_custom_call.1} parent=5 // pred_check
        _
      $region30: #{tpu_custom_call.1} parent=5 // pred_check_branch
        %188 = sbr.rel (%p185) target = $region32
      $region31: #{tpu_custom_call.1} parent=5 // pred_region
        %s189 = ssub.s32 %s16, 1
        %s190 = sand.u32 %s43, 1
        %s191 = scalar_lea.sflag [#allocation3], %s190
        %s192 = sand.u32 %s43, 1
        %s193 = smul.addr %s192, 1024
        %s194 = scalar_lea.vmem [#allocation2], %s193
        // Predicated region
        $region33: #{tpu_custom_call.1} parent=31 // pred_check
          %p195 = pneg %p56
        $region34: #{tpu_custom_call.1} parent=31 // pred_check_branch
          %197 = sbr.rel (%p195) target = $region36
        $region35: #{tpu_custom_call.1} parent=31 // pred_region
          %198 = dma.done %s191, 16384
        $region36: #{tpu_custom_call.1} parent=31 // pred_fallthru
          _
        // Predicated region
        $region37: #{tpu_custom_call.1} parent=31 // pred_check
          %p199 = pneg %p98
        $region38: #{tpu_custom_call.1} parent=31 // pred_check_branch
          %201 = sbr.rel (%p199) target = $region40
        $region39: #{tpu_custom_call.1} parent=31 // pred_region
          %202 = dma.done [#allocation5], 128
        $region40: #{tpu_custom_call.1} parent=31 // pred_fallthru
          _
        %203 = sfence
        %s204 = sand.u32 %s43, 1
        %s205 = scalar_lea.sflag [#allocation3], %s204
        %s206 = sand.u32 %s43, 1
        %s207 = smul.addr %s206, 1024
        %s208 = scalar_lea.vmem [#allocation2], %s207
        %p209 = pneg %p56
        %p210 = pneg %p53
        %p211 = pneg %p77
        %p212 = pneg %p74
        %p213 = pneg %p98
        %p214 = pneg %p95
        %p215 = pneg %p126
        %p216 = pneg %p123
        %s217 = sand.u32 %s113, 1
        %s218 = scalar_lea.sflag [#allocation4], %s217
        %s219 = sand.u32 %s113, 1
        %s220 = smul.addr %s219, 512
        %s221 = scalar_lea.vmem [#allocation7], %s220
        %s222 = smul.u32 16, %s26
        %s223 = smul.u32 8, %s26
        %v224 = vld [vmem:[%s194] sm:$0xff]
        %v225 = vld [vmem:[%s194 + $0x8] sm:$0xff]
        %v226 = vld [vmem:[%s194 + $0x10] sm:$0xff]
        %v227 = vld [vmem:[%s194 + $0x18] sm:$0xff]
        %v228 = vld [vmem:[%s194 + $0x20] sm:$0xff]
        %v229 = vld [vmem:[%s194 + $0x28] sm:$0xff]
        %v230 = vld [vmem:[%s194 + $0x30] sm:$0xff]
        %v231 = vld [vmem:[%s194 + $0x38] sm:$0xff]
        %v232 = vld [vmem:[%s194 + $0x40] sm:$0xff]
        %v233 = vld [vmem:[%s194 + $0x48] sm:$0xff]
        %v234 = vld [vmem:[%s194 + $0x50] sm:$0xff]
        %v235 = vld [vmem:[%s194 + $0x58] sm:$0xff]
        %v236 = vld [vmem:[%s194 + $0x60] sm:$0xff]
        %v237 = vld [vmem:[%s194 + $0x68] sm:$0xff]
        %v238 = vld [vmem:[%s194 + $0x70] sm:$0xff]
        %v239 = vld [vmem:[%s194 + $0x78] sm:$0xff]
        %v240 = vld [vmem:[%s194 + $0x80] sm:$0xff]
        %v241 = vld [vmem:[%s194 + $0x88] sm:$0xff]
        %v242 = vld [vmem:[%s194 + $0x90] sm:$0xff]
        %v243 = vld [vmem:[%s194 + $0x98] sm:$0xff]
        %v244 = vld [vmem:[%s194 + $0xa0] sm:$0xff]
        %v245 = vld [vmem:[%s194 + $0xa8] sm:$0xff]
        %v246 = vld [vmem:[%s194 + $0xb0] sm:$0xff]
        %v247 = vld [vmem:[%s194 + $0xb8] sm:$0xff]
        %v248 = vld [vmem:[%s194 + $0xc0] sm:$0xff]
        %v249 = vld [vmem:[%s194 + $0xc8] sm:$0xff]
        %v250 = vld [vmem:[%s194 + $0xd0] sm:$0xff]
        %v251 = vld [vmem:[%s194 + $0xd8] sm:$0xff]
        %v252 = vld [vmem:[%s194 + $0xe0] sm:$0xff]
        %v253 = vld [vmem:[%s194 + $0xe8] sm:$0xff]
        %v254 = vld [vmem:[%s194 + $0xf0] sm:$0xff]
        %v255 = vld [vmem:[%s194 + $0xf8] sm:$0xff]
        %v256 = vld [vmem:[%s194 + $0x100] sm:$0xff]
        %v257 = vld [vmem:[%s194 + $0x108] sm:$0xff]
        %v258 = vld [vmem:[%s194 + $0x110] sm:$0xff]
        %v259 = vld [vmem:[%s194 + $0x118] sm:$0xff]
        %v260 = vld [vmem:[%s194 + $0x120] sm:$0xff]
        %v261 = vld [vmem:[%s194 + $0x128] sm:$0xff]
        %v262 = vld [vmem:[%s194 + $0x130] sm:$0xff]
        %v263 = vld [vmem:[%s194 + $0x138] sm:$0xff]
        %v264 = vld [vmem:[%s194 + $0x140] sm:$0xff]
        %v265 = vld [vmem:[%s194 + $0x148] sm:$0xff]
        %v266 = vld [vmem:[%s194 + $0x150] sm:$0xff]
        %v267 = vld [vmem:[%s194 + $0x158] sm:$0xff]
        %v268 = vld [vmem:[%s194 + $0x160] sm:$0xff]
        %v269 = vld [vmem:[%s194 + $0x168] sm:$0xff]
        %v270 = vld [vmem:[%s194 + $0x170] sm:$0xff]
        %v271 = vld [vmem:[%s194 + $0x178] sm:$0xff]
        %v272 = vld [vmem:[%s194 + $0x180] sm:$0xff]
        %v273 = vld [vmem:[%s194 + $0x188] sm:$0xff]
        %v274 = vld [vmem:[%s194 + $0x190] sm:$0xff]
        %v275 = vld [vmem:[%s194 + $0x198] sm:$0xff]
        %v276 = vld [vmem:[%s194 + $0x1a0] sm:$0xff]
        %v277 = vld [vmem:[%s194 + $0x1a8] sm:$0xff]
        %v278 = vld [vmem:[%s194 + $0x1b0] sm:$0xff]
        %v279 = vld [vmem:[%s194 + $0x1b8] sm:$0xff]
        %v280 = vld [vmem:[%s194 + $0x1c0] sm:$0xff]
        %v281 = vld [vmem:[%s194 + $0x1c8] sm:$0xff]
        %v282 = vld [vmem:[%s194 + $0x1d0] sm:$0xff]
        %v283 = vld [vmem:[%s194 + $0x1d8] sm:$0xff]
        %v284 = vld [vmem:[%s194 + $0x1e0] sm:$0xff]
        %v285 = vld [vmem:[%s194 + $0x1e8] sm:$0xff]
        %v286 = vld [vmem:[%s194 + $0x1f0] sm:$0xff]
        %v287 = vld [vmem:[%s194 + $0x1f8] sm:$0xff]
        %v288 = vld [vmem:[%s194 + $0x200] sm:$0xff]
        %v289 = vld [vmem:[%s194 + $0x208] sm:$0xff]
        %v290 = vld [vmem:[%s194 + $0x210] sm:$0xff]
        %v291 = vld [vmem:[%s194 + $0x218] sm:$0xff]
        %v292 = vld [vmem:[%s194 + $0x220] sm:$0xff]
        %v293 = vld [vmem:[%s194 + $0x228] sm:$0xff]
        %v294 = vld [vmem:[%s194 + $0x230] sm:$0xff]
        %v295 = vld [vmem:[%s194 + $0x238] sm:$0xff]
        %v296 = vld [vmem:[%s194 + $0x240] sm:$0xff]
        %v297 = vld [vmem:[%s194 + $0x248] sm:$0xff]
        %v298 = vld [vmem:[%s194 + $0x250] sm:$0xff]
        %v299 = vld [vmem:[%s194 + $0x258] sm:$0xff]
        %v300 = vld [vmem:[%s194 + $0x260] sm:$0xff]
        %v301 = vld [vmem:[%s194 + $0x268] sm:$0xff]
        %v302 = vld [vmem:[%s194 + $0x270] sm:$0xff]
        %v303 = vld [vmem:[%s194 + $0x278] sm:$0xff]
        %v304 = vld [vmem:[%s194 + $0x280] sm:$0xff]
        %v305 = vld [vmem:[%s194 + $0x288] sm:$0xff]
        %v306 = vld [vmem:[%s194 + $0x290] sm:$0xff]
        %v307 = vld [vmem:[%s194 + $0x298] sm:$0xff]
        %v308 = vld [vmem:[%s194 + $0x2a0] sm:$0xff]
        %v309 = vld [vmem:[%s194 + $0x2a8] sm:$0xff]
        %v310 = vld [vmem:[%s194 + $0x2b0] sm:$0xff]
        %v311 = vld [vmem:[%s194 + $0x2b8] sm:$0xff]
        %v312 = vld [vmem:[%s194 + $0x2c0] sm:$0xff]
        %v313 = vld [vmem:[%s194 + $0x2c8] sm:$0xff]
        %v314 = vld [vmem:[%s194 + $0x2d0] sm:$0xff]
        %v315 = vld [vmem:[%s194 + $0x2d8] sm:$0xff]
        %v316 = vld [vmem:[%s194 + $0x2e0] sm:$0xff]
        %v317 = vld [vmem:[%s194 + $0x2e8] sm:$0xff]
        %v318 = vld [vmem:[%s194 + $0x2f0] sm:$0xff]
        %v319 = vld [vmem:[%s194 + $0x2f8] sm:$0xff]
        %v320 = vld [vmem:[%s194 + $0x300] sm:$0xff]
        %v321 = vld [vmem:[%s194 + $0x308] sm:$0xff]
        %v322 = vld [vmem:[%s194 + $0x310] sm:$0xff]
        %v323 = vld [vmem:[%s194 + $0x318] sm:$0xff]
        %v324 = vld [vmem:[%s194 + $0x320] sm:$0xff]
        %v325 = vld [vmem:[%s194 + $0x328] sm:$0xff]
        %v326 = vld [vmem:[%s194 + $0x330] sm:$0xff]
        %v327 = vld [vmem:[%s194 + $0x338] sm:$0xff]
        %v328 = vld [vmem:[%s194 + $0x340] sm:$0xff]
        %v329 = vld [vmem:[%s194 + $0x348] sm:$0xff]
        %v330 = vld [vmem:[%s194 + $0x350] sm:$0xff]
        %v331 = vld [vmem:[%s194 + $0x358] sm:$0xff]
        %v332 = vld [vmem:[%s194 + $0x360] sm:$0xff]
        %v333 = vld [vmem:[%s194 + $0x368] sm:$0xff]
        %v334 = vld [vmem:[%s194 + $0x370] sm:$0xff]
        %v335 = vld [vmem:[%s194 + $0x378] sm:$0xff]
        %v336 = vld [vmem:[%s194 + $0x380] sm:$0xff]
        %v337 = vld [vmem:[%s194 + $0x388] sm:$0xff]
        %v338 = vld [vmem:[%s194 + $0x390] sm:$0xff]
        %v339 = vld [vmem:[%s194 + $0x398] sm:$0xff]
        %v340 = vld [vmem:[%s194 + $0x3a0] sm:$0xff]
        %v341 = vld [vmem:[%s194 + $0x3a8] sm:$0xff]
        %v342 = vld [vmem:[%s194 + $0x3b0] sm:$0xff]
        %v343 = vld [vmem:[%s194 + $0x3b8] sm:$0xff]
        %v344 = vld [vmem:[%s194 + $0x3c0] sm:$0xff]
        %v345 = vld [vmem:[%s194 + $0x3c8] sm:$0xff]
        %v346 = vld [vmem:[%s194 + $0x3d0] sm:$0xff]
        %v347 = vld [vmem:[%s194 + $0x3d8] sm:$0xff]
        %v348 = vld [vmem:[%s194 + $0x3e0] sm:$0xff]
        %v349 = vld [vmem:[%s194 + $0x3e8] sm:$0xff]
        %v350 = vld [vmem:[%s194 + $0x3f0] sm:$0xff]
        %v351 = vld [vmem:[%s194 + $0x3f8] sm:$0xff]
        %v352 = vmax.f32 %v224, %v226
        %v353 = vmax.f32 %v225, %v227
        %v354 = vmax.f32 %v228, %v230
        %v355 = vmax.f32 %v229, %v231
        %v356 = vmax.f32 %v232, %v234
        %v357 = vmax.f32 %v233, %v235
        %v358 = vmax.f32 %v236, %v238
        %v359 = vmax.f32 %v237, %v239
        %v360 = vmax.f32 %v240, %v242
        %v361 = vmax.f32 %v241, %v243
        %v362 = vmax.f32 %v244, %v246
        %v363 = vmax.f32 %v245, %v247
        %v364 = vmax.f32 %v248, %v250
        %v365 = vmax.f32 %v249, %v251
        %v366 = vmax.f32 %v252, %v254
        %v367 = vmax.f32 %v253, %v255
        %v368 = vmax.f32 %v256, %v258
        %v369 = vmax.f32 %v257, %v259
        %v370 = vmax.f32 %v260, %v262
        %v371 = vmax.f32 %v261, %v263
        %v372 = vmax.f32 %v264, %v266
        %v373 = vmax.f32 %v265, %v267
        %v374 = vmax.f32 %v268, %v270
        %v375 = vmax.f32 %v269, %v271
        %v376 = vmax.f32 %v272, %v274
        %v377 = vmax.f32 %v273, %v275
        %v378 = vmax.f32 %v276, %v278
        %v379 = vmax.f32 %v277, %v279
        %v380 = vmax.f32 %v280, %v282
        %v381 = vmax.f32 %v281, %v283
        %v382 = vmax.f32 %v284, %v286
        %v383 = vmax.f32 %v285, %v287
        %v384 = vmax.f32 %v288, %v290
        %v385 = vmax.f32 %v289, %v291
        %v386 = vmax.f32 %v292, %v294
        %v387 = vmax.f32 %v293, %v295
        %v388 = vmax.f32 %v296, %v298
        %v389 = vmax.f32 %v297, %v299
        %v390 = vmax.f32 %v300, %v302
        %v391 = vmax.f32 %v301, %v303
        %v392 = vmax.f32 %v304, %v306
        %v393 = vmax.f32 %v305, %v307
        %v394 = vmax.f32 %v308, %v310
        %v395 = vmax.f32 %v309, %v311
        %v396 = vmax.f32 %v312, %v314
        %v397 = vmax.f32 %v313, %v315
        %v398 = vmax.f32 %v316, %v318
        %v399 = vmax.f32 %v317, %v319
        %v400 = vmax.f32 %v320, %v322
        %v401 = vmax.f32 %v321, %v323
        %v402 = vmax.f32 %v324, %v326
        %v403 = vmax.f32 %v325, %v327
        %v404 = vmax.f32 %v328, %v330
        %v405 = vmax.f32 %v329, %v331
        %v406 = vmax.f32 %v332, %v334
        %v407 = vmax.f32 %v333, %v335
        %v408 = vmax.f32 %v336, %v338
        %v409 = vmax.f32 %v337, %v339
        %v410 = vmax.f32 %v340, %v342
        %v411 = vmax.f32 %v341, %v343
        %v412 = vmax.f32 %v344, %v346
        %v413 = vmax.f32 %v345, %v347
        %v414 = vmax.f32 %v348, %v350
        %v415 = vmax.f32 %v349, %v351
        %v480 = vcombine.high %v352, %v352
        %v482 = vunpack.c.l.s4 1983009808
        %v483 = vunpack.c.0.s8 %v482
        %v484 = vlaneseq
        %v485 = vshrl.u32 %v484, 7
        %v486 = vsub.s32 %v483, %v485
        %v487 = vrot.slane %v352, %v486
        %v489 = vunpack.c.l.s4 1983009808
        %v490 = vunpack.c.0.s8 %v489
        %v491 = vlaneseq
        %v492 = vshrl.u32 %v491, 7
        %v493 = vsub.s32 %v490, %v492
        %v494 = vrot.slane %v480, %v493
        %v495 = vcombine.high %v487, %v487
        %v496 = vcombine.high %v494, %v494
        %v497 = vcombine.high %v353, %v353
        %v499 = vunpack.c.l.s4 1983009808
        %v500 = vunpack.c.0.s8 %v499
        %v501 = vlaneseq
        %v502 = vshrl.u32 %v501, 7
        %v503 = vsub.s32 %v500, %v502
        %v504 = vrot.slane %v353, %v503
        %v506 = vunpack.c.l.s4 1983009808
        %v507 = vunpack.c.0.s8 %v506
        %v508 = vlaneseq
        %v509 = vshrl.u32 %v508, 7
        %v510 = vsub.s32 %v507, %v509
        %v511 = vrot.slane %v497, %v510
        %v512 = vcombine.high %v504, %v504
        %v513 = vcombine.high %v511, %v511
        %v514 = vcombine.high %v354, %v354
        %v516 = vunpack.c.l.s4 1983009808
        %v517 = vunpack.c.0.s8 %v516
        %v518 = vlaneseq
        %v519 = vshrl.u32 %v518, 7
        %v520 = vsub.s32 %v517, %v519
        %v521 = vrot.slane %v354, %v520
        %v523 = vunpack.c.l.s4 1983009808
        %v524 = vunpack.c.0.s8 %v523
        %v525 = vlaneseq
        %v526 = vshrl.u32 %v525, 7
        %v527 = vsub.s32 %v524, %v526
        %v528 = vrot.slane %v514, %v527
        %v529 = vcombine.high %v521, %v521
        %v530 = vcombine.high %v528, %v528
        %v531 = vcombine.high %v355, %v355
        %v533 = vunpack.c.l.s4 1983009808
        %v534 = vunpack.c.0.s8 %v533
        %v535 = vlaneseq
        %v536 = vshrl.u32 %v535, 7
        %v537 = vsub.s32 %v534, %v536
        %v538 = vrot.slane %v355, %v537
        %v540 = vunpack.c.l.s4 1983009808
        %v541 = vunpack.c.0.s8 %v540
        %v542 = vlaneseq
        %v543 = vshrl.u32 %v542, 7
        %v544 = vsub.s32 %v541, %v543
        %v545 = vrot.slane %v531, %v544
        %v546 = vcombine.high %v538, %v538
        %v547 = vcombine.high %v545, %v545
        %v548 = vcombine.high %v356, %v356
        %v550 = vunpack.c.l.s4 1983009808
        %v551 = vunpack.c.0.s8 %v550
        %v552 = vlaneseq
        %v553 = vshrl.u32 %v552, 7
        %v554 = vsub.s32 %v551, %v553
        %v555 = vrot.slane %v356, %v554
        %v557 = vunpack.c.l.s4 1983009808
        %v558 = vunpack.c.0.s8 %v557
        %v559 = vlaneseq
        %v560 = vshrl.u32 %v559, 7
        %v561 = vsub.s32 %v558, %v560
        %v562 = vrot.slane %v548, %v561
        %v563 = vcombine.high %v555, %v555
        %v564 = vcombine.high %v562, %v562
        %v565 = vcombine.high %v357, %v357
        %v567 = vunpack.c.l.s4 1983009808
        %v568 = vunpack.c.0.s8 %v567
        %v569 = vlaneseq
        %v570 = vshrl.u32 %v569, 7
        %v571 = vsub.s32 %v568, %v570
        %v572 = vrot.slane %v357, %v571
        %v574 = vunpack.c.l.s4 1983009808
        %v575 = vunpack.c.0.s8 %v574
        %v576 = vlaneseq
        %v577 = vshrl.u32 %v576, 7
        %v578 = vsub.s32 %v575, %v577
        %v579 = vrot.slane %v565, %v578
        %v580 = vcombine.high %v572, %v572
        %v581 = vcombine.high %v579, %v579
        %v582 = vcombine.high %v358, %v358
        %v584 = vunpack.c.l.s4 1983009808
        %v585 = vunpack.c.0.s8 %v584
        %v586 = vlaneseq
        %v587 = vshrl.u32 %v586, 7
        %v588 = vsub.s32 %v585, %v587
        %v589 = vrot.slane %v358, %v588
        %v591 = vunpack.c.l.s4 1983009808
        %v592 = vunpack.c.0.s8 %v591
        %v593 = vlaneseq
        %v594 = vshrl.u32 %v593, 7
        %v595 = vsub.s32 %v592, %v594
        %v596 = vrot.slane %v582, %v595
        %v597 = vcombine.high %v589, %v589
        %v598 = vcombine.high %v596, %v596
        %v599 = vcombine.high %v359, %v359
        %v601 = vunpack.c.l.s4 1983009808
        %v602 = vunpack.c.0.s8 %v601
        %v603 = vlaneseq
        %v604 = vshrl.u32 %v603, 7
        %v605 = vsub.s32 %v602, %v604
        %v606 = vrot.slane %v359, %v605
        %v608 = vunpack.c.l.s4 1983009808
        %v609 = vunpack.c.0.s8 %v608
        %v610 = vlaneseq
        %v611 = vshrl.u32 %v610, 7
        %v612 = vsub.s32 %v609, %v611
        %v613 = vrot.slane %v599, %v612
        %v614 = vcombine.high %v606, %v606
        %v615 = vcombine.high %v613, %v613
        %v616 = vcombine.high %v360, %v360
        %v618 = vunpack.c.l.s4 1983009808
        %v619 = vunpack.c.0.s8 %v618
        %v620 = vlaneseq
        %v621 = vshrl.u32 %v620, 7
        %v622 = vsub.s32 %v619, %v621
        %v623 = vrot.slane %v360, %v622
        %v625 = vunpack.c.l.s4 1983009808
        %v626 = vunpack.c.0.s8 %v625
        %v627 = vlaneseq
        %v628 = vshrl.u32 %v627, 7
        %v629 = vsub.s32 %v626, %v628
        %v630 = vrot.slane %v616, %v629
        %v631 = vcombine.high %v623, %v623
        %v632 = vcombine.high %v630, %v630
        %v633 = vcombine.high %v361, %v361
        %v635 = vunpack.c.l.s4 1983009808
        %v636 = vunpack.c.0.s8 %v635
        %v637 = vlaneseq
        %v638 = vshrl.u32 %v637, 7
        %v639 = vsub.s32 %v636, %v638
        %v640 = vrot.slane %v361, %v639
        %v642 = vunpack.c.l.s4 1983009808
        %v643 = vunpack.c.0.s8 %v642
        %v644 = vlaneseq
        %v645 = vshrl.u32 %v644, 7
        %v646 = vsub.s32 %v643, %v645
        %v647 = vrot.slane %v633, %v646
        %v648 = vcombine.high %v640, %v640
        %v649 = vcombine.high %v647, %v647
        %v650 = vcombine.high %v362, %v362
        %v652 = vunpack.c.l.s4 1983009808
        %v653 = vunpack.c.0.s8 %v652
        %v654 = vlaneseq
        %v655 = vshrl.u32 %v654, 7
        %v656 = vsub.s32 %v653, %v655
        %v657 = vrot.slane %v362, %v656
        %v659 = vunpack.c.l.s4 1983009808
        %v660 = vunpack.c.0.s8 %v659
        %v661 = vlaneseq
        %v662 = vshrl.u32 %v661, 7
        %v663 = vsub.s32 %v660, %v662
        %v664 = vrot.slane %v650, %v663
        %v665 = vcombine.high %v657, %v657
        %v666 = vcombine.high %v664, %v664
        %v667 = vcombine.high %v363, %v363
        %v669 = vunpack.c.l.s4 1983009808
        %v670 = vunpack.c.0.s8 %v669
        %v671 = vlaneseq
        %v672 = vshrl.u32 %v671, 7
        %v673 = vsub.s32 %v670, %v672
        %v674 = vrot.slane %v363, %v673
        %v676 = vunpack.c.l.s4 1983009808
        %v677 = vunpack.c.0.s8 %v676
        %v678 = vlaneseq
        %v679 = vshrl.u32 %v678, 7
        %v680 = vsub.s32 %v677, %v679
        %v681 = vrot.slane %v667, %v680
        %v682 = vcombine.high %v674, %v674
        %v683 = vcombine.high %v681, %v681
        %v684 = vcombine.high %v364, %v364
        %v686 = vunpack.c.l.s4 1983009808
        %v687 = vunpack.c.0.s8 %v686
        %v688 = vlaneseq
        %v689 = vshrl.u32 %v688, 7
        %v690 = vsub.s32 %v687, %v689
        %v691 = vrot.slane %v364, %v690
        %v693 = vunpack.c.l.s4 1983009808
        %v694 = vunpack.c.0.s8 %v693
        %v695 = vlaneseq
        %v696 = vshrl.u32 %v695, 7
        %v697 = vsub.s32 %v694, %v696
        %v698 = vrot.slane %v684, %v697
        %v699 = vcombine.high %v691, %v691
        %v700 = vcombine.high %v698, %v698
        %v701 = vcombine.high %v365, %v365
        %v703 = vunpack.c.l.s4 1983009808
        %v704 = vunpack.c.0.s8 %v703
        %v705 = vlaneseq
        %v706 = vshrl.u32 %v705, 7
        %v707 = vsub.s32 %v704, %v706
        %v708 = vrot.slane %v365, %v707
        %v710 = vunpack.c.l.s4 1983009808
        %v711 = vunpack.c.0.s8 %v710
        %v712 = vlaneseq
        %v713 = vshrl.u32 %v712, 7
        %v714 = vsub.s32 %v711, %v713
        %v715 = vrot.slane %v701, %v714
        %v716 = vcombine.high %v708, %v708
        %v717 = vcombine.high %v715, %v715
        %v718 = vcombine.high %v366, %v366
        %v720 = vunpack.c.l.s4 1983009808
        %v721 = vunpack.c.0.s8 %v720
        %v722 = vlaneseq
        %v723 = vshrl.u32 %v722, 7
        %v724 = vsub.s32 %v721, %v723
        %v725 = vrot.slane %v366, %v724
        %v727 = vunpack.c.l.s4 1983009808
        %v728 = vunpack.c.0.s8 %v727
        %v729 = vlaneseq
        %v730 = vshrl.u32 %v729, 7
        %v731 = vsub.s32 %v728, %v730
        %v732 = vrot.slane %v718, %v731
        %v733 = vcombine.high %v725, %v725
        %v734 = vcombine.high %v732, %v732
        %v735 = vcombine.high %v367, %v367
        %v737 = vunpack.c.l.s4 1983009808
        %v738 = vunpack.c.0.s8 %v737
        %v739 = vlaneseq
        %v740 = vshrl.u32 %v739, 7
        %v741 = vsub.s32 %v738, %v740
        %v742 = vrot.slane %v367, %v741
        %v744 = vunpack.c.l.s4 1983009808
        %v745 = vunpack.c.0.s8 %v744
        %v746 = vlaneseq
        %v747 = vshrl.u32 %v746, 7
        %v748 = vsub.s32 %v745, %v747
        %v749 = vrot.slane %v735, %v748
        %v750 = vcombine.high %v742, %v742
        %v751 = vcombine.high %v749, %v749
        %v752 = vcombine.high %v368, %v368
        %v754 = vunpack.c.l.s4 1983009808
        %v755 = vunpack.c.0.s8 %v754
        %v756 = vlaneseq
        %v757 = vshrl.u32 %v756, 7
        %v758 = vsub.s32 %v755, %v757
        %v759 = vrot.slane %v368, %v758
        %v761 = vunpack.c.l.s4 1983009808
        %v762 = vunpack.c.0.s8 %v761
        %v763 = vlaneseq
        %v764 = vshrl.u32 %v763, 7
        %v765 = vsub.s32 %v762, %v764
        %v766 = vrot.slane %v752, %v765
        %v767 = vcombine.high %v759, %v759
        %v768 = vcombine.high %v766, %v766
        %v769 = vcombine.high %v369, %v369
        %v771 = vunpack.c.l.s4 1983009808
        %v772 = vunpack.c.0.s8 %v771
        %v773 = vlaneseq
        %v774 = vshrl.u32 %v773, 7
        %v775 = vsub.s32 %v772, %v774
        %v776 = vrot.slane %v369, %v775
        %v778 = vunpack.c.l.s4 1983009808
        %v779 = vunpack.c.0.s8 %v778
        %v780 = vlaneseq
        %v781 = vshrl.u32 %v780, 7
        %v782 = vsub.s32 %v779, %v781
        %v783 = vrot.slane %v769, %v782
        %v784 = vcombine.high %v776, %v776
        %v785 = vcombine.high %v783, %v783
        %v786 = vcombine.high %v370, %v370
        %v788 = vunpack.c.l.s4 1983009808
        %v789 = vunpack.c.0.s8 %v788
        %v790 = vlaneseq
        %v791 = vshrl.u32 %v790, 7
        %v792 = vsub.s32 %v789, %v791
        %v793 = vrot.slane %v370, %v792
        %v795 = vunpack.c.l.s4 1983009808
        %v796 = vunpack.c.0.s8 %v795
        %v797 = vlaneseq
        %v798 = vshrl.u32 %v797, 7
        %v799 = vsub.s32 %v796, %v798
        %v800 = vrot.slane %v786, %v799
        %v801 = vcombine.high %v793, %v793
        %v802 = vcombine.high %v800, %v800
        %v803 = vcombine.high %v371, %v371
        %v805 = vunpack.c.l.s4 1983009808
        %v806 = vunpack.c.0.s8 %v805
        %v807 = vlaneseq
        %v808 = vshrl.u32 %v807, 7
        %v809 = vsub.s32 %v806, %v808
        %v810 = vrot.slane %v371, %v809
        %v812 = vunpack.c.l.s4 1983009808
        %v813 = vunpack.c.0.s8 %v812
        %v814 = vlaneseq
        %v815 = vshrl.u32 %v814, 7
        %v816 = vsub.s32 %v813, %v815
        %v817 = vrot.slane %v803, %v816
        %v818 = vcombine.high %v810, %v810
        %v819 = vcombine.high %v817, %v817
        %v820 = vcombine.high %v372, %v372
        %v822 = vunpack.c.l.s4 1983009808
        %v823 = vunpack.c.0.s8 %v822
        %v824 = vlaneseq
        %v825 = vshrl.u32 %v824, 7
        %v826 = vsub.s32 %v823, %v825
        %v827 = vrot.slane %v372, %v826
        %v829 = vunpack.c.l.s4 1983009808
        %v830 = vunpack.c.0.s8 %v829
        %v831 = vlaneseq
        %v832 = vshrl.u32 %v831, 7
        %v833 = vsub.s32 %v830, %v832
        %v834 = vrot.slane %v820, %v833
        %v835 = vcombine.high %v827, %v827
        %v836 = vcombine.high %v834, %v834
        %v837 = vcombine.high %v373, %v373
        %v839 = vunpack.c.l.s4 1983009808
        %v840 = vunpack.c.0.s8 %v839
        %v841 = vlaneseq
        %v842 = vshrl.u32 %v841, 7
        %v843 = vsub.s32 %v840, %v842
        %v844 = vrot.slane %v373, %v843
        %v846 = vunpack.c.l.s4 1983009808
        %v847 = vunpack.c.0.s8 %v846
        %v848 = vlaneseq
        %v849 = vshrl.u32 %v848, 7
        %v850 = vsub.s32 %v847, %v849
        %v851 = vrot.slane %v837, %v850
        %v852 = vcombine.high %v844, %v844
        %v853 = vcombine.high %v851, %v851
        %v854 = vcombine.high %v374, %v374
        %v856 = vunpack.c.l.s4 1983009808
        %v857 = vunpack.c.0.s8 %v856
        %v858 = vlaneseq
        %v859 = vshrl.u32 %v858, 7
        %v860 = vsub.s32 %v857, %v859
        %v861 = vrot.slane %v374, %v860
        %v863 = vunpack.c.l.s4 1983009808
        %v864 = vunpack.c.0.s8 %v863
        %v865 = vlaneseq
        %v866 = vshrl.u32 %v865, 7
        %v867 = vsub.s32 %v864, %v866
        %v868 = vrot.slane %v854, %v867
        %v869 = vcombine.high %v861, %v861
        %v870 = vcombine.high %v868, %v868
        %v871 = vcombine.high %v375, %v375
        %v873 = vunpack.c.l.s4 1983009808
        %v874 = vunpack.c.0.s8 %v873
        %v875 = vlaneseq
        %v876 = vshrl.u32 %v875, 7
        %v877 = vsub.s32 %v874, %v876
        %v878 = vrot.slane %v375, %v877
        %v880 = vunpack.c.l.s4 1983009808
        %v881 = vunpack.c.0.s8 %v880
        %v882 = vlaneseq
        %v883 = vshrl.u32 %v882, 7
        %v884 = vsub.s32 %v881, %v883
        %v885 = vrot.slane %v871, %v884
        %v886 = vcombine.high %v878, %v878
        %v887 = vcombine.high %v885, %v885
        %v888 = vcombine.high %v376, %v376
        %v890 = vunpack.c.l.s4 1983009808
        %v891 = vunpack.c.0.s8 %v890
        %v892 = vlaneseq
        %v893 = vshrl.u32 %v892, 7
        %v894 = vsub.s32 %v891, %v893
        %v895 = vrot.slane %v376, %v894
        %v897 = vunpack.c.l.s4 1983009808
        %v898 = vunpack.c.0.s8 %v897
        %v899 = vlaneseq
        %v900 = vshrl.u32 %v899, 7
        %v901 = vsub.s32 %v898, %v900
        %v902 = vrot.slane %v888, %v901
        %v903 = vcombine.high %v895, %v895
        %v904 = vcombine.high %v902, %v902
        %v905 = vcombine.high %v377, %v377
        %v907 = vunpack.c.l.s4 1983009808
        %v908 = vunpack.c.0.s8 %v907
        %v909 = vlaneseq
        %v910 = vshrl.u32 %v909, 7
        %v911 = vsub.s32 %v908, %v910
        %v912 = vrot.slane %v377, %v911
        %v914 = vunpack.c.l.s4 1983009808
        %v915 = vunpack.c.0.s8 %v914
        %v916 = vlaneseq
        %v917 = vshrl.u32 %v916, 7
        %v918 = vsub.s32 %v915, %v917
        %v919 = vrot.slane %v905, %v918
        %v920 = vcombine.high %v912, %v912
        %v921 = vcombine.high %v919, %v919
        %v922 = vcombine.high %v378, %v378
        %v924 = vunpack.c.l.s4 1983009808
        %v925 = vunpack.c.0.s8 %v924
        %v926 = vlaneseq
        %v927 = vshrl.u32 %v926, 7
        %v928 = vsub.s32 %v925, %v927
        %v929 = vrot.slane %v378, %v928
        %v931 = vunpack.c.l.s4 1983009808
        %v932 = vunpack.c.0.s8 %v931
        %v933 = vlaneseq
        %v934 = vshrl.u32 %v933, 7
        %v935 = vsub.s32 %v932, %v934
        %v936 = vrot.slane %v922, %v935
        %v937 = vcombine.high %v929, %v929
        %v938 = vcombine.high %v936, %v936
        %v939 = vcombine.high %v379, %v379
        %v941 = vunpack.c.l.s4 1983009808
        %v942 = vunpack.c.0.s8 %v941
        %v943 = vlaneseq
        %v944 = vshrl.u32 %v943, 7
        %v945 = vsub.s32 %v942, %v944
        %v946 = vrot.slane %v379, %v945
        %v948 = vunpack.c.l.s4 1983009808
        %v949 = vunpack.c.0.s8 %v948
        %v950 = vlaneseq
        %v951 = vshrl.u32 %v950, 7
        %v952 = vsub.s32 %v949, %v951
        %v953 = vrot.slane %v939, %v952
        %v954 = vcombine.high %v946, %v946
        %v955 = vcombine.high %v953, %v953
        %v956 = vcombine.high %v380, %v380
        %v958 = vunpack.c.l.s4 1983009808
        %v959 = vunpack.c.0.s8 %v958
        %v960 = vlaneseq
        %v961 = vshrl.u32 %v960, 7
        %v962 = vsub.s32 %v959, %v961
        %v963 = vrot.slane %v380, %v962
        %v965 = vunpack.c.l.s4 1983009808
        %v966 = vunpack.c.0.s8 %v965
        %v967 = vlaneseq
        %v968 = vshrl.u32 %v967, 7
        %v969 = vsub.s32 %v966, %v968
        %v970 = vrot.slane %v956, %v969
        %v971 = vcombine.high %v963, %v963
        %v972 = vcombine.high %v970, %v970
        %v973 = vcombine.high %v381, %v381
        %v975 = vunpack.c.l.s4 1983009808
        %v976 = vunpack.c.0.s8 %v975
        %v977 = vlaneseq
        %v978 = vshrl.u32 %v977, 7
        %v979 = vsub.s32 %v976, %v978
        %v980 = vrot.slane %v381, %v979
        %v982 = vunpack.c.l.s4 1983009808
        %v983 = vunpack.c.0.s8 %v982
        %v984 = vlaneseq
        %v985 = vshrl.u32 %v984, 7
        %v986 = vsub.s32 %v983, %v985
        %v987 = vrot.slane %v973, %v986
        %v988 = vcombine.high %v980, %v980
        %v989 = vcombine.high %v987, %v987
        %v990 = vcombine.high %v382, %v382
        %v992 = vunpack.c.l.s4 1983009808
        %v993 = vunpack.c.0.s8 %v992
        %v994 = vlaneseq
        %v995 = vshrl.u32 %v994, 7
        %v996 = vsub.s32 %v993, %v995
        %v997 = vrot.slane %v382, %v996
        %v999 = vunpack.c.l.s4 1983009808
        %v1000 = vunpack.c.0.s8 %v999
        %v1001 = vlaneseq
        %v1002 = vshrl.u32 %v1001, 7
        %v1003 = vsub.s32 %v1000, %v1002
        %v1004 = vrot.slane %v990, %v1003
        %v1005 = vcombine.high %v997, %v997
        %v1006 = vcombine.high %v1004, %v1004
        %v1007 = vcombine.high %v383, %v383
        %v1009 = vunpack.c.l.s4 1983009808
        %v1010 = vunpack.c.0.s8 %v1009
        %v1011 = vlaneseq
        %v1012 = vshrl.u32 %v1011, 7
        %v1013 = vsub.s32 %v1010, %v1012
        %v1014 = vrot.slane %v383, %v1013
        %v1016 = vunpack.c.l.s4 1983009808
        %v1017 = vunpack.c.0.s8 %v1016
        %v1018 = vlaneseq
        %v1019 = vshrl.u32 %v1018, 7
        %v1020 = vsub.s32 %v1017, %v1019
        %v1021 = vrot.slane %v1007, %v1020
        %v1022 = vcombine.high %v1014, %v1014
        %v1023 = vcombine.high %v1021, %v1021
        %v1024 = vcombine.high %v384, %v384
        %v1026 = vunpack.c.l.s4 1983009808
        %v1027 = vunpack.c.0.s8 %v1026
        %v1028 = vlaneseq
        %v1029 = vshrl.u32 %v1028, 7
        %v1030 = vsub.s32 %v1027, %v1029
        %v1031 = vrot.slane %v384, %v1030
        %v1033 = vunpack.c.l.s4 1983009808
        %v1034 = vunpack.c.0.s8 %v1033
        %v1035 = vlaneseq
        %v1036 = vshrl.u32 %v1035, 7
        %v1037 = vsub.s32 %v1034, %v1036
        %v1038 = vrot.slane %v1024, %v1037
        %v1039 = vcombine.high %v1031, %v1031
        %v1040 = vcombine.high %v1038, %v1038
        %v1041 = vcombine.high %v385, %v385
        %v1043 = vunpack.c.l.s4 1983009808
        %v1044 = vunpack.c.0.s8 %v1043
        %v1045 = vlaneseq
        %v1046 = vshrl.u32 %v1045, 7
        %v1047 = vsub.s32 %v1044, %v1046
        %v1048 = vrot.slane %v385, %v1047
        %v1050 = vunpack.c.l.s4 1983009808
        %v1051 = vunpack.c.0.s8 %v1050
        %v1052 = vlaneseq
        %v1053 = vshrl.u32 %v1052, 7
        %v1054 = vsub.s32 %v1051, %v1053
        %v1055 = vrot.slane %v1041, %v1054
        %v1056 = vcombine.high %v1048, %v1048
        %v1057 = vcombine.high %v1055, %v1055
        %v1058 = vcombine.high %v386, %v386
        %v1060 = vunpack.c.l.s4 1983009808
        %v1061 = vunpack.c.0.s8 %v1060
        %v1062 = vlaneseq
        %v1063 = vshrl.u32 %v1062, 7
        %v1064 = vsub.s32 %v1061, %v1063
        %v1065 = vrot.slane %v386, %v1064
        %v1067 = vunpack.c.l.s4 1983009808
        %v1068 = vunpack.c.0.s8 %v1067
        %v1069 = vlaneseq
        %v1070 = vshrl.u32 %v1069, 7
        %v1071 = vsub.s32 %v1068, %v1070
        %v1072 = vrot.slane %v1058, %v1071
        %v1073 = vcombine.high %v1065, %v1065
        %v1074 = vcombine.high %v1072, %v1072
        %v1075 = vcombine.high %v387, %v387
        %v1077 = vunpack.c.l.s4 1983009808
        %v1078 = vunpack.c.0.s8 %v1077
        %v1079 = vlaneseq
        %v1080 = vshrl.u32 %v1079, 7
        %v1081 = vsub.s32 %v1078, %v1080
        %v1082 = vrot.slane %v387, %v1081
        %v1084 = vunpack.c.l.s4 1983009808
        %v1085 = vunpack.c.0.s8 %v1084
        %v1086 = vlaneseq
        %v1087 = vshrl.u32 %v1086, 7
        %v1088 = vsub.s32 %v1085, %v1087
        %v1089 = vrot.slane %v1075, %v1088
        %v1090 = vcombine.high %v1082, %v1082
        %v1091 = vcombine.high %v1089, %v1089
        %v1092 = vcombine.high %v388, %v388
        %v1094 = vunpack.c.l.s4 1983009808
        %v1095 = vunpack.c.0.s8 %v1094
        %v1096 = vlaneseq
        %v1097 = vshrl.u32 %v1096, 7
        %v1098 = vsub.s32 %v1095, %v1097
        %v1099 = vrot.slane %v388, %v1098
        %v1101 = vunpack.c.l.s4 1983009808
        %v1102 = vunpack.c.0.s8 %v1101
        %v1103 = vlaneseq
        %v1104 = vshrl.u32 %v1103, 7
        %v1105 = vsub.s32 %v1102, %v1104
        %v1106 = vrot.slane %v1092, %v1105
        %v1107 = vcombine.high %v1099, %v1099
        %v1108 = vcombine.high %v1106, %v1106
        %v1109 = vcombine.high %v389, %v389
        %v1111 = vunpack.c.l.s4 1983009808
        %v1112 = vunpack.c.0.s8 %v1111
        %v1113 = vlaneseq
        %v1114 = vshrl.u32 %v1113, 7
        %v1115 = vsub.s32 %v1112, %v1114
        %v1116 = vrot.slane %v389, %v1115
        %v1118 = vunpack.c.l.s4 1983009808
        %v1119 = vunpack.c.0.s8 %v1118
        %v1120 = vlaneseq
        %v1121 = vshrl.u32 %v1120, 7
        %v1122 = vsub.s32 %v1119, %v1121
        %v1123 = vrot.slane %v1109, %v1122
        %v1124 = vcombine.high %v1116, %v1116
        %v1125 = vcombine.high %v1123, %v1123
        %v1126 = vcombine.high %v390, %v390
        %v1128 = vunpack.c.l.s4 1983009808
        %v1129 = vunpack.c.0.s8 %v1128
        %v1130 = vlaneseq
        %v1131 = vshrl.u32 %v1130, 7
        %v1132 = vsub.s32 %v1129, %v1131
        %v1133 = vrot.slane %v390, %v1132
        %v1135 = vunpack.c.l.s4 1983009808
        %v1136 = vunpack.c.0.s8 %v1135
        %v1137 = vlaneseq
        %v1138 = vshrl.u32 %v1137, 7
        %v1139 = vsub.s32 %v1136, %v1138
        %v1140 = vrot.slane %v1126, %v1139
        %v1141 = vcombine.high %v1133, %v1133
        %v1142 = vcombine.high %v1140, %v1140
        %v1143 = vcombine.high %v391, %v391
        %v1145 = vunpack.c.l.s4 1983009808
        %v1146 = vunpack.c.0.s8 %v1145
        %v1147 = vlaneseq
        %v1148 = vshrl.u32 %v1147, 7
        %v1149 = vsub.s32 %v1146, %v1148
        %v1150 = vrot.slane %v391, %v1149
        %v1152 = vunpack.c.l.s4 1983009808
        %v1153 = vunpack.c.0.s8 %v1152
        %v1154 = vlaneseq
        %v1155 = vshrl.u32 %v1154, 7
        %v1156 = vsub.s32 %v1153, %v1155
        %v1157 = vrot.slane %v1143, %v1156
        %v1158 = vcombine.high %v1150, %v1150
        %v1159 = vcombine.high %v1157, %v1157
        %v1160 = vcombine.high %v392, %v392
        %v1162 = vunpack.c.l.s4 1983009808
        %v1163 = vunpack.c.0.s8 %v1162
        %v1164 = vlaneseq
        %v1165 = vshrl.u32 %v1164, 7
        %v1166 = vsub.s32 %v1163, %v1165
        %v1167 = vrot.slane %v392, %v1166
        %v1169 = vunpack.c.l.s4 1983009808
        %v1170 = vunpack.c.0.s8 %v1169
        %v1171 = vlaneseq
        %v1172 = vshrl.u32 %v1171, 7
        %v1173 = vsub.s32 %v1170, %v1172
        %v1174 = vrot.slane %v1160, %v1173
        %v1175 = vcombine.high %v1167, %v1167
        %v1176 = vcombine.high %v1174, %v1174
        %v1177 = vcombine.high %v393, %v393
        %v1179 = vunpack.c.l.s4 1983009808
        %v1180 = vunpack.c.0.s8 %v1179
        %v1181 = vlaneseq
        %v1182 = vshrl.u32 %v1181, 7
        %v1183 = vsub.s32 %v1180, %v1182
        %v1184 = vrot.slane %v393, %v1183
        %v1186 = vunpack.c.l.s4 1983009808
        %v1187 = vunpack.c.0.s8 %v1186
        %v1188 = vlaneseq
        %v1189 = vshrl.u32 %v1188, 7
        %v1190 = vsub.s32 %v1187, %v1189
        %v1191 = vrot.slane %v1177, %v1190
        %v1192 = vcombine.high %v1184, %v1184
        %v1193 = vcombine.high %v1191, %v1191
        %v1194 = vcombine.high %v394, %v394
        %v1196 = vunpack.c.l.s4 1983009808
        %v1197 = vunpack.c.0.s8 %v1196
        %v1198 = vlaneseq
        %v1199 = vshrl.u32 %v1198, 7
        %v1200 = vsub.s32 %v1197, %v1199
        %v1201 = vrot.slane %v394, %v1200
        %v1203 = vunpack.c.l.s4 1983009808
        %v1204 = vunpack.c.0.s8 %v1203
        %v1205 = vlaneseq
        %v1206 = vshrl.u32 %v1205, 7
        %v1207 = vsub.s32 %v1204, %v1206
        %v1208 = vrot.slane %v1194, %v1207
        %v1209 = vcombine.high %v1201, %v1201
        %v1210 = vcombine.high %v1208, %v1208
        %v1211 = vcombine.high %v395, %v395
        %v1213 = vunpack.c.l.s4 1983009808
        %v1214 = vunpack.c.0.s8 %v1213
        %v1215 = vlaneseq
        %v1216 = vshrl.u32 %v1215, 7
        %v1217 = vsub.s32 %v1214, %v1216
        %v1218 = vrot.slane %v395, %v1217
        %v1220 = vunpack.c.l.s4 1983009808
        %v1221 = vunpack.c.0.s8 %v1220
        %v1222 = vlaneseq
        %v1223 = vshrl.u32 %v1222, 7
        %v1224 = vsub.s32 %v1221, %v1223
        %v1225 = vrot.slane %v1211, %v1224
        %v1226 = vcombine.high %v1218, %v1218
        %v1227 = vcombine.high %v1225, %v1225
        %v1228 = vcombine.high %v396, %v396
        %v1230 = vunpack.c.l.s4 1983009808
        %v1231 = vunpack.c.0.s8 %v1230
        %v1232 = vlaneseq
        %v1233 = vshrl.u32 %v1232, 7
        %v1234 = vsub.s32 %v1231, %v1233
        %v1235 = vrot.slane %v396, %v1234
        %v1237 = vunpack.c.l.s4 1983009808
        %v1238 = vunpack.c.0.s8 %v1237
        %v1239 = vlaneseq
        %v1240 = vshrl.u32 %v1239, 7
        %v1241 = vsub.s32 %v1238, %v1240
        %v1242 = vrot.slane %v1228, %v1241
        %v1243 = vcombine.high %v1235, %v1235
        %v1244 = vcombine.high %v1242, %v1242
        %v1245 = vcombine.high %v397, %v397
        %v1247 = vunpack.c.l.s4 1983009808
        %v1248 = vunpack.c.0.s8 %v1247
        %v1249 = vlaneseq
        %v1250 = vshrl.u32 %v1249, 7
        %v1251 = vsub.s32 %v1248, %v1250
        %v1252 = vrot.slane %v397, %v1251
        %v1254 = vunpack.c.l.s4 1983009808
        %v1255 = vunpack.c.0.s8 %v1254
        %v1256 = vlaneseq
        %v1257 = vshrl.u32 %v1256, 7
        %v1258 = vsub.s32 %v1255, %v1257
        %v1259 = vrot.slane %v1245, %v1258
        %v1260 = vcombine.high %v1252, %v1252
        %v1261 = vcombine.high %v1259, %v1259
        %v1262 = vcombine.high %v398, %v398
        %v1264 = vunpack.c.l.s4 1983009808
        %v1265 = vunpack.c.0.s8 %v1264
        %v1266 = vlaneseq
        %v1267 = vshrl.u32 %v1266, 7
        %v1268 = vsub.s32 %v1265, %v1267
        %v1269 = vrot.slane %v398, %v1268
        %v1271 = vunpack.c.l.s4 1983009808
        %v1272 = vunpack.c.0.s8 %v1271
        %v1273 = vlaneseq
        %v1274 = vshrl.u32 %v1273, 7
        %v1275 = vsub.s32 %v1272, %v1274
        %v1276 = vrot.slane %v1262, %v1275
        %v1277 = vcombine.high %v1269, %v1269
        %v1278 = vcombine.high %v1276, %v1276
        %v1279 = vcombine.high %v399, %v399
        %v1281 = vunpack.c.l.s4 1983009808
        %v1282 = vunpack.c.0.s8 %v1281
        %v1283 = vlaneseq
        %v1284 = vshrl.u32 %v1283, 7
        %v1285 = vsub.s32 %v1282, %v1284
        %v1286 = vrot.slane %v399, %v1285
        %v1288 = vunpack.c.l.s4 1983009808
        %v1289 = vunpack.c.0.s8 %v1288
        %v1290 = vlaneseq
        %v1291 = vshrl.u32 %v1290, 7
        %v1292 = vsub.s32 %v1289, %v1291
        %v1293 = vrot.slane %v1279, %v1292
        %v1294 = vcombine.high %v1286, %v1286
        %v1295 = vcombine.high %v1293, %v1293
        %v1296 = vcombine.high %v400, %v400
        %v1298 = vunpack.c.l.s4 1983009808
        %v1299 = vunpack.c.0.s8 %v1298
        %v1300 = vlaneseq
        %v1301 = vshrl.u32 %v1300, 7
        %v1302 = vsub.s32 %v1299, %v1301
        %v1303 = vrot.slane %v400, %v1302
        %v1305 = vunpack.c.l.s4 1983009808
        %v1306 = vunpack.c.0.s8 %v1305
        %v1307 = vlaneseq
        %v1308 = vshrl.u32 %v1307, 7
        %v1309 = vsub.s32 %v1306, %v1308
        %v1310 = vrot.slane %v1296, %v1309
        %v1311 = vcombine.high %v1303, %v1303
        %v1312 = vcombine.high %v1310, %v1310
        %v1313 = vcombine.high %v401, %v401
        %v1315 = vunpack.c.l.s4 1983009808
        %v1316 = vunpack.c.0.s8 %v1315
        %v1317 = vlaneseq
        %v1318 = vshrl.u32 %v1317, 7
        %v1319 = vsub.s32 %v1316, %v1318
        %v1320 = vrot.slane %v401, %v1319
        %v1322 = vunpack.c.l.s4 1983009808
        %v1323 = vunpack.c.0.s8 %v1322
        %v1324 = vlaneseq
        %v1325 = vshrl.u32 %v1324, 7
        %v1326 = vsub.s32 %v1323, %v1325
        %v1327 = vrot.slane %v1313, %v1326
        %v1328 = vcombine.high %v1320, %v1320
        %v1329 = vcombine.high %v1327, %v1327
        %v1330 = vcombine.high %v402, %v402
        %v1332 = vunpack.c.l.s4 1983009808
        %v1333 = vunpack.c.0.s8 %v1332
        %v1334 = vlaneseq
        %v1335 = vshrl.u32 %v1334, 7
        %v1336 = vsub.s32 %v1333, %v1335
        %v1337 = vrot.slane %v402, %v1336
        %v1339 = vunpack.c.l.s4 1983009808
        %v1340 = vunpack.c.0.s8 %v1339
        %v1341 = vlaneseq
        %v1342 = vshrl.u32 %v1341, 7
        %v1343 = vsub.s32 %v1340, %v1342
        %v1344 = vrot.slane %v1330, %v1343
        %v1345 = vcombine.high %v1337, %v1337
        %v1346 = vcombine.high %v1344, %v1344
        %v1347 = vcombine.high %v403, %v403
        %v1349 = vunpack.c.l.s4 1983009808
        %v1350 = vunpack.c.0.s8 %v1349
        %v1351 = vlaneseq
        %v1352 = vshrl.u32 %v1351, 7
        %v1353 = vsub.s32 %v1350, %v1352
        %v1354 = vrot.slane %v403, %v1353
        %v1356 = vunpack.c.l.s4 1983009808
        %v1357 = vunpack.c.0.s8 %v1356
        %v1358 = vlaneseq
        %v1359 = vshrl.u32 %v1358, 7
        %v1360 = vsub.s32 %v1357, %v1359
        %v1361 = vrot.slane %v1347, %v1360
        %v1362 = vcombine.high %v1354, %v1354
        %v1363 = vcombine.high %v1361, %v1361
        %v1364 = vcombine.high %v404, %v404
        %v1366 = vunpack.c.l.s4 1983009808
        %v1367 = vunpack.c.0.s8 %v1366
        %v1368 = vlaneseq
        %v1369 = vshrl.u32 %v1368, 7
        %v1370 = vsub.s32 %v1367, %v1369
        %v1371 = vrot.slane %v404, %v1370
        %v1373 = vunpack.c.l.s4 1983009808
        %v1374 = vunpack.c.0.s8 %v1373
        %v1375 = vlaneseq
        %v1376 = vshrl.u32 %v1375, 7
        %v1377 = vsub.s32 %v1374, %v1376
        %v1378 = vrot.slane %v1364, %v1377
        %v1379 = vcombine.high %v1371, %v1371
        %v1380 = vcombine.high %v1378, %v1378
        %v1381 = vcombine.high %v405, %v405
        %v1383 = vunpack.c.l.s4 1983009808
        %v1384 = vunpack.c.0.s8 %v1383
        %v1385 = vlaneseq
        %v1386 = vshrl.u32 %v1385, 7
        %v1387 = vsub.s32 %v1384, %v1386
        %v1388 = vrot.slane %v405, %v1387
        %v1390 = vunpack.c.l.s4 1983009808
        %v1391 = vunpack.c.0.s8 %v1390
        %v1392 = vlaneseq
        %v1393 = vshrl.u32 %v1392, 7
        %v1394 = vsub.s32 %v1391, %v1393
        %v1395 = vrot.slane %v1381, %v1394
        %v1396 = vcombine.high %v1388, %v1388
        %v1397 = vcombine.high %v1395, %v1395
        %v1398 = vcombine.high %v406, %v406
        %v1400 = vunpack.c.l.s4 1983009808
        %v1401 = vunpack.c.0.s8 %v1400
        %v1402 = vlaneseq
        %v1403 = vshrl.u32 %v1402, 7
        %v1404 = vsub.s32 %v1401, %v1403
        %v1405 = vrot.slane %v406, %v1404
        %v1407 = vunpack.c.l.s4 1983009808
        %v1408 = vunpack.c.0.s8 %v1407
        %v1409 = vlaneseq
        %v1410 = vshrl.u32 %v1409, 7
        %v1411 = vsub.s32 %v1408, %v1410
        %v1412 = vrot.slane %v1398, %v1411
        %v1413 = vcombine.high %v1405, %v1405
        %v1414 = vcombine.high %v1412, %v1412
        %v1415 = vcombine.high %v407, %v407
        %v1417 = vunpack.c.l.s4 1983009808
        %v1418 = vunpack.c.0.s8 %v1417
        %v1419 = vlaneseq
        %v1420 = vshrl.u32 %v1419, 7
        %v1421 = vsub.s32 %v1418, %v1420
        %v1422 = vrot.slane %v407, %v1421
        %v1424 = vunpack.c.l.s4 1983009808
        %v1425 = vunpack.c.0.s8 %v1424
        %v1426 = vlaneseq
        %v1427 = vshrl.u32 %v1426, 7
        %v1428 = vsub.s32 %v1425, %v1427
        %v1429 = vrot.slane %v1415, %v1428
        %v1430 = vcombine.high %v1422, %v1422
        %v1431 = vcombine.high %v1429, %v1429
        %v1432 = vcombine.high %v408, %v408
        %v1434 = vunpack.c.l.s4 1983009808
        %v1435 = vunpack.c.0.s8 %v1434
        %v1436 = vlaneseq
        %v1437 = vshrl.u32 %v1436, 7
        %v1438 = vsub.s32 %v1435, %v1437
        %v1439 = vrot.slane %v408, %v1438
        %v1441 = vunpack.c.l.s4 1983009808
        %v1442 = vunpack.c.0.s8 %v1441
        %v1443 = vlaneseq
        %v1444 = vshrl.u32 %v1443, 7
        %v1445 = vsub.s32 %v1442, %v1444
        %v1446 = vrot.slane %v1432, %v1445
        %v1447 = vcombine.high %v1439, %v1439
        %v1448 = vcombine.high %v1446, %v1446
        %v1449 = vcombine.high %v409, %v409
        %v1451 = vunpack.c.l.s4 1983009808
        %v1452 = vunpack.c.0.s8 %v1451
        %v1453 = vlaneseq
        %v1454 = vshrl.u32 %v1453, 7
        %v1455 = vsub.s32 %v1452, %v1454
        %v1456 = vrot.slane %v409, %v1455
        %v1458 = vunpack.c.l.s4 1983009808
        %v1459 = vunpack.c.0.s8 %v1458
        %v1460 = vlaneseq
        %v1461 = vshrl.u32 %v1460, 7
        %v1462 = vsub.s32 %v1459, %v1461
        %v1463 = vrot.slane %v1449, %v1462
        %v1464 = vcombine.high %v1456, %v1456
        %v1465 = vcombine.high %v1463, %v1463
        %v1466 = vcombine.high %v410, %v410
        %v1468 = vunpack.c.l.s4 1983009808
        %v1469 = vunpack.c.0.s8 %v1468
        %v1470 = vlaneseq
        %v1471 = vshrl.u32 %v1470, 7
        %v1472 = vsub.s32 %v1469, %v1471
        %v1473 = vrot.slane %v410, %v1472
        %v1475 = vunpack.c.l.s4 1983009808
        %v1476 = vunpack.c.0.s8 %v1475
        %v1477 = vlaneseq
        %v1478 = vshrl.u32 %v1477, 7
        %v1479 = vsub.s32 %v1476, %v1478
        %v1480 = vrot.slane %v1466, %v1479
        %v1481 = vcombine.high %v1473, %v1473
        %v1482 = vcombine.high %v1480, %v1480
        %v1483 = vcombine.high %v411, %v411
        %v1485 = vunpack.c.l.s4 1983009808
        %v1486 = vunpack.c.0.s8 %v1485
        %v1487 = vlaneseq
        %v1488 = vshrl.u32 %v1487, 7
        %v1489 = vsub.s32 %v1486, %v1488
        %v1490 = vrot.slane %v411, %v1489
        %v1492 = vunpack.c.l.s4 1983009808
        %v1493 = vunpack.c.0.s8 %v1492
        %v1494 = vlaneseq
        %v1495 = vshrl.u32 %v1494, 7
        %v1496 = vsub.s32 %v1493, %v1495
        %v1497 = vrot.slane %v1483, %v1496
        %v1498 = vcombine.high %v1490, %v1490
        %v1499 = vcombine.high %v1497, %v1497
        %v1500 = vcombine.high %v412, %v412
        %v1502 = vunpack.c.l.s4 1983009808
        %v1503 = vunpack.c.0.s8 %v1502
        %v1504 = vlaneseq
        %v1505 = vshrl.u32 %v1504, 7
        %v1506 = vsub.s32 %v1503, %v1505
        %v1507 = vrot.slane %v412, %v1506
        %v1509 = vunpack.c.l.s4 1983009808
        %v1510 = vunpack.c.0.s8 %v1509
        %v1511 = vlaneseq
        %v1512 = vshrl.u32 %v1511, 7
        %v1513 = vsub.s32 %v1510, %v1512
        %v1514 = vrot.slane %v1500, %v1513
        %v1515 = vcombine.high %v1507, %v1507
        %v1516 = vcombine.high %v1514, %v1514
        %v1517 = vcombine.high %v413, %v413
        %v1519 = vunpack.c.l.s4 1983009808
        %v1520 = vunpack.c.0.s8 %v1519
        %v1521 = vlaneseq
        %v1522 = vshrl.u32 %v1521, 7
        %v1523 = vsub.s32 %v1520, %v1522
        %v1524 = vrot.slane %v413, %v1523
        %v1526 = vunpack.c.l.s4 1983009808
        %v1527 = vunpack.c.0.s8 %v1526
        %v1528 = vlaneseq
        %v1529 = vshrl.u32 %v1528, 7
        %v1530 = vsub.s32 %v1527, %v1529
        %v1531 = vrot.slane %v1517, %v1530
        %v1532 = vcombine.high %v1524, %v1524
        %v1533 = vcombine.high %v1531, %v1531
        %v1534 = vcombine.high %v414, %v414
        %v1536 = vunpack.c.l.s4 1983009808
        %v1537 = vunpack.c.0.s8 %v1536
        %v1538 = vlaneseq
        %v1539 = vshrl.u32 %v1538, 7
        %v1540 = vsub.s32 %v1537, %v1539
        %v1541 = vrot.slane %v414, %v1540
        %v1543 = vunpack.c.l.s4 1983009808
        %v1544 = vunpack.c.0.s8 %v1543
        %v1545 = vlaneseq
        %v1546 = vshrl.u32 %v1545, 7
        %v1547 = vsub.s32 %v1544, %v1546
        %v1548 = vrot.slane %v1534, %v1547
        %v1549 = vcombine.high %v1541, %v1541
        %v1550 = vcombine.high %v1548, %v1548
        %v1551 = vcombine.high %v415, %v415
        %v1553 = vunpack.c.l.s4 1983009808
        %v1554 = vunpack.c.0.s8 %v1553
        %v1555 = vlaneseq
        %v1556 = vshrl.u32 %v1555, 7
        %v1557 = vsub.s32 %v1554, %v1556
        %v1558 = vrot.slane %v415, %v1557
        %v1560 = vunpack.c.l.s4 1983009808
        %v1561 = vunpack.c.0.s8 %v1560
        %v1562 = vlaneseq
        %v1563 = vshrl.u32 %v1562, 7
        %v1564 = vsub.s32 %v1561, %v1563
        %v1565 = vrot.slane %v1551, %v1564
        %v1566 = vcombine.high %v1558, %v1558
        %v1567 = vcombine.high %v1565, %v1565
        %v1824 = vrot.slane %v487, 7
        %v1825 = vrot.slane %v1824, 2
        %v1826 = vrot.slane %v495, 7
        %v1827 = vrot.slane %v1826, 2
        %v1828 = vrot.slane %v494, 7
        %v1829 = vrot.slane %v1828, 2
        %v1830 = vrot.slane %v496, 7
        %v1831 = vrot.slane %v1830, 2
        %v1832 = vrot.slane %v504, 7
        %v1833 = vrot.slane %v1832, 2
        %v1834 = vrot.slane %v512, 7
        %v1835 = vrot.slane %v1834, 2
        %v1836 = vrot.slane %v511, 7
        %v1837 = vrot.slane %v1836, 2
        %v1838 = vrot.slane %v513, 7
        %v1839 = vrot.slane %v1838, 2
        %v1840 = vrot.slane %v521, 7
        %v1841 = vrot.slane %v1840, 2
        %v1842 = vrot.slane %v529, 7
        %v1843 = vrot.slane %v1842, 2
        %v1844 = vrot.slane %v528, 7
        %v1845 = vrot.slane %v1844, 2
        %v1846 = vrot.slane %v530, 7
        %v1847 = vrot.slane %v1846, 2
        %v1848 = vrot.slane %v538, 7
        %v1849 = vrot.slane %v1848, 2
        %v1850 = vrot.slane %v546, 7
        %v1851 = vrot.slane %v1850, 2
        %v1852 = vrot.slane %v545, 7
        %v1853 = vrot.slane %v1852, 2
        %v1854 = vrot.slane %v547, 7
        %v1855 = vrot.slane %v1854, 2
        %v1856 = vrot.slane %v555, 7
        %v1857 = vrot.slane %v1856, 2
        %v1858 = vrot.slane %v563, 7
        %v1859 = vrot.slane %v1858, 2
        %v1860 = vrot.slane %v562, 7
        %v1861 = vrot.slane %v1860, 2
        %v1862 = vrot.slane %v564, 7
        %v1863 = vrot.slane %v1862, 2
        %v1864 = vrot.slane %v572, 7
        %v1865 = vrot.slane %v1864, 2
        %v1866 = vrot.slane %v580, 7
        %v1867 = vrot.slane %v1866, 2
        %v1868 = vrot.slane %v579, 7
        %v1869 = vrot.slane %v1868, 2
        %v1870 = vrot.slane %v581, 7
        %v1871 = vrot.slane %v1870, 2
        %v1872 = vrot.slane %v589, 7
        %v1873 = vrot.slane %v1872, 2
        %v1874 = vrot.slane %v597, 7
        %v1875 = vrot.slane %v1874, 2
        %v1876 = vrot.slane %v596, 7
        %v1877 = vrot.slane %v1876, 2
        %v1878 = vrot.slane %v598, 7
        %v1879 = vrot.slane %v1878, 2
        %v1880 = vrot.slane %v606, 7
        %v1881 = vrot.slane %v1880, 2
        %v1882 = vrot.slane %v614, 7
        %v1883 = vrot.slane %v1882, 2
        %v1884 = vrot.slane %v613, 7
        %v1885 = vrot.slane %v1884, 2
        %v1886 = vrot.slane %v615, 7
        %v1887 = vrot.slane %v1886, 2
        %v1888 = vrot.slane %v623, 7
        %v1889 = vrot.slane %v1888, 2
        %v1890 = vrot.slane %v631, 7
        %v1891 = vrot.slane %v1890, 2
        %v1892 = vrot.slane %v630, 7
        %v1893 = vrot.slane %v1892, 2
        %v1894 = vrot.slane %v632, 7
        %v1895 = vrot.slane %v1894, 2
        %v1896 = vrot.slane %v640, 7
        %v1897 = vrot.slane %v1896, 2
        %v1898 = vrot.slane %v648, 7
        %v1899 = vrot.slane %v1898, 2
        %v1900 = vrot.slane %v647, 7
        %v1901 = vrot.slane %v1900, 2
        %v1902 = vrot.slane %v649, 7
        %v1903 = vrot.slane %v1902, 2
        %v1904 = vrot.slane %v657, 7
        %v1905 = vrot.slane %v1904, 2
        %v1906 = vrot.slane %v665, 7
        %v1907 = vrot.slane %v1906, 2
        %v1908 = vrot.slane %v664, 7
        %v1909 = vrot.slane %v1908, 2
        %v1910 = vrot.slane %v666, 7
        %v1911 = vrot.slane %v1910, 2
        %v1912 = vrot.slane %v674, 7
        %v1913 = vrot.slane %v1912, 2
        %v1914 = vrot.slane %v682, 7
        %v1915 = vrot.slane %v1914, 2
        %v1916 = vrot.slane %v681, 7
        %v1917 = vrot.slane %v1916, 2
        %v1918 = vrot.slane %v683, 7
        %v1919 = vrot.slane %v1918, 2
        %v1920 = vrot.slane %v691, 7
        %v1921 = vrot.slane %v1920, 2
        %v1922 = vrot.slane %v699, 7
        %v1923 = vrot.slane %v1922, 2
        %v1924 = vrot.slane %v698, 7
        %v1925 = vrot.slane %v1924, 2
        %v1926 = vrot.slane %v700, 7
        %v1927 = vrot.slane %v1926, 2
        %v1928 = vrot.slane %v708, 7
        %v1929 = vrot.slane %v1928, 2
        %v1930 = vrot.slane %v716, 7
        %v1931 = vrot.slane %v1930, 2
        %v1932 = vrot.slane %v715, 7
        %v1933 = vrot.slane %v1932, 2
        %v1934 = vrot.slane %v717, 7
        %v1935 = vrot.slane %v1934, 2
        %v1936 = vrot.slane %v725, 7
        %v1937 = vrot.slane %v1936, 2
        %v1938 = vrot.slane %v733, 7
        %v1939 = vrot.slane %v1938, 2
        %v1940 = vrot.slane %v732, 7
        %v1941 = vrot.slane %v1940, 2
        %v1942 = vrot.slane %v734, 7
        %v1943 = vrot.slane %v1942, 2
        %v1944 = vrot.slane %v742, 7
        %v1945 = vrot.slane %v1944, 2
        %v1946 = vrot.slane %v750, 7
        %v1947 = vrot.slane %v1946, 2
        %v1948 = vrot.slane %v749, 7
        %v1949 = vrot.slane %v1948, 2
        %v1950 = vrot.slane %v751, 7
        %v1951 = vrot.slane %v1950, 2
        %v1952 = vrot.slane %v759, 7
        %v1953 = vrot.slane %v1952, 2
        %v1954 = vrot.slane %v767, 7
        %v1955 = vrot.slane %v1954, 2
        %v1956 = vrot.slane %v766, 7
        %v1957 = vrot.slane %v1956, 2
        %v1958 = vrot.slane %v768, 7
        %v1959 = vrot.slane %v1958, 2
        %v1960 = vrot.slane %v776, 7
        %v1961 = vrot.slane %v1960, 2
        %v1962 = vrot.slane %v784, 7
        %v1963 = vrot.slane %v1962, 2
        %v1964 = vrot.slane %v783, 7
        %v1965 = vrot.slane %v1964, 2
        %v1966 = vrot.slane %v785, 7
        %v1967 = vrot.slane %v1966, 2
        %v1968 = vrot.slane %v793, 7
        %v1969 = vrot.slane %v1968, 2
        %v1970 = vrot.slane %v801, 7
        %v1971 = vrot.slane %v1970, 2
        %v1972 = vrot.slane %v800, 7
        %v1973 = vrot.slane %v1972, 2
        %v1974 = vrot.slane %v802, 7
        %v1975 = vrot.slane %v1974, 2
        %v1976 = vrot.slane %v810, 7
        %v1977 = vrot.slane %v1976, 2
        %v1978 = vrot.slane %v818, 7
        %v1979 = vrot.slane %v1978, 2
        %v1980 = vrot.slane %v817, 7
        %v1981 = vrot.slane %v1980, 2
        %v1982 = vrot.slane %v819, 7
        %v1983 = vrot.slane %v1982, 2
        %v1984 = vrot.slane %v827, 7
        %v1985 = vrot.slane %v1984, 2
        %v1986 = vrot.slane %v835, 7
        %v1987 = vrot.slane %v1986, 2
        %v1988 = vrot.slane %v834, 7
        %v1989 = vrot.slane %v1988, 2
        %v1990 = vrot.slane %v836, 7
        %v1991 = vrot.slane %v1990, 2
        %v1992 = vrot.slane %v844, 7
        %v1993 = vrot.slane %v1992, 2
        %v1994 = vrot.slane %v852, 7
        %v1995 = vrot.slane %v1994, 2
        %v1996 = vrot.slane %v851, 7
        %v1997 = vrot.slane %v1996, 2
        %v1998 = vrot.slane %v853, 7
        %v1999 = vrot.slane %v1998, 2
        %v2000 = vrot.slane %v861, 7
        %v2001 = vrot.slane %v2000, 2
        %v2002 = vrot.slane %v869, 7
        %v2003 = vrot.slane %v2002, 2
        %v2004 = vrot.slane %v868, 7
        %v2005 = vrot.slane %v2004, 2
        %v2006 = vrot.slane %v870, 7
        %v2007 = vrot.slane %v2006, 2
        %v2008 = vrot.slane %v878, 7
        %v2009 = vrot.slane %v2008, 2
        %v2010 = vrot.slane %v886, 7
        %v2011 = vrot.slane %v2010, 2
        %v2012 = vrot.slane %v885, 7
        %v2013 = vrot.slane %v2012, 2
        %v2014 = vrot.slane %v887, 7
        %v2015 = vrot.slane %v2014, 2
        %v2016 = vrot.slane %v895, 7
        %v2017 = vrot.slane %v2016, 2
        %v2018 = vrot.slane %v903, 7
        %v2019 = vrot.slane %v2018, 2
        %v2020 = vrot.slane %v902, 7
        %v2021 = vrot.slane %v2020, 2
        %v2022 = vrot.slane %v904, 7
        %v2023 = vrot.slane %v2022, 2
        %v2024 = vrot.slane %v912, 7
        %v2025 = vrot.slane %v2024, 2
        %v2026 = vrot.slane %v920, 7
        %v2027 = vrot.slane %v2026, 2
        %v2028 = vrot.slane %v919, 7
        %v2029 = vrot.slane %v2028, 2
        %v2030 = vrot.slane %v921, 7
        %v2031 = vrot.slane %v2030, 2
        %v2032 = vrot.slane %v929, 7
        %v2033 = vrot.slane %v2032, 2
        %v2034 = vrot.slane %v937, 7
        %v2035 = vrot.slane %v2034, 2
        %v2036 = vrot.slane %v936, 7
        %v2037 = vrot.slane %v2036, 2
        %v2038 = vrot.slane %v938, 7
        %v2039 = vrot.slane %v2038, 2
        %v2040 = vrot.slane %v946, 7
        %v2041 = vrot.slane %v2040, 2
        %v2042 = vrot.slane %v954, 7
        %v2043 = vrot.slane %v2042, 2
        %v2044 = vrot.slane %v953, 7
        %v2045 = vrot.slane %v2044, 2
        %v2046 = vrot.slane %v955, 7
        %v2047 = vrot.slane %v2046, 2
        %v2048 = vrot.slane %v963, 7
        %v2049 = vrot.slane %v2048, 2
        %v2050 = vrot.slane %v971, 7
        %v2051 = vrot.slane %v2050, 2
        %v2052 = vrot.slane %v970, 7
        %v2053 = vrot.slane %v2052, 2
        %v2054 = vrot.slane %v972, 7
        %v2055 = vrot.slane %v2054, 2
        %v2056 = vrot.slane %v980, 7
        %v2057 = vrot.slane %v2056, 2
        %v2058 = vrot.slane %v988, 7
        %v2059 = vrot.slane %v2058, 2
        %v2060 = vrot.slane %v987, 7
        %v2061 = vrot.slane %v2060, 2
        %v2062 = vrot.slane %v989, 7
        %v2063 = vrot.slane %v2062, 2
        %v2064 = vrot.slane %v997, 7
        %v2065 = vrot.slane %v2064, 2
        %v2066 = vrot.slane %v1005, 7
        %v2067 = vrot.slane %v2066, 2
        %v2068 = vrot.slane %v1004, 7
        %v2069 = vrot.slane %v2068, 2
        %v2070 = vrot.slane %v1006, 7
        %v2071 = vrot.slane %v2070, 2
        %v2072 = vrot.slane %v1014, 7
        %v2073 = vrot.slane %v2072, 2
        %v2074 = vrot.slane %v1022, 7
        %v2075 = vrot.slane %v2074, 2
        %v2076 = vrot.slane %v1021, 7
        %v2077 = vrot.slane %v2076, 2
        %v2078 = vrot.slane %v1023, 7
        %v2079 = vrot.slane %v2078, 2
        %v2080 = vrot.slane %v1031, 7
        %v2081 = vrot.slane %v2080, 2
        %v2082 = vrot.slane %v1039, 7
        %v2083 = vrot.slane %v2082, 2
        %v2084 = vrot.slane %v1038, 7
        %v2085 = vrot.slane %v2084, 2
        %v2086 = vrot.slane %v1040, 7
        %v2087 = vrot.slane %v2086, 2
        %v2088 = vrot.slane %v1048, 7
        %v2089 = vrot.slane %v2088, 2
        %v2090 = vrot.slane %v1056, 7
        %v2091 = vrot.slane %v2090, 2
        %v2092 = vrot.slane %v1055, 7
        %v2093 = vrot.slane %v2092, 2
        %v2094 = vrot.slane %v1057, 7
        %v2095 = vrot.slane %v2094, 2
        %v2096 = vrot.slane %v1065, 7
        %v2097 = vrot.slane %v2096, 2
        %v2098 = vrot.slane %v1073, 7
        %v2099 = vrot.slane %v2098, 2
        %v2100 = vrot.slane %v1072, 7
        %v2101 = vrot.slane %v2100, 2
        %v2102 = vrot.slane %v1074, 7
        %v2103 = vrot.slane %v2102, 2
        %v2104 = vrot.slane %v1082, 7
        %v2105 = vrot.slane %v2104, 2
        %v2106 = vrot.slane %v1090, 7
        %v2107 = vrot.slane %v2106, 2
        %v2108 = vrot.slane %v1089, 7
        %v2109 = vrot.slane %v2108, 2
        %v2110 = vrot.slane %v1091, 7
        %v2111 = vrot.slane %v2110, 2
        %v2112 = vrot.slane %v1099, 7
        %v2113 = vrot.slane %v2112, 2
        %v2114 = vrot.slane %v1107, 7
        %v2115 = vrot.slane %v2114, 2
        %v2116 = vrot.slane %v1106, 7
        %v2117 = vrot.slane %v2116, 2
        %v2118 = vrot.slane %v1108, 7
        %v2119 = vrot.slane %v2118, 2
        %v2120 = vrot.slane %v1116, 7
        %v2121 = vrot.slane %v2120, 2
        %v2122 = vrot.slane %v1124, 7
        %v2123 = vrot.slane %v2122, 2
        %v2124 = vrot.slane %v1123, 7
        %v2125 = vrot.slane %v2124, 2
        %v2126 = vrot.slane %v1125, 7
        %v2127 = vrot.slane %v2126, 2
        %v2128 = vrot.slane %v1133, 7
        %v2129 = vrot.slane %v2128, 2
        %v2130 = vrot.slane %v1141, 7
        %v2131 = vrot.slane %v2130, 2
        %v2132 = vrot.slane %v1140, 7
        %v2133 = vrot.slane %v2132, 2
        %v2134 = vrot.slane %v1142, 7
        %v2135 = vrot.slane %v2134, 2
        %v2136 = vrot.slane %v1150, 7
        %v2137 = vrot.slane %v2136, 2
        %v2138 = vrot.slane %v1158, 7
        %v2139 = vrot.slane %v2138, 2
        %v2140 = vrot.slane %v1157, 7
        %v2141 = vrot.slane %v2140, 2
        %v2142 = vrot.slane %v1159, 7
        %v2143 = vrot.slane %v2142, 2
        %v2144 = vrot.slane %v1167, 7
        %v2145 = vrot.slane %v2144, 2
        %v2146 = vrot.slane %v1175, 7
        %v2147 = vrot.slane %v2146, 2
        %v2148 = vrot.slane %v1174, 7
        %v2149 = vrot.slane %v2148, 2
        %v2150 = vrot.slane %v1176, 7
        %v2151 = vrot.slane %v2150, 2
        %v2152 = vrot.slane %v1184, 7
        %v2153 = vrot.slane %v2152, 2
        %v2154 = vrot.slane %v1192, 7
        %v2155 = vrot.slane %v2154, 2
        %v2156 = vrot.slane %v1191, 7
        %v2157 = vrot.slane %v2156, 2
        %v2158 = vrot.slane %v1193, 7
        %v2159 = vrot.slane %v2158, 2
        %v2160 = vrot.slane %v1201, 7
        %v2161 = vrot.slane %v2160, 2
        %v2162 = vrot.slane %v1209, 7
        %v2163 = vrot.slane %v2162, 2
        %v2164 = vrot.slane %v1208, 7
        %v2165 = vrot.slane %v2164, 2
        %v2166 = vrot.slane %v1210, 7
        %v2167 = vrot.slane %v2166, 2
        %v2168 = vrot.slane %v1218, 7
        %v2169 = vrot.slane %v2168, 2
        %v2170 = vrot.slane %v1226, 7
        %v2171 = vrot.slane %v2170, 2
        %v2172 = vrot.slane %v1225, 7
        %v2173 = vrot.slane %v2172, 2
        %v2174 = vrot.slane %v1227, 7
        %v2175 = vrot.slane %v2174, 2
        %v2176 = vrot.slane %v1235, 7
        %v2177 = vrot.slane %v2176, 2
        %v2178 = vrot.slane %v1243, 7
        %v2179 = vrot.slane %v2178, 2
        %v2180 = vrot.slane %v1242, 7
        %v2181 = vrot.slane %v2180, 2
        %v2182 = vrot.slane %v1244, 7
        %v2183 = vrot.slane %v2182, 2
        %v2184 = vrot.slane %v1252, 7
        %v2185 = vrot.slane %v2184, 2
        %v2186 = vrot.slane %v1260, 7
        %v2187 = vrot.slane %v2186, 2
        %v2188 = vrot.slane %v1259, 7
        %v2189 = vrot.slane %v2188, 2
        %v2190 = vrot.slane %v1261, 7
        %v2191 = vrot.slane %v2190, 2
        %v2192 = vrot.slane %v1269, 7
        %v2193 = vrot.slane %v2192, 2
        %v2194 = vrot.slane %v1277, 7
        %v2195 = vrot.slane %v2194, 2
        %v2196 = vrot.slane %v1276, 7
        %v2197 = vrot.slane %v2196, 2
        %v2198 = vrot.slane %v1278, 7
        %v2199 = vrot.slane %v2198, 2
        %v2200 = vrot.slane %v1286, 7
        %v2201 = vrot.slane %v2200, 2
        %v2202 = vrot.slane %v1294, 7
        %v2203 = vrot.slane %v2202, 2
        %v2204 = vrot.slane %v1293, 7
        %v2205 = vrot.slane %v2204, 2
        %v2206 = vrot.slane %v1295, 7
        %v2207 = vrot.slane %v2206, 2
        %v2208 = vrot.slane %v1303, 7
        %v2209 = vrot.slane %v2208, 2
        %v2210 = vrot.slane %v1311, 7
        %v2211 = vrot.slane %v2210, 2
        %v2212 = vrot.slane %v1310, 7
        %v2213 = vrot.slane %v2212, 2
        %v2214 = vrot.slane %v1312, 7
        %v2215 = vrot.slane %v2214, 2
        %v2216 = vrot.slane %v1320, 7
        %v2217 = vrot.slane %v2216, 2
        %v2218 = vrot.slane %v1328, 7
        %v2219 = vrot.slane %v2218, 2
        %v2220 = vrot.slane %v1327, 7
        %v2221 = vrot.slane %v2220, 2
        %v2222 = vrot.slane %v1329, 7
        %v2223 = vrot.slane %v2222, 2
        %v2224 = vrot.slane %v1337, 7
        %v2225 = vrot.slane %v2224, 2
        %v2226 = vrot.slane %v1345, 7
        %v2227 = vrot.slane %v2226, 2
        %v2228 = vrot.slane %v1344, 7
        %v2229 = vrot.slane %v2228, 2
        %v2230 = vrot.slane %v1346, 7
        %v2231 = vrot.slane %v2230, 2
        %v2232 = vrot.slane %v1354, 7
        %v2233 = vrot.slane %v2232, 2
        %v2234 = vrot.slane %v1362, 7
        %v2235 = vrot.slane %v2234, 2
        %v2236 = vrot.slane %v1361, 7
        %v2237 = vrot.slane %v2236, 2
        %v2238 = vrot.slane %v1363, 7
        %v2239 = vrot.slane %v2238, 2
        %v2240 = vrot.slane %v1371, 7
        %v2241 = vrot.slane %v2240, 2
        %v2242 = vrot.slane %v1379, 7
        %v2243 = vrot.slane %v2242, 2
        %v2244 = vrot.slane %v1378, 7
        %v2245 = vrot.slane %v2244, 2
        %v2246 = vrot.slane %v1380, 7
        %v2247 = vrot.slane %v2246, 2
        %v2248 = vrot.slane %v1388, 7
        %v2249 = vrot.slane %v2248, 2
        %v2250 = vrot.slane %v1396, 7
        %v2251 = vrot.slane %v2250, 2
        %v2252 = vrot.slane %v1395, 7
        %v2253 = vrot.slane %v2252, 2
        %v2254 = vrot.slane %v1397, 7
        %v2255 = vrot.slane %v2254, 2
        %v2256 = vrot.slane %v1405, 7
        %v2257 = vrot.slane %v2256, 2
        %v2258 = vrot.slane %v1413, 7
        %v2259 = vrot.slane %v2258, 2
        %v2260 = vrot.slane %v1412, 7
        %v2261 = vrot.slane %v2260, 2
        %v2262 = vrot.slane %v1414, 7
        %v2263 = vrot.slane %v2262, 2
        %v2264 = vrot.slane %v1422, 7
        %v2265 = vrot.slane %v2264, 2
        %v2266 = vrot.slane %v1430, 7
        %v2267 = vrot.slane %v2266, 2
        %v2268 = vrot.slane %v1429, 7
        %v2269 = vrot.slane %v2268, 2
        %v2270 = vrot.slane %v1431, 7
        %v2271 = vrot.slane %v2270, 2
        %v2272 = vrot.slane %v1439, 7
        %v2273 = vrot.slane %v2272, 2
        %v2274 = vrot.slane %v1447, 7
        %v2275 = vrot.slane %v2274, 2
        %v2276 = vrot.slane %v1446, 7
        %v2277 = vrot.slane %v2276, 2
        %v2278 = vrot.slane %v1448, 7
        %v2279 = vrot.slane %v2278, 2
        %v2280 = vrot.slane %v1456, 7
        %v2281 = vrot.slane %v2280, 2
        %v2282 = vrot.slane %v1464, 7
        %v2283 = vrot.slane %v2282, 2
        %v2284 = vrot.slane %v1463, 7
        %v2285 = vrot.slane %v2284, 2
        %v2286 = vrot.slane %v1465, 7
        %v2287 = vrot.slane %v2286, 2
        %v2288 = vrot.slane %v1473, 7
        %v2289 = vrot.slane %v2288, 2
        %v2290 = vrot.slane %v1481, 7
        %v2291 = vrot.slane %v2290, 2
        %v2292 = vrot.slane %v1480, 7
        %v2293 = vrot.slane %v2292, 2
        %v2294 = vrot.slane %v1482, 7
        %v2295 = vrot.slane %v2294, 2
        %v2296 = vrot.slane %v1490, 7
        %v2297 = vrot.slane %v2296, 2
        %v2298 = vrot.slane %v1498, 7
        %v2299 = vrot.slane %v2298, 2
        %v2300 = vrot.slane %v1497, 7
        %v2301 = vrot.slane %v2300, 2
        %v2302 = vrot.slane %v1499, 7
        %v2303 = vrot.slane %v2302, 2
        %v2304 = vrot.slane %v1507, 7
        %v2305 = vrot.slane %v2304, 2
        %v2306 = vrot.slane %v1515, 7
        %v2307 = vrot.slane %v2306, 2
        %v2308 = vrot.slane %v1514, 7
        %v2309 = vrot.slane %v2308, 2
        %v2310 = vrot.slane %v1516, 7
        %v2311 = vrot.slane %v2310, 2
        %v2312 = vrot.slane %v1524, 7
        %v2313 = vrot.slane %v2312, 2
        %v2314 = vrot.slane %v1532, 7
        %v2315 = vrot.slane %v2314, 2
        %v2316 = vrot.slane %v1531, 7
        %v2317 = vrot.slane %v2316, 2
        %v2318 = vrot.slane %v1533, 7
        %v2319 = vrot.slane %v2318, 2
        %v2320 = vrot.slane %v1541, 7
        %v2321 = vrot.slane %v2320, 2
        %v2322 = vrot.slane %v1549, 7
        %v2323 = vrot.slane %v2322, 2
        %v2324 = vrot.slane %v1548, 7
        %v2325 = vrot.slane %v2324, 2
        %v2326 = vrot.slane %v1550, 7
        %v2327 = vrot.slane %v2326, 2
        %v2328 = vrot.slane %v1558, 7
        %v2329 = vrot.slane %v2328, 2
        %v2330 = vrot.slane %v1566, 7
        %v2331 = vrot.slane %v2330, 2
        %v2332 = vrot.slane %v1565, 7
        %v2333 = vrot.slane %v2332, 2
        %v2334 = vrot.slane %v1567, 7
        %v2335 = vrot.slane %v2334, 2
        %v2592 = vmax.f32 %v487, %v1825
        %v2593 = vmax.f32 %v495, %v1827
        %v2594 = vmax.f32 %v494, %v1829
        %v2595 = vmax.f32 %v496, %v1831
        %v2596 = vmax.f32 %v504, %v1833
        %v2597 = vmax.f32 %v512, %v1835
        %v2598 = vmax.f32 %v511, %v1837
        %v2599 = vmax.f32 %v513, %v1839
        %v2600 = vmax.f32 %v521, %v1841
        %v2601 = vmax.f32 %v529, %v1843
        %v2602 = vmax.f32 %v528, %v1845
        %v2603 = vmax.f32 %v530, %v1847
        %v2604 = vmax.f32 %v538, %v1849
        %v2605 = vmax.f32 %v546, %v1851
        %v2606 = vmax.f32 %v545, %v1853
        %v2607 = vmax.f32 %v547, %v1855
        %v2608 = vmax.f32 %v555, %v1857
        %v2609 = vmax.f32 %v563, %v1859
        %v2610 = vmax.f32 %v562, %v1861
        %v2611 = vmax.f32 %v564, %v1863
        %v2612 = vmax.f32 %v572, %v1865
        %v2613 = vmax.f32 %v580, %v1867
        %v2614 = vmax.f32 %v579, %v1869
        %v2615 = vmax.f32 %v581, %v1871
        %v2616 = vmax.f32 %v589, %v1873
        %v2617 = vmax.f32 %v597, %v1875
        %v2618 = vmax.f32 %v596, %v1877
        %v2619 = vmax.f32 %v598, %v1879
        %v2620 = vmax.f32 %v606, %v1881
        %v2621 = vmax.f32 %v614, %v1883
        %v2622 = vmax.f32 %v613, %v1885
        %v2623 = vmax.f32 %v615, %v1887
        %v2624 = vmax.f32 %v623, %v1889
        %v2625 = vmax.f32 %v631, %v1891
        %v2626 = vmax.f32 %v630, %v1893
        %v2627 = vmax.f32 %v632, %v1895
        %v2628 = vmax.f32 %v640, %v1897
        %v2629 = vmax.f32 %v648, %v1899
        %v2630 = vmax.f32 %v647, %v1901
        %v2631 = vmax.f32 %v649, %v1903
        %v2632 = vmax.f32 %v657, %v1905
        %v2633 = vmax.f32 %v665, %v1907
        %v2634 = vmax.f32 %v664, %v1909
        %v2635 = vmax.f32 %v666, %v1911
        %v2636 = vmax.f32 %v674, %v1913
        %v2637 = vmax.f32 %v682, %v1915
        %v2638 = vmax.f32 %v681, %v1917
        %v2639 = vmax.f32 %v683, %v1919
        %v2640 = vmax.f32 %v691, %v1921
        %v2641 = vmax.f32 %v699, %v1923
        %v2642 = vmax.f32 %v698, %v1925
        %v2643 = vmax.f32 %v700, %v1927
        %v2644 = vmax.f32 %v708, %v1929
        %v2645 = vmax.f32 %v716, %v1931
        %v2646 = vmax.f32 %v715, %v1933
        %v2647 = vmax.f32 %v717, %v1935
        %v2648 = vmax.f32 %v725, %v1937
        %v2649 = vmax.f32 %v733, %v1939
        %v2650 = vmax.f32 %v732, %v1941
        %v2651 = vmax.f32 %v734, %v1943
        %v2652 = vmax.f32 %v742, %v1945
        %v2653 = vmax.f32 %v750, %v1947
        %v2654 = vmax.f32 %v749, %v1949
        %v2655 = vmax.f32 %v751, %v1951
        %v2656 = vmax.f32 %v759, %v1953
        %v2657 = vmax.f32 %v767, %v1955
        %v2658 = vmax.f32 %v766, %v1957
        %v2659 = vmax.f32 %v768, %v1959
        %v2660 = vmax.f32 %v776, %v1961
        %v2661 = vmax.f32 %v784, %v1963
        %v2662 = vmax.f32 %v783, %v1965
        %v2663 = vmax.f32 %v785, %v1967
        %v2664 = vmax.f32 %v793, %v1969
        %v2665 = vmax.f32 %v801, %v1971
        %v2666 = vmax.f32 %v800, %v1973
        %v2667 = vmax.f32 %v802, %v1975
        %v2668 = vmax.f32 %v810, %v1977
        %v2669 = vmax.f32 %v818, %v1979
        %v2670 = vmax.f32 %v817, %v1981
        %v2671 = vmax.f32 %v819, %v1983
        %v2672 = vmax.f32 %v827, %v1985
        %v2673 = vmax.f32 %v835, %v1987
        %v2674 = vmax.f32 %v834, %v1989
        %v2675 = vmax.f32 %v836, %v1991
        %v2676 = vmax.f32 %v844, %v1993
        %v2677 = vmax.f32 %v852, %v1995
        %v2678 = vmax.f32 %v851, %v1997
        %v2679 = vmax.f32 %v853, %v1999
        %v2680 = vmax.f32 %v861, %v2001
        %v2681 = vmax.f32 %v869, %v2003
        %v2682 = vmax.f32 %v868, %v2005
        %v2683 = vmax.f32 %v870, %v2007
        %v2684 = vmax.f32 %v878, %v2009
        %v2685 = vmax.f32 %v886, %v2011
        %v2686 = vmax.f32 %v885, %v2013
        %v2687 = vmax.f32 %v887, %v2015
        %v2688 = vmax.f32 %v895, %v2017
        %v2689 = vmax.f32 %v903, %v2019
        %v2690 = vmax.f32 %v902, %v2021
        %v2691 = vmax.f32 %v904, %v2023
        %v2692 = vmax.f32 %v912, %v2025
        %v2693 = vmax.f32 %v920, %v2027
        %v2694 = vmax.f32 %v919, %v2029
        %v2695 = vmax.f32 %v921, %v2031
        %v2696 = vmax.f32 %v929, %v2033
        %v2697 = vmax.f32 %v937, %v2035
        %v2698 = vmax.f32 %v936, %v2037
        %v2699 = vmax.f32 %v938, %v2039
        %v2700 = vmax.f32 %v946, %v2041
        %v2701 = vmax.f32 %v954, %v2043
        %v2702 = vmax.f32 %v953, %v2045
        %v2703 = vmax.f32 %v955, %v2047
        %v2704 = vmax.f32 %v963, %v2049
        %v2705 = vmax.f32 %v971, %v2051
        %v2706 = vmax.f32 %v970, %v2053
        %v2707 = vmax.f32 %v972, %v2055
        %v2708 = vmax.f32 %v980, %v2057
        %v2709 = vmax.f32 %v988, %v2059
        %v2710 = vmax.f32 %v987, %v2061
        %v2711 = vmax.f32 %v989, %v2063
        %v2712 = vmax.f32 %v997, %v2065
        %v2713 = vmax.f32 %v1005, %v2067
        %v2714 = vmax.f32 %v1004, %v2069
        %v2715 = vmax.f32 %v1006, %v2071
        %v2716 = vmax.f32 %v1014, %v2073
        %v2717 = vmax.f32 %v1022, %v2075
        %v2718 = vmax.f32 %v1021, %v2077
        %v2719 = vmax.f32 %v1023, %v2079
        %v2720 = vmax.f32 %v1031, %v2081
        %v2721 = vmax.f32 %v1039, %v2083
        %v2722 = vmax.f32 %v1038, %v2085
        %v2723 = vmax.f32 %v1040, %v2087
        %v2724 = vmax.f32 %v1048, %v2089
        %v2725 = vmax.f32 %v1056, %v2091
        %v2726 = vmax.f32 %v1055, %v2093
        %v2727 = vmax.f32 %v1057, %v2095
        %v2728 = vmax.f32 %v1065, %v2097
        %v2729 = vmax.f32 %v1073, %v2099
        %v2730 = vmax.f32 %v1072, %v2101
        %v2731 = vmax.f32 %v1074, %v2103
        %v2732 = vmax.f32 %v1082, %v2105
        %v2733 = vmax.f32 %v1090, %v2107
        %v2734 = vmax.f32 %v1089, %v2109
        %v2735 = vmax.f32 %v1091, %v2111
        %v2736 = vmax.f32 %v1099, %v2113
        %v2737 = vmax.f32 %v1107, %v2115
        %v2738 = vmax.f32 %v1106, %v2117
        %v2739 = vmax.f32 %v1108, %v2119
        %v2740 = vmax.f32 %v1116, %v2121
        %v2741 = vmax.f32 %v1124, %v2123
        %v2742 = vmax.f32 %v1123, %v2125
        %v2743 = vmax.f32 %v1125, %v2127
        %v2744 = vmax.f32 %v1133, %v2129
        %v2745 = vmax.f32 %v1141, %v2131
        %v2746 = vmax.f32 %v1140, %v2133
        %v2747 = vmax.f32 %v1142, %v2135
        %v2748 = vmax.f32 %v1150, %v2137
        %v2749 = vmax.f32 %v1158, %v2139
        %v2750 = vmax.f32 %v1157, %v2141
        %v2751 = vmax.f32 %v1159, %v2143
        %v2752 = vmax.f32 %v1167, %v2145
        %v2753 = vmax.f32 %v1175, %v2147
        %v2754 = vmax.f32 %v1174, %v2149
        %v2755 = vmax.f32 %v1176, %v2151
        %v2756 = vmax.f32 %v1184, %v2153
        %v2757 = vmax.f32 %v1192, %v2155
        %v2758 = vmax.f32 %v1191, %v2157
        %v2759 = vmax.f32 %v1193, %v2159
        %v2760 = vmax.f32 %v1201, %v2161
        %v2761 = vmax.f32 %v1209, %v2163
        %v2762 = vmax.f32 %v1208, %v2165
        %v2763 = vmax.f32 %v1210, %v2167
        %v2764 = vmax.f32 %v1218, %v2169
        %v2765 = vmax.f32 %v1226, %v2171
        %v2766 = vmax.f32 %v1225, %v2173
        %v2767 = vmax.f32 %v1227, %v2175
        %v2768 = vmax.f32 %v1235, %v2177
        %v2769 = vmax.f32 %v1243, %v2179
        %v2770 = vmax.f32 %v1242, %v2181
        %v2771 = vmax.f32 %v1244, %v2183
        %v2772 = vmax.f32 %v1252, %v2185
        %v2773 = vmax.f32 %v1260, %v2187
        %v2774 = vmax.f32 %v1259, %v2189
        %v2775 = vmax.f32 %v1261, %v2191
        %v2776 = vmax.f32 %v1269, %v2193
        %v2777 = vmax.f32 %v1277, %v2195
        %v2778 = vmax.f32 %v1276, %v2197
        %v2779 = vmax.f32 %v1278, %v2199
        %v2780 = vmax.f32 %v1286, %v2201
        %v2781 = vmax.f32 %v1294, %v2203
        %v2782 = vmax.f32 %v1293, %v2205
        %v2783 = vmax.f32 %v1295, %v2207
        %v2784 = vmax.f32 %v1303, %v2209
        %v2785 = vmax.f32 %v1311, %v2211
        %v2786 = vmax.f32 %v1310, %v2213
        %v2787 = vmax.f32 %v1312, %v2215
        %v2788 = vmax.f32 %v1320, %v2217
        %v2789 = vmax.f32 %v1328, %v2219
        %v2790 = vmax.f32 %v1327, %v2221
        %v2791 = vmax.f32 %v1329, %v2223
        %v2792 = vmax.f32 %v1337, %v2225
        %v2793 = vmax.f32 %v1345, %v2227
        %v2794 = vmax.f32 %v1344, %v2229
        %v2795 = vmax.f32 %v1346, %v2231
        %v2796 = vmax.f32 %v1354, %v2233
        %v2797 = vmax.f32 %v1362, %v2235
        %v2798 = vmax.f32 %v1361, %v2237
        %v2799 = vmax.f32 %v1363, %v2239
        %v2800 = vmax.f32 %v1371, %v2241
        %v2801 = vmax.f32 %v1379, %v2243
        %v2802 = vmax.f32 %v1378, %v2245
        %v2803 = vmax.f32 %v1380, %v2247
        %v2804 = vmax.f32 %v1388, %v2249
        %v2805 = vmax.f32 %v1396, %v2251
        %v2806 = vmax.f32 %v1395, %v2253
        %v2807 = vmax.f32 %v1397, %v2255
        %v2808 = vmax.f32 %v1405, %v2257
        %v2809 = vmax.f32 %v1413, %v2259
        %v2810 = vmax.f32 %v1412, %v2261
        %v2811 = vmax.f32 %v1414, %v2263
        %v2812 = vmax.f32 %v1422, %v2265
        %v2813 = vmax.f32 %v1430, %v2267
        %v2814 = vmax.f32 %v1429, %v2269
        %v2815 = vmax.f32 %v1431, %v2271
        %v2816 = vmax.f32 %v1439, %v2273
        %v2817 = vmax.f32 %v1447, %v2275
        %v2818 = vmax.f32 %v1446, %v2277
        %v2819 = vmax.f32 %v1448, %v2279
        %v2820 = vmax.f32 %v1456, %v2281
        %v2821 = vmax.f32 %v1464, %v2283
        %v2822 = vmax.f32 %v1463, %v2285
        %v2823 = vmax.f32 %v1465, %v2287
        %v2824 = vmax.f32 %v1473, %v2289
        %v2825 = vmax.f32 %v1481, %v2291
        %v2826 = vmax.f32 %v1480, %v2293
        %v2827 = vmax.f32 %v1482, %v2295
        %v2828 = vmax.f32 %v1490, %v2297
        %v2829 = vmax.f32 %v1498, %v2299
        %v2830 = vmax.f32 %v1497, %v2301
        %v2831 = vmax.f32 %v1499, %v2303
        %v2832 = vmax.f32 %v1507, %v2305
        %v2833 = vmax.f32 %v1515, %v2307
        %v2834 = vmax.f32 %v1514, %v2309
        %v2835 = vmax.f32 %v1516, %v2311
        %v2836 = vmax.f32 %v1524, %v2313
        %v2837 = vmax.f32 %v1532, %v2315
        %v2838 = vmax.f32 %v1531, %v2317
        %v2839 = vmax.f32 %v1533, %v2319
        %v2840 = vmax.f32 %v1541, %v2321
        %v2841 = vmax.f32 %v1549, %v2323
        %v2842 = vmax.f32 %v1548, %v2325
        %v2843 = vmax.f32 %v1550, %v2327
        %v2844 = vmax.f32 %v1558, %v2329
        %v2845 = vmax.f32 %v1566, %v2331
        %v2846 = vmax.f32 %v1565, %v2333
        %v2847 = vmax.f32 %v1567, %v2335
        %v2848 = vld [vmem:[%s1] sm:$0xff]
        %v2849 = vld [vmem:[%s1 + $0x8] sm:$0xff]
        %v3106 = vlaneseq
        %v3107 = vshrl.u32 %v3106, 7
        %v3108 = vsub.s32 0, %v3107
        %v3109 = vrot.slane %v2592, %v3108
        %v3110 = vlaneseq
        %v3111 = vshrl.u32 %v3110, 7
        %v3112 = vsub.s32 0, %v3111
        %v3113 = vrot.slane %v2593, %v3112
        %v3114 = vlaneseq
        %v3115 = vshrl.u32 %v3114, 7
        %v3116 = vsub.s32 0, %v3115
        %v3117 = vrot.slane %v2594, %v3116
        %v3118 = vlaneseq
        %v3119 = vshrl.u32 %v3118, 7
        %v3120 = vsub.s32 0, %v3119
        %v3121 = vrot.slane %v2595, %v3120
        %v3122 = vlaneseq
        %v3123 = vshrl.u32 %v3122, 7
        %v3124 = vsub.s32 0, %v3123
        %v3125 = vrot.slane %v2596, %v3124
        %v3126 = vlaneseq
        %v3127 = vshrl.u32 %v3126, 7
        %v3128 = vsub.s32 0, %v3127
        %v3129 = vrot.slane %v2597, %v3128
        %v3130 = vlaneseq
        %v3131 = vshrl.u32 %v3130, 7
        %v3132 = vsub.s32 0, %v3131
        %v3133 = vrot.slane %v2598, %v3132
        %v3134 = vlaneseq
        %v3135 = vshrl.u32 %v3134, 7
        %v3136 = vsub.s32 0, %v3135
        %v3137 = vrot.slane %v2599, %v3136
        %v3138 = vlaneseq
        %v3139 = vshrl.u32 %v3138, 7
        %v3140 = vsub.s32 0, %v3139
        %v3141 = vrot.slane %v2600, %v3140
        %v3142 = vlaneseq
        %v3143 = vshrl.u32 %v3142, 7
        %v3144 = vsub.s32 0, %v3143
        %v3145 = vrot.slane %v2601, %v3144
        %v3146 = vlaneseq
        %v3147 = vshrl.u32 %v3146, 7
        %v3148 = vsub.s32 0, %v3147
        %v3149 = vrot.slane %v2602, %v3148
        %v3150 = vlaneseq
        %v3151 = vshrl.u32 %v3150, 7
        %v3152 = vsub.s32 0, %v3151
        %v3153 = vrot.slane %v2603, %v3152
        %v3154 = vlaneseq
        %v3155 = vshrl.u32 %v3154, 7
        %v3156 = vsub.s32 0, %v3155
        %v3157 = vrot.slane %v2604, %v3156
        %v3158 = vlaneseq
        %v3159 = vshrl.u32 %v3158, 7
        %v3160 = vsub.s32 0, %v3159
        %v3161 = vrot.slane %v2605, %v3160
        %v3162 = vlaneseq
        %v3163 = vshrl.u32 %v3162, 7
        %v3164 = vsub.s32 0, %v3163
        %v3165 = vrot.slane %v2606, %v3164
        %v3166 = vlaneseq
        %v3167 = vshrl.u32 %v3166, 7
        %v3168 = vsub.s32 0, %v3167
        %v3169 = vrot.slane %v2607, %v3168
        %v3170 = vlaneseq
        %v3171 = vshrl.u32 %v3170, 7
        %v3172 = vsub.s32 0, %v3171
        %v3173 = vrot.slane %v2608, %v3172
        %v3174 = vlaneseq
        %v3175 = vshrl.u32 %v3174, 7
        %v3176 = vsub.s32 0, %v3175
        %v3177 = vrot.slane %v2609, %v3176
        %v3178 = vlaneseq
        %v3179 = vshrl.u32 %v3178, 7
        %v3180 = vsub.s32 0, %v3179
        %v3181 = vrot.slane %v2610, %v3180
        %v3182 = vlaneseq
        %v3183 = vshrl.u32 %v3182, 7
        %v3184 = vsub.s32 0, %v3183
        %v3185 = vrot.slane %v2611, %v3184
        %v3186 = vlaneseq
        %v3187 = vshrl.u32 %v3186, 7
        %v3188 = vsub.s32 0, %v3187
        %v3189 = vrot.slane %v2612, %v3188
        %v3190 = vlaneseq
        %v3191 = vshrl.u32 %v3190, 7
        %v3192 = vsub.s32 0, %v3191
        %v3193 = vrot.slane %v2613, %v3192
        %v3194 = vlaneseq
        %v3195 = vshrl.u32 %v3194, 7
        %v3196 = vsub.s32 0, %v3195
        %v3197 = vrot.slane %v2614, %v3196
        %v3198 = vlaneseq
        %v3199 = vshrl.u32 %v3198, 7
        %v3200 = vsub.s32 0, %v3199
        %v3201 = vrot.slane %v2615, %v3200
        %v3202 = vlaneseq
        %v3203 = vshrl.u32 %v3202, 7
        %v3204 = vsub.s32 0, %v3203
        %v3205 = vrot.slane %v2616, %v3204
        %v3206 = vlaneseq
        %v3207 = vshrl.u32 %v3206, 7
        %v3208 = vsub.s32 0, %v3207
        %v3209 = vrot.slane %v2617, %v3208
        %v3210 = vlaneseq
        %v3211 = vshrl.u32 %v3210, 7
        %v3212 = vsub.s32 0, %v3211
        %v3213 = vrot.slane %v2618, %v3212
        %v3214 = vlaneseq
        %v3215 = vshrl.u32 %v3214, 7
        %v3216 = vsub.s32 0, %v3215
        %v3217 = vrot.slane %v2619, %v3216
        %v3218 = vlaneseq
        %v3219 = vshrl.u32 %v3218, 7
        %v3220 = vsub.s32 0, %v3219
        %v3221 = vrot.slane %v2620, %v3220
        %v3222 = vlaneseq
        %v3223 = vshrl.u32 %v3222, 7
        %v3224 = vsub.s32 0, %v3223
        %v3225 = vrot.slane %v2621, %v3224
        %v3226 = vlaneseq
        %v3227 = vshrl.u32 %v3226, 7
        %v3228 = vsub.s32 0, %v3227
        %v3229 = vrot.slane %v2622, %v3228
        %v3230 = vlaneseq
        %v3231 = vshrl.u32 %v3230, 7
        %v3232 = vsub.s32 0, %v3231
        %v3233 = vrot.slane %v2623, %v3232
        %v3234 = vlaneseq
        %v3235 = vshrl.u32 %v3234, 7
        %v3236 = vsub.s32 0, %v3235
        %v3237 = vrot.slane %v2624, %v3236
        %v3238 = vlaneseq
        %v3239 = vshrl.u32 %v3238, 7
        %v3240 = vsub.s32 0, %v3239
        %v3241 = vrot.slane %v2625, %v3240
        %v3242 = vlaneseq
        %v3243 = vshrl.u32 %v3242, 7
        %v3244 = vsub.s32 0, %v3243
        %v3245 = vrot.slane %v2626, %v3244
        %v3246 = vlaneseq
        %v3247 = vshrl.u32 %v3246, 7
        %v3248 = vsub.s32 0, %v3247
        %v3249 = vrot.slane %v2627, %v3248
        %v3250 = vlaneseq
        %v3251 = vshrl.u32 %v3250, 7
        %v3252 = vsub.s32 0, %v3251
        %v3253 = vrot.slane %v2628, %v3252
        %v3254 = vlaneseq
        %v3255 = vshrl.u32 %v3254, 7
        %v3256 = vsub.s32 0, %v3255
        %v3257 = vrot.slane %v2629, %v3256
        %v3258 = vlaneseq
        %v3259 = vshrl.u32 %v3258, 7
        %v3260 = vsub.s32 0, %v3259
        %v3261 = vrot.slane %v2630, %v3260
        %v3262 = vlaneseq
        %v3263 = vshrl.u32 %v3262, 7
        %v3264 = vsub.s32 0, %v3263
        %v3265 = vrot.slane %v2631, %v3264
        %v3266 = vlaneseq
        %v3267 = vshrl.u32 %v3266, 7
        %v3268 = vsub.s32 0, %v3267
        %v3269 = vrot.slane %v2632, %v3268
        %v3270 = vlaneseq
        %v3271 = vshrl.u32 %v3270, 7
        %v3272 = vsub.s32 0, %v3271
        %v3273 = vrot.slane %v2633, %v3272
        %v3274 = vlaneseq
        %v3275 = vshrl.u32 %v3274, 7
        %v3276 = vsub.s32 0, %v3275
        %v3277 = vrot.slane %v2634, %v3276
        %v3278 = vlaneseq
        %v3279 = vshrl.u32 %v3278, 7
        %v3280 = vsub.s32 0, %v3279
        %v3281 = vrot.slane %v2635, %v3280
        %v3282 = vlaneseq
        %v3283 = vshrl.u32 %v3282, 7
        %v3284 = vsub.s32 0, %v3283
        %v3285 = vrot.slane %v2636, %v3284
        %v3286 = vlaneseq
        %v3287 = vshrl.u32 %v3286, 7
        %v3288 = vsub.s32 0, %v3287
        %v3289 = vrot.slane %v2637, %v3288
        %v3290 = vlaneseq
        %v3291 = vshrl.u32 %v3290, 7
        %v3292 = vsub.s32 0, %v3291
        %v3293 = vrot.slane %v2638, %v3292
        %v3294 = vlaneseq
        %v3295 = vshrl.u32 %v3294, 7
        %v3296 = vsub.s32 0, %v3295
        %v3297 = vrot.slane %v2639, %v3296
        %v3298 = vlaneseq
        %v3299 = vshrl.u32 %v3298, 7
        %v3300 = vsub.s32 0, %v3299
        %v3301 = vrot.slane %v2640, %v3300
        %v3302 = vlaneseq
        %v3303 = vshrl.u32 %v3302, 7
        %v3304 = vsub.s32 0, %v3303
        %v3305 = vrot.slane %v2641, %v3304
        %v3306 = vlaneseq
        %v3307 = vshrl.u32 %v3306, 7
        %v3308 = vsub.s32 0, %v3307
        %v3309 = vrot.slane %v2642, %v3308
        %v3310 = vlaneseq
        %v3311 = vshrl.u32 %v3310, 7
        %v3312 = vsub.s32 0, %v3311
        %v3313 = vrot.slane %v2643, %v3312
        %v3314 = vlaneseq
        %v3315 = vshrl.u32 %v3314, 7
        %v3316 = vsub.s32 0, %v3315
        %v3317 = vrot.slane %v2644, %v3316
        %v3318 = vlaneseq
        %v3319 = vshrl.u32 %v3318, 7
        %v3320 = vsub.s32 0, %v3319
        %v3321 = vrot.slane %v2645, %v3320
        %v3322 = vlaneseq
        %v3323 = vshrl.u32 %v3322, 7
        %v3324 = vsub.s32 0, %v3323
        %v3325 = vrot.slane %v2646, %v3324
        %v3326 = vlaneseq
        %v3327 = vshrl.u32 %v3326, 7
        %v3328 = vsub.s32 0, %v3327
        %v3329 = vrot.slane %v2647, %v3328
        %v3330 = vlaneseq
        %v3331 = vshrl.u32 %v3330, 7
        %v3332 = vsub.s32 0, %v3331
        %v3333 = vrot.slane %v2648, %v3332
        %v3334 = vlaneseq
        %v3335 = vshrl.u32 %v3334, 7
        %v3336 = vsub.s32 0, %v3335
        %v3337 = vrot.slane %v2649, %v3336
        %v3338 = vlaneseq
        %v3339 = vshrl.u32 %v3338, 7
        %v3340 = vsub.s32 0, %v3339
        %v3341 = vrot.slane %v2650, %v3340
        %v3342 = vlaneseq
        %v3343 = vshrl.u32 %v3342, 7
        %v3344 = vsub.s32 0, %v3343
        %v3345 = vrot.slane %v2651, %v3344
        %v3346 = vlaneseq
        %v3347 = vshrl.u32 %v3346, 7
        %v3348 = vsub.s32 0, %v3347
        %v3349 = vrot.slane %v2652, %v3348
        %v3350 = vlaneseq
        %v3351 = vshrl.u32 %v3350, 7
        %v3352 = vsub.s32 0, %v3351
        %v3353 = vrot.slane %v2653, %v3352
        %v3354 = vlaneseq
        %v3355 = vshrl.u32 %v3354, 7
        %v3356 = vsub.s32 0, %v3355
        %v3357 = vrot.slane %v2654, %v3356
        %v3358 = vlaneseq
        %v3359 = vshrl.u32 %v3358, 7
        %v3360 = vsub.s32 0, %v3359
        %v3361 = vrot.slane %v2655, %v3360
        %v3362 = vlaneseq
        %v3363 = vshrl.u32 %v3362, 7
        %v3364 = vsub.s32 0, %v3363
        %v3365 = vrot.slane %v2656, %v3364
        %v3366 = vlaneseq
        %v3367 = vshrl.u32 %v3366, 7
        %v3368 = vsub.s32 0, %v3367
        %v3369 = vrot.slane %v2657, %v3368
        %v3370 = vlaneseq
        %v3371 = vshrl.u32 %v3370, 7
        %v3372 = vsub.s32 0, %v3371
        %v3373 = vrot.slane %v2658, %v3372
        %v3374 = vlaneseq
        %v3375 = vshrl.u32 %v3374, 7
        %v3376 = vsub.s32 0, %v3375
        %v3377 = vrot.slane %v2659, %v3376
        %v3378 = vlaneseq
        %v3379 = vshrl.u32 %v3378, 7
        %v3380 = vsub.s32 0, %v3379
        %v3381 = vrot.slane %v2660, %v3380
        %v3382 = vlaneseq
        %v3383 = vshrl.u32 %v3382, 7
        %v3384 = vsub.s32 0, %v3383
        %v3385 = vrot.slane %v2661, %v3384
        %v3386 = vlaneseq
        %v3387 = vshrl.u32 %v3386, 7
        %v3388 = vsub.s32 0, %v3387
        %v3389 = vrot.slane %v2662, %v3388
        %v3390 = vlaneseq
        %v3391 = vshrl.u32 %v3390, 7
        %v3392 = vsub.s32 0, %v3391
        %v3393 = vrot.slane %v2663, %v3392
        %v3394 = vlaneseq
        %v3395 = vshrl.u32 %v3394, 7
        %v3396 = vsub.s32 0, %v3395
        %v3397 = vrot.slane %v2664, %v3396
        %v3398 = vlaneseq
        %v3399 = vshrl.u32 %v3398, 7
        %v3400 = vsub.s32 0, %v3399
        %v3401 = vrot.slane %v2665, %v3400
        %v3402 = vlaneseq
        %v3403 = vshrl.u32 %v3402, 7
        %v3404 = vsub.s32 0, %v3403
        %v3405 = vrot.slane %v2666, %v3404
        %v3406 = vlaneseq
        %v3407 = vshrl.u32 %v3406, 7
        %v3408 = vsub.s32 0, %v3407
        %v3409 = vrot.slane %v2667, %v3408
        %v3410 = vlaneseq
        %v3411 = vshrl.u32 %v3410, 7
        %v3412 = vsub.s32 0, %v3411
        %v3413 = vrot.slane %v2668, %v3412
        %v3414 = vlaneseq
        %v3415 = vshrl.u32 %v3414, 7
        %v3416 = vsub.s32 0, %v3415
        %v3417 = vrot.slane %v2669, %v3416
        %v3418 = vlaneseq
        %v3419 = vshrl.u32 %v3418, 7
        %v3420 = vsub.s32 0, %v3419
        %v3421 = vrot.slane %v2670, %v3420
        %v3422 = vlaneseq
        %v3423 = vshrl.u32 %v3422, 7
        %v3424 = vsub.s32 0, %v3423
        %v3425 = vrot.slane %v2671, %v3424
        %v3426 = vlaneseq
        %v3427 = vshrl.u32 %v3426, 7
        %v3428 = vsub.s32 0, %v3427
        %v3429 = vrot.slane %v2672, %v3428
        %v3430 = vlaneseq
        %v3431 = vshrl.u32 %v3430, 7
        %v3432 = vsub.s32 0, %v3431
        %v3433 = vrot.slane %v2673, %v3432
        %v3434 = vlaneseq
        %v3435 = vshrl.u32 %v3434, 7
        %v3436 = vsub.s32 0, %v3435
        %v3437 = vrot.slane %v2674, %v3436
        %v3438 = vlaneseq
        %v3439 = vshrl.u32 %v3438, 7
        %v3440 = vsub.s32 0, %v3439
        %v3441 = vrot.slane %v2675, %v3440
        %v3442 = vlaneseq
        %v3443 = vshrl.u32 %v3442, 7
        %v3444 = vsub.s32 0, %v3443
        %v3445 = vrot.slane %v2676, %v3444
        %v3446 = vlaneseq
        %v3447 = vshrl.u32 %v3446, 7
        %v3448 = vsub.s32 0, %v3447
        %v3449 = vrot.slane %v2677, %v3448
        %v3450 = vlaneseq
        %v3451 = vshrl.u32 %v3450, 7
        %v3452 = vsub.s32 0, %v3451
        %v3453 = vrot.slane %v2678, %v3452
        %v3454 = vlaneseq
        %v3455 = vshrl.u32 %v3454, 7
        %v3456 = vsub.s32 0, %v3455
        %v3457 = vrot.slane %v2679, %v3456
        %v3458 = vlaneseq
        %v3459 = vshrl.u32 %v3458, 7
        %v3460 = vsub.s32 0, %v3459
        %v3461 = vrot.slane %v2680, %v3460
        %v3462 = vlaneseq
        %v3463 = vshrl.u32 %v3462, 7
        %v3464 = vsub.s32 0, %v3463
        %v3465 = vrot.slane %v2681, %v3464
        %v3466 = vlaneseq
        %v3467 = vshrl.u32 %v3466, 7
        %v3468 = vsub.s32 0, %v3467
        %v3469 = vrot.slane %v2682, %v3468
        %v3470 = vlaneseq
        %v3471 = vshrl.u32 %v3470, 7
        %v3472 = vsub.s32 0, %v3471
        %v3473 = vrot.slane %v2683, %v3472
        %v3474 = vlaneseq
        %v3475 = vshrl.u32 %v3474, 7
        %v3476 = vsub.s32 0, %v3475
        %v3477 = vrot.slane %v2684, %v3476
        %v3478 = vlaneseq
        %v3479 = vshrl.u32 %v3478, 7
        %v3480 = vsub.s32 0, %v3479
        %v3481 = vrot.slane %v2685, %v3480
        %v3482 = vlaneseq
        %v3483 = vshrl.u32 %v3482, 7
        %v3484 = vsub.s32 0, %v3483
        %v3485 = vrot.slane %v2686, %v3484
        %v3486 = vlaneseq
        %v3487 = vshrl.u32 %v3486, 7
        %v3488 = vsub.s32 0, %v3487
        %v3489 = vrot.slane %v2687, %v3488
        %v3490 = vlaneseq
        %v3491 = vshrl.u32 %v3490, 7
        %v3492 = vsub.s32 0, %v3491
        %v3493 = vrot.slane %v2688, %v3492
        %v3494 = vlaneseq
        %v3495 = vshrl.u32 %v3494, 7
        %v3496 = vsub.s32 0, %v3495
        %v3497 = vrot.slane %v2689, %v3496
        %v3498 = vlaneseq
        %v3499 = vshrl.u32 %v3498, 7
        %v3500 = vsub.s32 0, %v3499
        %v3501 = vrot.slane %v2690, %v3500
        %v3502 = vlaneseq
        %v3503 = vshrl.u32 %v3502, 7
        %v3504 = vsub.s32 0, %v3503
        %v3505 = vrot.slane %v2691, %v3504
        %v3506 = vlaneseq
        %v3507 = vshrl.u32 %v3506, 7
        %v3508 = vsub.s32 0, %v3507
        %v3509 = vrot.slane %v2692, %v3508
        %v3510 = vlaneseq
        %v3511 = vshrl.u32 %v3510, 7
        %v3512 = vsub.s32 0, %v3511
        %v3513 = vrot.slane %v2693, %v3512
        %v3514 = vlaneseq
        %v3515 = vshrl.u32 %v3514, 7
        %v3516 = vsub.s32 0, %v3515
        %v3517 = vrot.slane %v2694, %v3516
        %v3518 = vlaneseq
        %v3519 = vshrl.u32 %v3518, 7
        %v3520 = vsub.s32 0, %v3519
        %v3521 = vrot.slane %v2695, %v3520
        %v3522 = vlaneseq
        %v3523 = vshrl.u32 %v3522, 7
        %v3524 = vsub.s32 0, %v3523
        %v3525 = vrot.slane %v2696, %v3524
        %v3526 = vlaneseq
        %v3527 = vshrl.u32 %v3526, 7
        %v3528 = vsub.s32 0, %v3527
        %v3529 = vrot.slane %v2697, %v3528
        %v3530 = vlaneseq
        %v3531 = vshrl.u32 %v3530, 7
        %v3532 = vsub.s32 0, %v3531
        %v3533 = vrot.slane %v2698, %v3532
        %v3534 = vlaneseq
        %v3535 = vshrl.u32 %v3534, 7
        %v3536 = vsub.s32 0, %v3535
        %v3537 = vrot.slane %v2699, %v3536
        %v3538 = vlaneseq
        %v3539 = vshrl.u32 %v3538, 7
        %v3540 = vsub.s32 0, %v3539
        %v3541 = vrot.slane %v2700, %v3540
        %v3542 = vlaneseq
        %v3543 = vshrl.u32 %v3542, 7
        %v3544 = vsub.s32 0, %v3543
        %v3545 = vrot.slane %v2701, %v3544
        %v3546 = vlaneseq
        %v3547 = vshrl.u32 %v3546, 7
        %v3548 = vsub.s32 0, %v3547
        %v3549 = vrot.slane %v2702, %v3548
        %v3550 = vlaneseq
        %v3551 = vshrl.u32 %v3550, 7
        %v3552 = vsub.s32 0, %v3551
        %v3553 = vrot.slane %v2703, %v3552
        %v3554 = vlaneseq
        %v3555 = vshrl.u32 %v3554, 7
        %v3556 = vsub.s32 0, %v3555
        %v3557 = vrot.slane %v2704, %v3556
        %v3558 = vlaneseq
        %v3559 = vshrl.u32 %v3558, 7
        %v3560 = vsub.s32 0, %v3559
        %v3561 = vrot.slane %v2705, %v3560
        %v3562 = vlaneseq
        %v3563 = vshrl.u32 %v3562, 7
        %v3564 = vsub.s32 0, %v3563
        %v3565 = vrot.slane %v2706, %v3564
        %v3566 = vlaneseq
        %v3567 = vshrl.u32 %v3566, 7
        %v3568 = vsub.s32 0, %v3567
        %v3569 = vrot.slane %v2707, %v3568
        %v3570 = vlaneseq
        %v3571 = vshrl.u32 %v3570, 7
        %v3572 = vsub.s32 0, %v3571
        %v3573 = vrot.slane %v2708, %v3572
        %v3574 = vlaneseq
        %v3575 = vshrl.u32 %v3574, 7
        %v3576 = vsub.s32 0, %v3575
        %v3577 = vrot.slane %v2709, %v3576
        %v3578 = vlaneseq
        %v3579 = vshrl.u32 %v3578, 7
        %v3580 = vsub.s32 0, %v3579
        %v3581 = vrot.slane %v2710, %v3580
        %v3582 = vlaneseq
        %v3583 = vshrl.u32 %v3582, 7
        %v3584 = vsub.s32 0, %v3583
        %v3585 = vrot.slane %v2711, %v3584
        %v3586 = vlaneseq
        %v3587 = vshrl.u32 %v3586, 7
        %v3588 = vsub.s32 0, %v3587
        %v3589 = vrot.slane %v2712, %v3588
        %v3590 = vlaneseq
        %v3591 = vshrl.u32 %v3590, 7
        %v3592 = vsub.s32 0, %v3591
        %v3593 = vrot.slane %v2713, %v3592
        %v3594 = vlaneseq
        %v3595 = vshrl.u32 %v3594, 7
        %v3596 = vsub.s32 0, %v3595
        %v3597 = vrot.slane %v2714, %v3596
        %v3598 = vlaneseq
        %v3599 = vshrl.u32 %v3598, 7
        %v3600 = vsub.s32 0, %v3599
        %v3601 = vrot.slane %v2715, %v3600
        %v3602 = vlaneseq
        %v3603 = vshrl.u32 %v3602, 7
        %v3604 = vsub.s32 0, %v3603
        %v3605 = vrot.slane %v2716, %v3604
        %v3606 = vlaneseq
        %v3607 = vshrl.u32 %v3606, 7
        %v3608 = vsub.s32 0, %v3607
        %v3609 = vrot.slane %v2717, %v3608
        %v3610 = vlaneseq
        %v3611 = vshrl.u32 %v3610, 7
        %v3612 = vsub.s32 0, %v3611
        %v3613 = vrot.slane %v2718, %v3612
        %v3614 = vlaneseq
        %v3615 = vshrl.u32 %v3614, 7
        %v3616 = vsub.s32 0, %v3615
        %v3617 = vrot.slane %v2719, %v3616
        %v3618 = vlaneseq
        %v3619 = vshrl.u32 %v3618, 7
        %v3620 = vsub.s32 0, %v3619
        %v3621 = vrot.slane %v2720, %v3620
        %v3622 = vlaneseq
        %v3623 = vshrl.u32 %v3622, 7
        %v3624 = vsub.s32 0, %v3623
        %v3625 = vrot.slane %v2721, %v3624
        %v3626 = vlaneseq
        %v3627 = vshrl.u32 %v3626, 7
        %v3628 = vsub.s32 0, %v3627
        %v3629 = vrot.slane %v2722, %v3628
        %v3630 = vlaneseq
        %v3631 = vshrl.u32 %v3630, 7
        %v3632 = vsub.s32 0, %v3631
        %v3633 = vrot.slane %v2723, %v3632
        %v3634 = vlaneseq
        %v3635 = vshrl.u32 %v3634, 7
        %v3636 = vsub.s32 0, %v3635
        %v3637 = vrot.slane %v2724, %v3636
        %v3638 = vlaneseq
        %v3639 = vshrl.u32 %v3638, 7
        %v3640 = vsub.s32 0, %v3639
        %v3641 = vrot.slane %v2725, %v3640
        %v3642 = vlaneseq
        %v3643 = vshrl.u32 %v3642, 7
        %v3644 = vsub.s32 0, %v3643
        %v3645 = vrot.slane %v2726, %v3644
        %v3646 = vlaneseq
        %v3647 = vshrl.u32 %v3646, 7
        %v3648 = vsub.s32 0, %v3647
        %v3649 = vrot.slane %v2727, %v3648
        %v3650 = vlaneseq
        %v3651 = vshrl.u32 %v3650, 7
        %v3652 = vsub.s32 0, %v3651
        %v3653 = vrot.slane %v2728, %v3652
        %v3654 = vlaneseq
        %v3655 = vshrl.u32 %v3654, 7
        %v3656 = vsub.s32 0, %v3655
        %v3657 = vrot.slane %v2729, %v3656
        %v3658 = vlaneseq
        %v3659 = vshrl.u32 %v3658, 7
        %v3660 = vsub.s32 0, %v3659
        %v3661 = vrot.slane %v2730, %v3660
        %v3662 = vlaneseq
        %v3663 = vshrl.u32 %v3662, 7
        %v3664 = vsub.s32 0, %v3663
        %v3665 = vrot.slane %v2731, %v3664
        %v3666 = vlaneseq
        %v3667 = vshrl.u32 %v3666, 7
        %v3668 = vsub.s32 0, %v3667
        %v3669 = vrot.slane %v2732, %v3668
        %v3670 = vlaneseq
        %v3671 = vshrl.u32 %v3670, 7
        %v3672 = vsub.s32 0, %v3671
        %v3673 = vrot.slane %v2733, %v3672
        %v3674 = vlaneseq
        %v3675 = vshrl.u32 %v3674, 7
        %v3676 = vsub.s32 0, %v3675
        %v3677 = vrot.slane %v2734, %v3676
        %v3678 = vlaneseq
        %v3679 = vshrl.u32 %v3678, 7
        %v3680 = vsub.s32 0, %v3679
        %v3681 = vrot.slane %v2735, %v3680
        %v3682 = vlaneseq
        %v3683 = vshrl.u32 %v3682, 7
        %v3684 = vsub.s32 0, %v3683
        %v3685 = vrot.slane %v2736, %v3684
        %v3686 = vlaneseq
        %v3687 = vshrl.u32 %v3686, 7
        %v3688 = vsub.s32 0, %v3687
        %v3689 = vrot.slane %v2737, %v3688
        %v3690 = vlaneseq
        %v3691 = vshrl.u32 %v3690, 7
        %v3692 = vsub.s32 0, %v3691
        %v3693 = vrot.slane %v2738, %v3692
        %v3694 = vlaneseq
        %v3695 = vshrl.u32 %v3694, 7
        %v3696 = vsub.s32 0, %v3695
        %v3697 = vrot.slane %v2739, %v3696
        %v3698 = vlaneseq
        %v3699 = vshrl.u32 %v3698, 7
        %v3700 = vsub.s32 0, %v3699
        %v3701 = vrot.slane %v2740, %v3700
        %v3702 = vlaneseq
        %v3703 = vshrl.u32 %v3702, 7
        %v3704 = vsub.s32 0, %v3703
        %v3705 = vrot.slane %v2741, %v3704
        %v3706 = vlaneseq
        %v3707 = vshrl.u32 %v3706, 7
        %v3708 = vsub.s32 0, %v3707
        %v3709 = vrot.slane %v2742, %v3708
        %v3710 = vlaneseq
        %v3711 = vshrl.u32 %v3710, 7
        %v3712 = vsub.s32 0, %v3711
        %v3713 = vrot.slane %v2743, %v3712
        %v3714 = vlaneseq
        %v3715 = vshrl.u32 %v3714, 7
        %v3716 = vsub.s32 0, %v3715
        %v3717 = vrot.slane %v2744, %v3716
        %v3718 = vlaneseq
        %v3719 = vshrl.u32 %v3718, 7
        %v3720 = vsub.s32 0, %v3719
        %v3721 = vrot.slane %v2745, %v3720
        %v3722 = vlaneseq
        %v3723 = vshrl.u32 %v3722, 7
        %v3724 = vsub.s32 0, %v3723
        %v3725 = vrot.slane %v2746, %v3724
        %v3726 = vlaneseq
        %v3727 = vshrl.u32 %v3726, 7
        %v3728 = vsub.s32 0, %v3727
        %v3729 = vrot.slane %v2747, %v3728
        %v3730 = vlaneseq
        %v3731 = vshrl.u32 %v3730, 7
        %v3732 = vsub.s32 0, %v3731
        %v3733 = vrot.slane %v2748, %v3732
        %v3734 = vlaneseq
        %v3735 = vshrl.u32 %v3734, 7
        %v3736 = vsub.s32 0, %v3735
        %v3737 = vrot.slane %v2749, %v3736
        %v3738 = vlaneseq
        %v3739 = vshrl.u32 %v3738, 7
        %v3740 = vsub.s32 0, %v3739
        %v3741 = vrot.slane %v2750, %v3740
        %v3742 = vlaneseq
        %v3743 = vshrl.u32 %v3742, 7
        %v3744 = vsub.s32 0, %v3743
        %v3745 = vrot.slane %v2751, %v3744
        %v3746 = vlaneseq
        %v3747 = vshrl.u32 %v3746, 7
        %v3748 = vsub.s32 0, %v3747
        %v3749 = vrot.slane %v2752, %v3748
        %v3750 = vlaneseq
        %v3751 = vshrl.u32 %v3750, 7
        %v3752 = vsub.s32 0, %v3751
        %v3753 = vrot.slane %v2753, %v3752
        %v3754 = vlaneseq
        %v3755 = vshrl.u32 %v3754, 7
        %v3756 = vsub.s32 0, %v3755
        %v3757 = vrot.slane %v2754, %v3756
        %v3758 = vlaneseq
        %v3759 = vshrl.u32 %v3758, 7
        %v3760 = vsub.s32 0, %v3759
        %v3761 = vrot.slane %v2755, %v3760
        %v3762 = vlaneseq
        %v3763 = vshrl.u32 %v3762, 7
        %v3764 = vsub.s32 0, %v3763
        %v3765 = vrot.slane %v2756, %v3764
        %v3766 = vlaneseq
        %v3767 = vshrl.u32 %v3766, 7
        %v3768 = vsub.s32 0, %v3767
        %v3769 = vrot.slane %v2757, %v3768
        %v3770 = vlaneseq
        %v3771 = vshrl.u32 %v3770, 7
        %v3772 = vsub.s32 0, %v3771
        %v3773 = vrot.slane %v2758, %v3772
        %v3774 = vlaneseq
        %v3775 = vshrl.u32 %v3774, 7
        %v3776 = vsub.s32 0, %v3775
        %v3777 = vrot.slane %v2759, %v3776
        %v3778 = vlaneseq
        %v3779 = vshrl.u32 %v3778, 7
        %v3780 = vsub.s32 0, %v3779
        %v3781 = vrot.slane %v2760, %v3780
        %v3782 = vlaneseq
        %v3783 = vshrl.u32 %v3782, 7
        %v3784 = vsub.s32 0, %v3783
        %v3785 = vrot.slane %v2761, %v3784
        %v3786 = vlaneseq
        %v3787 = vshrl.u32 %v3786, 7
        %v3788 = vsub.s32 0, %v3787
        %v3789 = vrot.slane %v2762, %v3788
        %v3790 = vlaneseq
        %v3791 = vshrl.u32 %v3790, 7
        %v3792 = vsub.s32 0, %v3791
        %v3793 = vrot.slane %v2763, %v3792
        %v3794 = vlaneseq
        %v3795 = vshrl.u32 %v3794, 7
        %v3796 = vsub.s32 0, %v3795
        %v3797 = vrot.slane %v2764, %v3796
        %v3798 = vlaneseq
        %v3799 = vshrl.u32 %v3798, 7
        %v3800 = vsub.s32 0, %v3799
        %v3801 = vrot.slane %v2765, %v3800
        %v3802 = vlaneseq
        %v3803 = vshrl.u32 %v3802, 7
        %v3804 = vsub.s32 0, %v3803
        %v3805 = vrot.slane %v2766, %v3804
        %v3806 = vlaneseq
        %v3807 = vshrl.u32 %v3806, 7
        %v3808 = vsub.s32 0, %v3807
        %v3809 = vrot.slane %v2767, %v3808
        %v3810 = vlaneseq
        %v3811 = vshrl.u32 %v3810, 7
        %v3812 = vsub.s32 0, %v3811
        %v3813 = vrot.slane %v2768, %v3812
        %v3814 = vlaneseq
        %v3815 = vshrl.u32 %v3814, 7
        %v3816 = vsub.s32 0, %v3815
        %v3817 = vrot.slane %v2769, %v3816
        %v3818 = vlaneseq
        %v3819 = vshrl.u32 %v3818, 7
        %v3820 = vsub.s32 0, %v3819
        %v3821 = vrot.slane %v2770, %v3820
        %v3822 = vlaneseq
        %v3823 = vshrl.u32 %v3822, 7
        %v3824 = vsub.s32 0, %v3823
        %v3825 = vrot.slane %v2771, %v3824
        %v3826 = vlaneseq
        %v3827 = vshrl.u32 %v3826, 7
        %v3828 = vsub.s32 0, %v3827
        %v3829 = vrot.slane %v2772, %v3828
        %v3830 = vlaneseq
        %v3831 = vshrl.u32 %v3830, 7
        %v3832 = vsub.s32 0, %v3831
        %v3833 = vrot.slane %v2773, %v3832
        %v3834 = vlaneseq
        %v3835 = vshrl.u32 %v3834, 7
        %v3836 = vsub.s32 0, %v3835
        %v3837 = vrot.slane %v2774, %v3836
        %v3838 = vlaneseq
        %v3839 = vshrl.u32 %v3838, 7
        %v3840 = vsub.s32 0, %v3839
        %v3841 = vrot.slane %v2775, %v3840
        %v3842 = vlaneseq
        %v3843 = vshrl.u32 %v3842, 7
        %v3844 = vsub.s32 0, %v3843
        %v3845 = vrot.slane %v2776, %v3844
        %v3846 = vlaneseq
        %v3847 = vshrl.u32 %v3846, 7
        %v3848 = vsub.s32 0, %v3847
        %v3849 = vrot.slane %v2777, %v3848
        %v3850 = vlaneseq
        %v3851 = vshrl.u32 %v3850, 7
        %v3852 = vsub.s32 0, %v3851
        %v3853 = vrot.slane %v2778, %v3852
        %v3854 = vlaneseq
        %v3855 = vshrl.u32 %v3854, 7
        %v3856 = vsub.s32 0, %v3855
        %v3857 = vrot.slane %v2779, %v3856
        %v3858 = vlaneseq
        %v3859 = vshrl.u32 %v3858, 7
        %v3860 = vsub.s32 0, %v3859
        %v3861 = vrot.slane %v2780, %v3860
        %v3862 = vlaneseq
        %v3863 = vshrl.u32 %v3862, 7
        %v3864 = vsub.s32 0, %v3863
        %v3865 = vrot.slane %v2781, %v3864
        %v3866 = vlaneseq
        %v3867 = vshrl.u32 %v3866, 7
        %v3868 = vsub.s32 0, %v3867
        %v3869 = vrot.slane %v2782, %v3868
        %v3870 = vlaneseq
        %v3871 = vshrl.u32 %v3870, 7
        %v3872 = vsub.s32 0, %v3871
        %v3873 = vrot.slane %v2783, %v3872
        %v3874 = vlaneseq
        %v3875 = vshrl.u32 %v3874, 7
        %v3876 = vsub.s32 0, %v3875
        %v3877 = vrot.slane %v2784, %v3876
        %v3878 = vlaneseq
        %v3879 = vshrl.u32 %v3878, 7
        %v3880 = vsub.s32 0, %v3879
        %v3881 = vrot.slane %v2785, %v3880
        %v3882 = vlaneseq
        %v3883 = vshrl.u32 %v3882, 7
        %v3884 = vsub.s32 0, %v3883
        %v3885 = vrot.slane %v2786, %v3884
        %v3886 = vlaneseq
        %v3887 = vshrl.u32 %v3886, 7
        %v3888 = vsub.s32 0, %v3887
        %v3889 = vrot.slane %v2787, %v3888
        %v3890 = vlaneseq
        %v3891 = vshrl.u32 %v3890, 7
        %v3892 = vsub.s32 0, %v3891
        %v3893 = vrot.slane %v2788, %v3892
        %v3894 = vlaneseq
        %v3895 = vshrl.u32 %v3894, 7
        %v3896 = vsub.s32 0, %v3895
        %v3897 = vrot.slane %v2789, %v3896
        %v3898 = vlaneseq
        %v3899 = vshrl.u32 %v3898, 7
        %v3900 = vsub.s32 0, %v3899
        %v3901 = vrot.slane %v2790, %v3900
        %v3902 = vlaneseq
        %v3903 = vshrl.u32 %v3902, 7
        %v3904 = vsub.s32 0, %v3903
        %v3905 = vrot.slane %v2791, %v3904
        %v3906 = vlaneseq
        %v3907 = vshrl.u32 %v3906, 7
        %v3908 = vsub.s32 0, %v3907
        %v3909 = vrot.slane %v2792, %v3908
        %v3910 = vlaneseq
        %v3911 = vshrl.u32 %v3910, 7
        %v3912 = vsub.s32 0, %v3911
        %v3913 = vrot.slane %v2793, %v3912
        %v3914 = vlaneseq
        %v3915 = vshrl.u32 %v3914, 7
        %v3916 = vsub.s32 0, %v3915
        %v3917 = vrot.slane %v2794, %v3916
        %v3918 = vlaneseq
        %v3919 = vshrl.u32 %v3918, 7
        %v3920 = vsub.s32 0, %v3919
        %v3921 = vrot.slane %v2795, %v3920
        %v3922 = vlaneseq
        %v3923 = vshrl.u32 %v3922, 7
        %v3924 = vsub.s32 0, %v3923
        %v3925 = vrot.slane %v2796, %v3924
        %v3926 = vlaneseq
        %v3927 = vshrl.u32 %v3926, 7
        %v3928 = vsub.s32 0, %v3927
        %v3929 = vrot.slane %v2797, %v3928
        %v3930 = vlaneseq
        %v3931 = vshrl.u32 %v3930, 7
        %v3932 = vsub.s32 0, %v3931
        %v3933 = vrot.slane %v2798, %v3932
        %v3934 = vlaneseq
        %v3935 = vshrl.u32 %v3934, 7
        %v3936 = vsub.s32 0, %v3935
        %v3937 = vrot.slane %v2799, %v3936
        %v3938 = vlaneseq
        %v3939 = vshrl.u32 %v3938, 7
        %v3940 = vsub.s32 0, %v3939
        %v3941 = vrot.slane %v2800, %v3940
        %v3942 = vlaneseq
        %v3943 = vshrl.u32 %v3942, 7
        %v3944 = vsub.s32 0, %v3943
        %v3945 = vrot.slane %v2801, %v3944
        %v3946 = vlaneseq
        %v3947 = vshrl.u32 %v3946, 7
        %v3948 = vsub.s32 0, %v3947
        %v3949 = vrot.slane %v2802, %v3948
        %v3950 = vlaneseq
        %v3951 = vshrl.u32 %v3950, 7
        %v3952 = vsub.s32 0, %v3951
        %v3953 = vrot.slane %v2803, %v3952
        %v3954 = vlaneseq
        %v3955 = vshrl.u32 %v3954, 7
        %v3956 = vsub.s32 0, %v3955
        %v3957 = vrot.slane %v2804, %v3956
        %v3958 = vlaneseq
        %v3959 = vshrl.u32 %v3958, 7
        %v3960 = vsub.s32 0, %v3959
        %v3961 = vrot.slane %v2805, %v3960
        %v3962 = vlaneseq
        %v3963 = vshrl.u32 %v3962, 7
        %v3964 = vsub.s32 0, %v3963
        %v3965 = vrot.slane %v2806, %v3964
        %v3966 = vlaneseq
        %v3967 = vshrl.u32 %v3966, 7
        %v3968 = vsub.s32 0, %v3967
        %v3969 = vrot.slane %v2807, %v3968
        %v3970 = vlaneseq
        %v3971 = vshrl.u32 %v3970, 7
        %v3972 = vsub.s32 0, %v3971
        %v3973 = vrot.slane %v2808, %v3972
        %v3974 = vlaneseq
        %v3975 = vshrl.u32 %v3974, 7
        %v3976 = vsub.s32 0, %v3975
        %v3977 = vrot.slane %v2809, %v3976
        %v3978 = vlaneseq
        %v3979 = vshrl.u32 %v3978, 7
        %v3980 = vsub.s32 0, %v3979
        %v3981 = vrot.slane %v2810, %v3980
        %v3982 = vlaneseq
        %v3983 = vshrl.u32 %v3982, 7
        %v3984 = vsub.s32 0, %v3983
        %v3985 = vrot.slane %v2811, %v3984
        %v3986 = vlaneseq
        %v3987 = vshrl.u32 %v3986, 7
        %v3988 = vsub.s32 0, %v3987
        %v3989 = vrot.slane %v2812, %v3988
        %v3990 = vlaneseq
        %v3991 = vshrl.u32 %v3990, 7
        %v3992 = vsub.s32 0, %v3991
        %v3993 = vrot.slane %v2813, %v3992
        %v3994 = vlaneseq
        %v3995 = vshrl.u32 %v3994, 7
        %v3996 = vsub.s32 0, %v3995
        %v3997 = vrot.slane %v2814, %v3996
        %v3998 = vlaneseq
        %v3999 = vshrl.u32 %v3998, 7
        %v4000 = vsub.s32 0, %v3999
        %v4001 = vrot.slane %v2815, %v4000
        %v4002 = vlaneseq
        %v4003 = vshrl.u32 %v4002, 7
        %v4004 = vsub.s32 0, %v4003
        %v4005 = vrot.slane %v2816, %v4004
        %v4006 = vlaneseq
        %v4007 = vshrl.u32 %v4006, 7
        %v4008 = vsub.s32 0, %v4007
        %v4009 = vrot.slane %v2817, %v4008
        %v4010 = vlaneseq
        %v4011 = vshrl.u32 %v4010, 7
        %v4012 = vsub.s32 0, %v4011
        %v4013 = vrot.slane %v2818, %v4012
        %v4014 = vlaneseq
        %v4015 = vshrl.u32 %v4014, 7
        %v4016 = vsub.s32 0, %v4015
        %v4017 = vrot.slane %v2819, %v4016
        %v4018 = vlaneseq
        %v4019 = vshrl.u32 %v4018, 7
        %v4020 = vsub.s32 0, %v4019
        %v4021 = vrot.slane %v2820, %v4020
        %v4022 = vlaneseq
        %v4023 = vshrl.u32 %v4022, 7
        %v4024 = vsub.s32 0, %v4023
        %v4025 = vrot.slane %v2821, %v4024
        %v4026 = vlaneseq
        %v4027 = vshrl.u32 %v4026, 7
        %v4028 = vsub.s32 0, %v4027
        %v4029 = vrot.slane %v2822, %v4028
        %v4030 = vlaneseq
        %v4031 = vshrl.u32 %v4030, 7
        %v4032 = vsub.s32 0, %v4031
        %v4033 = vrot.slane %v2823, %v4032
        %v4034 = vlaneseq
        %v4035 = vshrl.u32 %v4034, 7
        %v4036 = vsub.s32 0, %v4035
        %v4037 = vrot.slane %v2824, %v4036
        %v4038 = vlaneseq
        %v4039 = vshrl.u32 %v4038, 7
        %v4040 = vsub.s32 0, %v4039
        %v4041 = vrot.slane %v2825, %v4040
        %v4042 = vlaneseq
        %v4043 = vshrl.u32 %v4042, 7
        %v4044 = vsub.s32 0, %v4043
        %v4045 = vrot.slane %v2826, %v4044
        %v4046 = vlaneseq
        %v4047 = vshrl.u32 %v4046, 7
        %v4048 = vsub.s32 0, %v4047
        %v4049 = vrot.slane %v2827, %v4048
        %v4050 = vlaneseq
        %v4051 = vshrl.u32 %v4050, 7
        %v4052 = vsub.s32 0, %v4051
        %v4053 = vrot.slane %v2828, %v4052
        %v4054 = vlaneseq
        %v4055 = vshrl.u32 %v4054, 7
        %v4056 = vsub.s32 0, %v4055
        %v4057 = vrot.slane %v2829, %v4056
        %v4058 = vlaneseq
        %v4059 = vshrl.u32 %v4058, 7
        %v4060 = vsub.s32 0, %v4059
        %v4061 = vrot.slane %v2830, %v4060
        %v4062 = vlaneseq
        %v4063 = vshrl.u32 %v4062, 7
        %v4064 = vsub.s32 0, %v4063
        %v4065 = vrot.slane %v2831, %v4064
        %v4066 = vlaneseq
        %v4067 = vshrl.u32 %v4066, 7
        %v4068 = vsub.s32 0, %v4067
        %v4069 = vrot.slane %v2832, %v4068
        %v4070 = vlaneseq
        %v4071 = vshrl.u32 %v4070, 7
        %v4072 = vsub.s32 0, %v4071
        %v4073 = vrot.slane %v2833, %v4072
        %v4074 = vlaneseq
        %v4075 = vshrl.u32 %v4074, 7
        %v4076 = vsub.s32 0, %v4075
        %v4077 = vrot.slane %v2834, %v4076
        %v4078 = vlaneseq
        %v4079 = vshrl.u32 %v4078, 7
        %v4080 = vsub.s32 0, %v4079
        %v4081 = vrot.slane %v2835, %v4080
        %v4082 = vlaneseq
        %v4083 = vshrl.u32 %v4082, 7
        %v4084 = vsub.s32 0, %v4083
        %v4085 = vrot.slane %v2836, %v4084
        %v4086 = vlaneseq
        %v4087 = vshrl.u32 %v4086, 7
        %v4088 = vsub.s32 0, %v4087
        %v4089 = vrot.slane %v2837, %v4088
        %v4090 = vlaneseq
        %v4091 = vshrl.u32 %v4090, 7
        %v4092 = vsub.s32 0, %v4091
        %v4093 = vrot.slane %v2838, %v4092
        %v4094 = vlaneseq
        %v4095 = vshrl.u32 %v4094, 7
        %v4096 = vsub.s32 0, %v4095
        %v4097 = vrot.slane %v2839, %v4096
        %v4098 = vlaneseq
        %v4099 = vshrl.u32 %v4098, 7
        %v4100 = vsub.s32 0, %v4099
        %v4101 = vrot.slane %v2840, %v4100
        %v4102 = vlaneseq
        %v4103 = vshrl.u32 %v4102, 7
        %v4104 = vsub.s32 0, %v4103
        %v4105 = vrot.slane %v2841, %v4104
        %v4106 = vlaneseq
        %v4107 = vshrl.u32 %v4106, 7
        %v4108 = vsub.s32 0, %v4107
        %v4109 = vrot.slane %v2842, %v4108
        %v4110 = vlaneseq
        %v4111 = vshrl.u32 %v4110, 7
        %v4112 = vsub.s32 0, %v4111
        %v4113 = vrot.slane %v2843, %v4112
        %v4114 = vlaneseq
        %v4115 = vshrl.u32 %v4114, 7
        %v4116 = vsub.s32 0, %v4115
        %v4117 = vrot.slane %v2844, %v4116
        %v4118 = vlaneseq
        %v4119 = vshrl.u32 %v4118, 7
        %v4120 = vsub.s32 0, %v4119
        %v4121 = vrot.slane %v2845, %v4120
        %v4122 = vlaneseq
        %v4123 = vshrl.u32 %v4122, 7
        %v4124 = vsub.s32 0, %v4123
        %v4125 = vrot.slane %v2846, %v4124
        %v4126 = vlaneseq
        %v4127 = vshrl.u32 %v4126, 7
        %v4128 = vsub.s32 0, %v4127
        %v4129 = vrot.slane %v2847, %v4128
        %vm4130 = vcmask 1041409
        %v4131 = vsel %vm4130, %v3113, %v3109
        %vm4132 = vcmask 1042434
        %v4133 = vsel %vm4132, %v3117, %v4131
        %vm4134 = vcmask 1043459
        %v4135 = vsel %vm4134, %v3121, %v4133
        %vm4136 = vcmask 1044484
        %v4137 = vsel %vm4136, %v3125, %v4135
        %vm4138 = vcmask 1045509
        %v4139 = vsel %vm4138, %v3129, %v4137
        %vm4140 = vcmask 1046534
        %v4141 = vsel %vm4140, %v3133, %v4139
        %vm4142 = vcmask 1047559
        %v4143 = vsel %vm4142, %v3137, %v4141
        %v4144 = vsel %vm4130, %v3145, %v3141
        %v4145 = vsel %vm4132, %v3149, %v4144
        %v4146 = vsel %vm4134, %v3153, %v4145
        %v4147 = vsel %vm4136, %v3157, %v4146
        %v4148 = vsel %vm4138, %v3161, %v4147
        %v4149 = vsel %vm4140, %v3165, %v4148
        %v4150 = vsel %vm4142, %v3169, %v4149
        %v4151 = vsel %vm4130, %v3177, %v3173
        %v4152 = vsel %vm4132, %v3181, %v4151
        %v4153 = vsel %vm4134, %v3185, %v4152
        %v4154 = vsel %vm4136, %v3189, %v4153
        %v4155 = vsel %vm4138, %v3193, %v4154
        %v4156 = vsel %vm4140, %v3197, %v4155
        %v4157 = vsel %vm4142, %v3201, %v4156
        %v4158 = vsel %vm4130, %v3209, %v3205
        %v4159 = vsel %vm4132, %v3213, %v4158
        %v4160 = vsel %vm4134, %v3217, %v4159
        %v4161 = vsel %vm4136, %v3221, %v4160
        %v4162 = vsel %vm4138, %v3225, %v4161
        %v4163 = vsel %vm4140, %v3229, %v4162
        %v4164 = vsel %vm4142, %v3233, %v4163
        %v4165 = vsel %vm4130, %v3241, %v3237
        %v4166 = vsel %vm4132, %v3245, %v4165
        %v4167 = vsel %vm4134, %v3249, %v4166
        %v4168 = vsel %vm4136, %v3253, %v4167
        %v4169 = vsel %vm4138, %v3257, %v4168
        %v4170 = vsel %vm4140, %v3261, %v4169
        %v4171 = vsel %vm4142, %v3265, %v4170
        %v4172 = vsel %vm4130, %v3273, %v3269
        %v4173 = vsel %vm4132, %v3277, %v4172
        %v4174 = vsel %vm4134, %v3281, %v4173
        %v4175 = vsel %vm4136, %v3285, %v4174
        %v4176 = vsel %vm4138, %v3289, %v4175
        %v4177 = vsel %vm4140, %v3293, %v4176
        %v4178 = vsel %vm4142, %v3297, %v4177
        %v4179 = vsel %vm4130, %v3305, %v3301
        %v4180 = vsel %vm4132, %v3309, %v4179
        %v4181 = vsel %vm4134, %v3313, %v4180
        %v4182 = vsel %vm4136, %v3317, %v4181
        %v4183 = vsel %vm4138, %v3321, %v4182
        %v4184 = vsel %vm4140, %v3325, %v4183
        %v4185 = vsel %vm4142, %v3329, %v4184
        %v4186 = vsel %vm4130, %v3337, %v3333
        %v4187 = vsel %vm4132, %v3341, %v4186
        %v4188 = vsel %vm4134, %v3345, %v4187
        %v4189 = vsel %vm4136, %v3349, %v4188
        %v4190 = vsel %vm4138, %v3353, %v4189
        %v4191 = vsel %vm4140, %v3357, %v4190
        %v4192 = vsel %vm4142, %v3361, %v4191
        %v4193 = vsel %vm4130, %v3369, %v3365
        %v4194 = vsel %vm4132, %v3373, %v4193
        %v4195 = vsel %vm4134, %v3377, %v4194
        %v4196 = vsel %vm4136, %v3381, %v4195
        %v4197 = vsel %vm4138, %v3385, %v4196
        %v4198 = vsel %vm4140, %v3389, %v4197
        %v4199 = vsel %vm4142, %v3393, %v4198
        %v4200 = vsel %vm4130, %v3401, %v3397
        %v4201 = vsel %vm4132, %v3405, %v4200
        %v4202 = vsel %vm4134, %v3409, %v4201
        %v4203 = vsel %vm4136, %v3413, %v4202
        %v4204 = vsel %vm4138, %v3417, %v4203
        %v4205 = vsel %vm4140, %v3421, %v4204
        %v4206 = vsel %vm4142, %v3425, %v4205
        %v4207 = vsel %vm4130, %v3433, %v3429
        %v4208 = vsel %vm4132, %v3437, %v4207
        %v4209 = vsel %vm4134, %v3441, %v4208
        %v4210 = vsel %vm4136, %v3445, %v4209
        %v4211 = vsel %vm4138, %v3449, %v4210
        %v4212 = vsel %vm4140, %v3453, %v4211
        %v4213 = vsel %vm4142, %v3457, %v4212
        %v4214 = vsel %vm4130, %v3465, %v3461
        %v4215 = vsel %vm4132, %v3469, %v4214
        %v4216 = vsel %vm4134, %v3473, %v4215
        %v4217 = vsel %vm4136, %v3477, %v4216
        %v4218 = vsel %vm4138, %v3481, %v4217
        %v4219 = vsel %vm4140, %v3485, %v4218
        %v4220 = vsel %vm4142, %v3489, %v4219
        %v4221 = vsel %vm4130, %v3497, %v3493
        %v4222 = vsel %vm4132, %v3501, %v4221
        %v4223 = vsel %vm4134, %v3505, %v4222
        %v4224 = vsel %vm4136, %v3509, %v4223
        %v4225 = vsel %vm4138, %v3513, %v4224
        %v4226 = vsel %vm4140, %v3517, %v4225
        %v4227 = vsel %vm4142, %v3521, %v4226
        %v4228 = vsel %vm4130, %v3529, %v3525
        %v4229 = vsel %vm4132, %v3533, %v4228
        %v4230 = vsel %vm4134, %v3537, %v4229
        %v4231 = vsel %vm4136, %v3541, %v4230
        %v4232 = vsel %vm4138, %v3545, %v4231
        %v4233 = vsel %vm4140, %v3549, %v4232
        %v4234 = vsel %vm4142, %v3553, %v4233
        %v4235 = vsel %vm4130, %v3561, %v3557
        %v4236 = vsel %vm4132, %v3565, %v4235
        %v4237 = vsel %vm4134, %v3569, %v4236
        %v4238 = vsel %vm4136, %v3573, %v4237
        %v4239 = vsel %vm4138, %v3577, %v4238
        %v4240 = vsel %vm4140, %v3581, %v4239
        %v4241 = vsel %vm4142, %v3585, %v4240
        %v4242 = vsel %vm4130, %v3593, %v3589
        %v4243 = vsel %vm4132, %v3597, %v4242
        %v4244 = vsel %vm4134, %v3601, %v4243
        %v4245 = vsel %vm4136, %v3605, %v4244
        %v4246 = vsel %vm4138, %v3609, %v4245
        %v4247 = vsel %vm4140, %v3613, %v4246
        %v4248 = vsel %vm4142, %v3617, %v4247
        %v4249 = vsel %vm4130, %v3625, %v3621
        %v4250 = vsel %vm4132, %v3629, %v4249
        %v4251 = vsel %vm4134, %v3633, %v4250
        %v4252 = vsel %vm4136, %v3637, %v4251
        %v4253 = vsel %vm4138, %v3641, %v4252
        %v4254 = vsel %vm4140, %v3645, %v4253
        %v4255 = vsel %vm4142, %v3649, %v4254
        %v4256 = vsel %vm4130, %v3657, %v3653
        %v4257 = vsel %vm4132, %v3661, %v4256
        %v4258 = vsel %vm4134, %v3665, %v4257
        %v4259 = vsel %vm4136, %v3669, %v4258
        %v4260 = vsel %vm4138, %v3673, %v4259
        %v4261 = vsel %vm4140, %v3677, %v4260
        %v4262 = vsel %vm4142, %v3681, %v4261
        %v4263 = vsel %vm4130, %v3689, %v3685
        %v4264 = vsel %vm4132, %v3693, %v4263
        %v4265 = vsel %vm4134, %v3697, %v4264
        %v4266 = vsel %vm4136, %v3701, %v4265
        %v4267 = vsel %vm4138, %v3705, %v4266
        %v4268 = vsel %vm4140, %v3709, %v4267
        %v4269 = vsel %vm4142, %v3713, %v4268
        %v4270 = vsel %vm4130, %v3721, %v3717
        %v4271 = vsel %vm4132, %v3725, %v4270
        %v4272 = vsel %vm4134, %v3729, %v4271
        %v4273 = vsel %vm4136, %v3733, %v4272
        %v4274 = vsel %vm4138, %v3737, %v4273
        %v4275 = vsel %vm4140, %v3741, %v4274
        %v4276 = vsel %vm4142, %v3745, %v4275
        %v4277 = vsel %vm4130, %v3753, %v3749
        %v4278 = vsel %vm4132, %v3757, %v4277
        %v4279 = vsel %vm4134, %v3761, %v4278
        %v4280 = vsel %vm4136, %v3765, %v4279
        %v4281 = vsel %vm4138, %v3769, %v4280
        %v4282 = vsel %vm4140, %v3773, %v4281
        %v4283 = vsel %vm4142, %v3777, %v4282
        %v4284 = vsel %vm4130, %v3785, %v3781
        %v4285 = vsel %vm4132, %v3789, %v4284
        %v4286 = vsel %vm4134, %v3793, %v4285
        %v4287 = vsel %vm4136, %v3797, %v4286
        %v4288 = vsel %vm4138, %v3801, %v4287
        %v4289 = vsel %vm4140, %v3805, %v4288
        %v4290 = vsel %vm4142, %v3809, %v4289
        %v4291 = vsel %vm4130, %v3817, %v3813
        %v4292 = vsel %vm4132, %v3821, %v4291
        %v4293 = vsel %vm4134, %v3825, %v4292
        %v4294 = vsel %vm4136, %v3829, %v4293
        %v4295 = vsel %vm4138, %v3833, %v4294
        %v4296 = vsel %vm4140, %v3837, %v4295
        %v4297 = vsel %vm4142, %v3841, %v4296
        %v4298 = vsel %vm4130, %v3849, %v3845
        %v4299 = vsel %vm4132, %v3853, %v4298
        %v4300 = vsel %vm4134, %v3857, %v4299
        %v4301 = vsel %vm4136, %v3861, %v4300
        %v4302 = vsel %vm4138, %v3865, %v4301
        %v4303 = vsel %vm4140, %v3869, %v4302
        %v4304 = vsel %vm4142, %v3873, %v4303
        %v4305 = vsel %vm4130, %v3881, %v3877
        %v4306 = vsel %vm4132, %v3885, %v4305
        %v4307 = vsel %vm4134, %v3889, %v4306
        %v4308 = vsel %vm4136, %v3893, %v4307
        %v4309 = vsel %vm4138, %v3897, %v4308
        %v4310 = vsel %vm4140, %v3901, %v4309
        %v4311 = vsel %vm4142, %v3905, %v4310
        %v4312 = vsel %vm4130, %v3913, %v3909
        %v4313 = vsel %vm4132, %v3917, %v4312
        %v4314 = vsel %vm4134, %v3921, %v4313
        %v4315 = vsel %vm4136, %v3925, %v4314
        %v4316 = vsel %vm4138, %v3929, %v4315
        %v4317 = vsel %vm4140, %v3933, %v4316
        %v4318 = vsel %vm4142, %v3937, %v4317
        %v4319 = vsel %vm4130, %v3945, %v3941
        %v4320 = vsel %vm4132, %v3949, %v4319
        %v4321 = vsel %vm4134, %v3953, %v4320
        %v4322 = vsel %vm4136, %v3957, %v4321
        %v4323 = vsel %vm4138, %v3961, %v4322
        %v4324 = vsel %vm4140, %v3965, %v4323
        %v4325 = vsel %vm4142, %v3969, %v4324
        %v4326 = vsel %vm4130, %v3977, %v3973
        %v4327 = vsel %vm4132, %v3981, %v4326
        %v4328 = vsel %vm4134, %v3985, %v4327
        %v4329 = vsel %vm4136, %v3989, %v4328
        %v4330 = vsel %vm4138, %v3993, %v4329
        %v4331 = vsel %vm4140, %v3997, %v4330
        %v4332 = vsel %vm4142, %v4001, %v4331
        %v4333 = vsel %vm4130, %v4009, %v4005
        %v4334 = vsel %vm4132, %v4013, %v4333
        %v4335 = vsel %vm4134, %v4017, %v4334
        %v4336 = vsel %vm4136, %v4021, %v4335
        %v4337 = vsel %vm4138, %v4025, %v4336
        %v4338 = vsel %vm4140, %v4029, %v4337
        %v4339 = vsel %vm4142, %v4033, %v4338
        %v4340 = vsel %vm4130, %v4041, %v4037
        %v4341 = vsel %vm4132, %v4045, %v4340
        %v4342 = vsel %vm4134, %v4049, %v4341
        %v4343 = vsel %vm4136, %v4053, %v4342
        %v4344 = vsel %vm4138, %v4057, %v4343
        %v4345 = vsel %vm4140, %v4061, %v4344
        %v4346 = vsel %vm4142, %v4065, %v4345
        %v4347 = vsel %vm4130, %v4073, %v4069
        %v4348 = vsel %vm4132, %v4077, %v4347
        %v4349 = vsel %vm4134, %v4081, %v4348
        %v4350 = vsel %vm4136, %v4085, %v4349
        %v4351 = vsel %vm4138, %v4089, %v4350
        %v4352 = vsel %vm4140, %v4093, %v4351
        %v4353 = vsel %vm4142, %v4097, %v4352
        %v4354 = vsel %vm4130, %v4105, %v4101
        %v4355 = vsel %vm4132, %v4109, %v4354
        %v4356 = vsel %vm4134, %v4113, %v4355
        %v4357 = vsel %vm4136, %v4117, %v4356
        %v4358 = vsel %vm4138, %v4121, %v4357
        %v4359 = vsel %vm4140, %v4125, %v4358
        %v4360 = vsel %vm4142, %v4129, %v4359
        %vm4361 = vcmask 130048
        %v4362 = vsel %vm4361, %v4143, 0
        %v4364 = vsel %vm4361, %v4150, 0
        %v4366 = vsel %vm4361, %v4157, 0
        %v4368 = vsel %vm4361, %v4164, 0
        %v4370 = vsel %vm4361, %v4171, 0
        %v4372 = vsel %vm4361, %v4178, 0
        %v4374 = vsel %vm4361, %v4185, 0
        %v4376 = vsel %vm4361, %v4192, 0
        %v4378 = vsel %vm4361, %v4199, 0
        %v4380 = vsel %vm4361, %v4206, 0
        %v4382 = vsel %vm4361, %v4213, 0
        %v4384 = vsel %vm4361, %v4220, 0
        %v4386 = vsel %vm4361, %v4227, 0
        %v4388 = vsel %vm4361, %v4234, 0
        %v4390 = vsel %vm4361, %v4241, 0
        %v4392 = vsel %vm4361, %v4248, 0
        %v4394 = vsel %vm4361, %v4255, 0
        %v4396 = vsel %vm4361, %v4262, 0
        %v4398 = vsel %vm4361, %v4269, 0
        %v4400 = vsel %vm4361, %v4276, 0
        %v4402 = vsel %vm4361, %v4283, 0
        %v4404 = vsel %vm4361, %v4290, 0
        %v4406 = vsel %vm4361, %v4297, 0
        %v4408 = vsel %vm4361, %v4304, 0
        %v4410 = vsel %vm4361, %v4311, 0
        %v4412 = vsel %vm4361, %v4318, 0
        %v4414 = vsel %vm4361, %v4325, 0
        %v4416 = vsel %vm4361, %v4332, 0
        %v4418 = vsel %vm4361, %v4339, 0
        %v4420 = vsel %vm4361, %v4346, 0
        %v4422 = vsel %vm4361, %v4353, 0
        %v4424 = vsel %vm4361, %v4360, 0
        %4426 = vmatprep.subr.mxu0 0.0
        %4427 = vmatpush1.msra.mxu0 0.0
        %4428 = vmatprep.subr.mxu0 0.0
        %4429 = vmatpush1.msra.mxu0 0.0
        %4430 = vmatprep.subr.mxu0 0.0
        %4431 = vmatpush1.msra.mxu0 0.0
        %4432 = vmatprep.subr.mxu0 0.0
        %4433 = vmatpush1.msra.mxu0 0.0
        %4434 = vmatprep.subr.mxu0 0.0
        %4435 = vmatpush1.msra.mxu0 0.0
        %4436 = vmatprep.subr.mxu0 0.0
        %4437 = vmatpush1.msra.mxu0 0.0
        %4438 = vmatprep.subr.mxu0 0.0
        %4439 = vmatpush1.msra.mxu0 0.0
        %4440 = vmatprep.subr.mxu0 0.0
        %4441 = vmatpush1.msra.mxu0 0.0
        %4442 = vmatprep.subr.mxu0 0.0
        %4443 = vmatpush1.msra.mxu0 0.0
        %4444 = vmatprep.subr.mxu0 0.0
        %4445 = vmatpush1.msra.mxu0 0.0
        %4446 = vmatprep.subr.mxu0 0.0
        %4447 = vmatpush1.msra.mxu0 0.0
        %4448 = vmatprep.subr.mxu0 0.0
        %4449 = vmatpush1.msra.mxu0 0.0
        %4450 = vmatprep.subr.mxu0 0.0
        %4451 = vmatpush1.msra.mxu0 0.0
        %4452 = vmatprep.subr.mxu0 0.0
        %4453 = vmatpush1.msra.mxu0 0.0
        %4454 = vmatprep.subr.mxu0 0.0
        %4455 = vmatpush1.msra.mxu0 %v2849
        %4456 = vmatprep.subr.mxu0 0.0
        %4457 = vmatpush1.msra.mxu0 %v2848
        %4458 = vmatprep.subr.mxu0 0.0
        %4459 = vmatpush2.msra.mxu0 0.0
        %4460 = vmatprep.subr.mxu0 0.0
        %4461 = vmatpush2.msra.mxu0 0.0
        %4462 = vmatprep.subr.mxu0 0.0
        %4463 = vmatpush2.msra.mxu0 0.0
        %4464 = vmatprep.subr.mxu0 0.0
        %4465 = vmatpush2.msra.mxu0 0.0
        %4466 = vmatprep.subr.mxu0 0.0
        %4467 = vmatpush2.msra.mxu0 0.0
        %4468 = vmatprep.subr.mxu0 0.0
        %4469 = vmatpush2.msra.mxu0 0.0
        %4470 = vmatprep.subr.mxu0 0.0
        %4471 = vmatpush2.msra.mxu0 0.0
        %4472 = vmatprep.subr.mxu0 0.0
        %4473 = vmatpush2.msra.mxu0 0.0
        %4474 = vmatprep.subr.mxu0 0.0
        %4475 = vmatpush2.msra.mxu0 0.0
        %4476 = vmatprep.subr.mxu0 0.0
        %4477 = vmatpush2.msra.mxu0 0.0
        %4478 = vmatprep.subr.mxu0 0.0
        %4479 = vmatpush2.msra.mxu0 0.0
        %4480 = vmatprep.subr.mxu0 0.0
        %4481 = vmatpush2.msra.mxu0 0.0
        %4482 = vmatprep.subr.mxu0 0.0
        %4483 = vmatpush2.msra.mxu0 0.0
        %4484 = vmatprep.subr.mxu0 0.0
        %4485 = vmatpush2.msra.mxu0 0.0
        %4486 = vmatprep.subr.mxu0 0.0
        %4487 = vmatpush2.msra.mxu0 0.0
        %4488 = vmatprep.subr.mxu0 0.0
        %4489 = vmatpush2.msra.mxu0 0.0
        %4490 = vmatprep.mubr.f32.mxu0 0.0
        %4491 = vmatmul.mubr.f32.gmra.mxu0 %v4362
        %v4492 = vpop.f32.mrf.mxu0
        %v4493 = vadd.f32 0.0, %v4492
        %v4494 = vpop.f32.mrf.mxu0
        %4495 = vmatprep.mubr.f32.mxu0 0.0
        %4496 = vmatmul.mubr.f32.gmra.mxu0 %v4364
        %v4497 = vpop.f32.mrf.mxu0
        %v4498 = vadd.f32 0.0, %v4497
        %v4499 = vpop.f32.mrf.mxu0
        %4500 = vmatprep.mubr.f32.mxu0 0.0
        %4501 = vmatmul.mubr.f32.gmra.mxu0 %v4366
        %v4502 = vpop.f32.mrf.mxu0
        %v4503 = vadd.f32 0.0, %v4502
        %v4504 = vpop.f32.mrf.mxu0
        %4505 = vmatprep.mubr.f32.mxu0 0.0
        %4506 = vmatmul.mubr.f32.gmra.mxu0 %v4368
        %v4507 = vpop.f32.mrf.mxu0
        %v4508 = vadd.f32 0.0, %v4507
        %v4509 = vpop.f32.mrf.mxu0
        %4510 = vmatprep.mubr.f32.mxu0 0.0
        %4511 = vmatmul.mubr.f32.gmra.mxu0 %v4370
        %v4512 = vpop.f32.mrf.mxu0
        %v4513 = vadd.f32 0.0, %v4512
        %v4514 = vpop.f32.mrf.mxu0
        %4515 = vmatprep.mubr.f32.mxu0 0.0
        %4516 = vmatmul.mubr.f32.gmra.mxu0 %v4372
        %v4517 = vpop.f32.mrf.mxu0
        %v4518 = vadd.f32 0.0, %v4517
        %v4519 = vpop.f32.mrf.mxu0
        %4520 = vmatprep.mubr.f32.mxu0 0.0
        %4521 = vmatmul.mubr.f32.gmra.mxu0 %v4374
        %v4522 = vpop.f32.mrf.mxu0
        %v4523 = vadd.f32 0.0, %v4522
        %v4524 = vpop.f32.mrf.mxu0
        %4525 = vmatprep.mubr.f32.mxu0 0.0
        %4526 = vmatmul.mubr.f32.gmra.mxu0 %v4376
        %v4527 = vpop.f32.mrf.mxu0
        %v4528 = vadd.f32 0.0, %v4527
        %v4529 = vpop.f32.mrf.mxu0
        %4530 = vmatprep.mubr.f32.mxu0 0.0
        %4531 = vmatmul.mubr.f32.gmra.mxu0 %v4378
        %v4532 = vpop.f32.mrf.mxu0
        %v4533 = vadd.f32 0.0, %v4532
        %v4534 = vpop.f32.mrf.mxu0
        %4535 = vmatprep.mubr.f32.mxu0 0.0
        %4536 = vmatmul.mubr.f32.gmra.mxu0 %v4380
        %v4537 = vpop.f32.mrf.mxu0
        %v4538 = vadd.f32 0.0, %v4537
        %v4539 = vpop.f32.mrf.mxu0
        %4540 = vmatprep.mubr.f32.mxu0 0.0
        %4541 = vmatmul.mubr.f32.gmra.mxu0 %v4382
        %v4542 = vpop.f32.mrf.mxu0
        %v4543 = vadd.f32 0.0, %v4542
        %v4544 = vpop.f32.mrf.mxu0
        %4545 = vmatprep.mubr.f32.mxu0 0.0
        %4546 = vmatmul.mubr.f32.gmra.mxu0 %v4384
        %v4547 = vpop.f32.mrf.mxu0
        %v4548 = vadd.f32 0.0, %v4547
        %v4549 = vpop.f32.mrf.mxu0
        %4550 = vmatprep.mubr.f32.mxu0 0.0
        %4551 = vmatmul.mubr.f32.gmra.mxu0 %v4386
        %v4552 = vpop.f32.mrf.mxu0
        %v4553 = vadd.f32 0.0, %v4552
        %v4554 = vpop.f32.mrf.mxu0
        %4555 = vmatprep.mubr.f32.mxu0 0.0
        %4556 = vmatmul.mubr.f32.gmra.mxu0 %v4388
        %v4557 = vpop.f32.mrf.mxu0
        %v4558 = vadd.f32 0.0, %v4557
        %v4559 = vpop.f32.mrf.mxu0
        %4560 = vmatprep.mubr.f32.mxu0 0.0
        %4561 = vmatmul.mubr.f32.gmra.mxu0 %v4390
        %v4562 = vpop.f32.mrf.mxu0
        %v4563 = vadd.f32 0.0, %v4562
        %v4564 = vpop.f32.mrf.mxu0
        %4565 = vmatprep.mubr.f32.mxu0 0.0
        %4566 = vmatmul.mubr.f32.gmra.mxu0 %v4392
        %v4567 = vpop.f32.mrf.mxu0
        %v4568 = vadd.f32 0.0, %v4567
        %v4569 = vpop.f32.mrf.mxu0
        %4570 = vmatprep.mubr.f32.mxu0 0.0
        %4571 = vmatmul.mubr.f32.gmra.mxu0 %v4394
        %v4572 = vpop.f32.mrf.mxu0
        %v4573 = vadd.f32 0.0, %v4572
        %v4574 = vpop.f32.mrf.mxu0
        %4575 = vmatprep.mubr.f32.mxu0 0.0
        %4576 = vmatmul.mubr.f32.gmra.mxu0 %v4396
        %v4577 = vpop.f32.mrf.mxu0
        %v4578 = vadd.f32 0.0, %v4577
        %v4579 = vpop.f32.mrf.mxu0
        %4580 = vmatprep.mubr.f32.mxu0 0.0
        %4581 = vmatmul.mubr.f32.gmra.mxu0 %v4398
        %v4582 = vpop.f32.mrf.mxu0
        %v4583 = vadd.f32 0.0, %v4582
        %v4584 = vpop.f32.mrf.mxu0
        %4585 = vmatprep.mubr.f32.mxu0 0.0
        %4586 = vmatmul.mubr.f32.gmra.mxu0 %v4400
        %v4587 = vpop.f32.mrf.mxu0
        %v4588 = vadd.f32 0.0, %v4587
        %v4589 = vpop.f32.mrf.mxu0
        %4590 = vmatprep.mubr.f32.mxu0 0.0
        %4591 = vmatmul.mubr.f32.gmra.mxu0 %v4402
        %v4592 = vpop.f32.mrf.mxu0
        %v4593 = vadd.f32 0.0, %v4592
        %v4594 = vpop.f32.mrf.mxu0
        %4595 = vmatprep.mubr.f32.mxu0 0.0
        %4596 = vmatmul.mubr.f32.gmra.mxu0 %v4404
        %v4597 = vpop.f32.mrf.mxu0
        %v4598 = vadd.f32 0.0, %v4597
        %v4599 = vpop.f32.mrf.mxu0
        %4600 = vmatprep.mubr.f32.mxu0 0.0
        %4601 = vmatmul.mubr.f32.gmra.mxu0 %v4406
        %v4602 = vpop.f32.mrf.mxu0
        %v4603 = vadd.f32 0.0, %v4602
        %v4604 = vpop.f32.mrf.mxu0
        %4605 = vmatprep.mubr.f32.mxu0 0.0
        %4606 = vmatmul.mubr.f32.gmra.mxu0 %v4408
        %v4607 = vpop.f32.mrf.mxu0
        %v4608 = vadd.f32 0.0, %v4607
        %v4609 = vpop.f32.mrf.mxu0
        %4610 = vmatprep.mubr.f32.mxu0 0.0
        %4611 = vmatmul.mubr.f32.gmra.mxu0 %v4410
        %v4612 = vpop.f32.mrf.mxu0
        %v4613 = vadd.f32 0.0, %v4612
        %v4614 = vpop.f32.mrf.mxu0
        %4615 = vmatprep.mubr.f32.mxu0 0.0
        %4616 = vmatmul.mubr.f32.gmra.mxu0 %v4412
        %v4617 = vpop.f32.mrf.mxu0
        %v4618 = vadd.f32 0.0, %v4617
        %v4619 = vpop.f32.mrf.mxu0
        %4620 = vmatprep.mubr.f32.mxu0 0.0
        %4621 = vmatmul.mubr.f32.gmra.mxu0 %v4414
        %v4622 = vpop.f32.mrf.mxu0
        %v4623 = vadd.f32 0.0, %v4622
        %v4624 = vpop.f32.mrf.mxu0
        %4625 = vmatprep.mubr.f32.mxu0 0.0
        %4626 = vmatmul.mubr.f32.gmra.mxu0 %v4416
        %v4627 = vpop.f32.mrf.mxu0
        %v4628 = vadd.f32 0.0, %v4627
        %v4629 = vpop.f32.mrf.mxu0
        %4630 = vmatprep.mubr.f32.mxu0 0.0
        %4631 = vmatmul.mubr.f32.gmra.mxu0 %v4418
        %v4632 = vpop.f32.mrf.mxu0
        %v4633 = vadd.f32 0.0, %v4632
        %v4634 = vpop.f32.mrf.mxu0
        %4635 = vmatprep.mubr.f32.mxu0 0.0
        %4636 = vmatmul.mubr.f32.gmra.mxu0 %v4420
        %v4637 = vpop.f32.mrf.mxu0
        %v4638 = vadd.f32 0.0, %v4637
        %v4639 = vpop.f32.mrf.mxu0
        %4640 = vmatprep.mubr.f32.mxu0 0.0
        %4641 = vmatmul.mubr.f32.gmra.mxu0 %v4422
        %v4642 = vpop.f32.mrf.mxu0
        %v4643 = vadd.f32 0.0, %v4642
        %v4644 = vpop.f32.mrf.mxu0
        %4645 = vmatprep.mubr.f32.mxu0 0.0
        %4646 = vmatmul.mubr.f32.gmra.mxu0 %v4424
        %v4647 = vpop.f32.mrf.mxu0
        %v4648 = vadd.f32 0.0, %v4647
        %v4649 = vpop.f32.mrf.mxu0
        %4650 = vdwg.mxu0
        %s4651 = scalar_lea.vmem %s1, 16
        %v4652 = vld [vmem:[%s4651] sm:$0xff]
        %v4653 = vld [vmem:[%s4651 + $0x8] sm:$0xff]
        %4654 = vmatprep.subr.mxu0 0.0
        %4655 = vmatpush1.msra.mxu0 0.0
        %4656 = vmatprep.subr.mxu0 0.0
        %4657 = vmatpush1.msra.mxu0 0.0
        %4658 = vmatprep.subr.mxu0 0.0
        %4659 = vmatpush1.msra.mxu0 0.0
        %4660 = vmatprep.subr.mxu0 0.0
        %4661 = vmatpush1.msra.mxu0 0.0
        %4662 = vmatprep.subr.mxu0 0.0
        %4663 = vmatpush1.msra.mxu0 0.0
        %4664 = vmatprep.subr.mxu0 0.0
        %4665 = vmatpush1.msra.mxu0 0.0
        %4666 = vmatprep.subr.mxu0 0.0
        %4667 = vmatpush1.msra.mxu0 0.0
        %4668 = vmatprep.subr.mxu0 0.0
        %4669 = vmatpush1.msra.mxu0 0.0
        %4670 = vmatprep.subr.mxu0 0.0
        %4671 = vmatpush1.msra.mxu0 0.0
        %4672 = vmatprep.subr.mxu0 0.0
        %4673 = vmatpush1.msra.mxu0 0.0
        %4674 = vmatprep.subr.mxu0 0.0
        %4675 = vmatpush1.msra.mxu0 0.0
        %4676 = vmatprep.subr.mxu0 0.0
        %4677 = vmatpush1.msra.mxu0 0.0
        %4678 = vmatprep.subr.mxu0 0.0
        %4679 = vmatpush1.msra.mxu0 0.0
        %4680 = vmatprep.subr.mxu0 0.0
        %4681 = vmatpush1.msra.mxu0 0.0
        %4682 = vmatprep.subr.mxu0 0.0
        %4683 = vmatpush1.msra.mxu0 %v4653
        %4684 = vmatprep.subr.mxu0 0.0
        %4685 = vmatpush1.msra.mxu0 %v4652
        %4686 = vmatprep.subr.mxu0 0.0
        %4687 = vmatpush2.msra.mxu0 0.0
        %4688 = vmatprep.subr.mxu0 0.0
        %4689 = vmatpush2.msra.mxu0 0.0
        %4690 = vmatprep.subr.mxu0 0.0
        %4691 = vmatpush2.msra.mxu0 0.0
        %4692 = vmatprep.subr.mxu0 0.0
        %4693 = vmatpush2.msra.mxu0 0.0
        %4694 = vmatprep.subr.mxu0 0.0
        %4695 = vmatpush2.msra.mxu0 0.0
        %4696 = vmatprep.subr.mxu0 0.0
        %4697 = vmatpush2.msra.mxu0 0.0
        %4698 = vmatprep.subr.mxu0 0.0
        %4699 = vmatpush2.msra.mxu0 0.0
        %4700 = vmatprep.subr.mxu0 0.0
        %4701 = vmatpush2.msra.mxu0 0.0
        %4702 = vmatprep.subr.mxu0 0.0
        %4703 = vmatpush2.msra.mxu0 0.0
        %4704 = vmatprep.subr.mxu0 0.0
        %4705 = vmatpush2.msra.mxu0 0.0
        %4706 = vmatprep.subr.mxu0 0.0
        %4707 = vmatpush2.msra.mxu0 0.0
        %4708 = vmatprep.subr.mxu0 0.0
        %4709 = vmatpush2.msra.mxu0 0.0
        %4710 = vmatprep.subr.mxu0 0.0
        %4711 = vmatpush2.msra.mxu0 0.0
        %4712 = vmatprep.subr.mxu0 0.0
        %4713 = vmatpush2.msra.mxu0 0.0
        %4714 = vmatprep.subr.mxu0 0.0
        %4715 = vmatpush2.msra.mxu0 0.0
        %4716 = vmatprep.subr.mxu0 0.0
        %4717 = vmatpush2.msra.mxu0 0.0
        %4718 = vmatprep.mubr.f32.mxu0 0.0
        %4719 = vmatmul.mubr.f32.gmra.mxu0 %v4362
        %v4720 = vpop.f32.mrf.mxu0
        %v4721 = vadd.f32 0.0, %v4720
        %v4722 = vpop.f32.mrf.mxu0
        %4723 = vmatprep.mubr.f32.mxu0 0.0
        %4724 = vmatmul.mubr.f32.gmra.mxu0 %v4364
        %v4725 = vpop.f32.mrf.mxu0
        %v4726 = vadd.f32 0.0, %v4725
        %v4727 = vpop.f32.mrf.mxu0
        %4728 = vmatprep.mubr.f32.mxu0 0.0
        %4729 = vmatmul.mubr.f32.gmra.mxu0 %v4366
        %v4730 = vpop.f32.mrf.mxu0
        %v4731 = vadd.f32 0.0, %v4730
        %v4732 = vpop.f32.mrf.mxu0
        %4733 = vmatprep.mubr.f32.mxu0 0.0
        %4734 = vmatmul.mubr.f32.gmra.mxu0 %v4368
        %v4735 = vpop.f32.mrf.mxu0
        %v4736 = vadd.f32 0.0, %v4735
        %v4737 = vpop.f32.mrf.mxu0
        %4738 = vmatprep.mubr.f32.mxu0 0.0
        %4739 = vmatmul.mubr.f32.gmra.mxu0 %v4370
        %v4740 = vpop.f32.mrf.mxu0
        %v4741 = vadd.f32 0.0, %v4740
        %v4742 = vpop.f32.mrf.mxu0
        %4743 = vmatprep.mubr.f32.mxu0 0.0
        %4744 = vmatmul.mubr.f32.gmra.mxu0 %v4372
        %v4745 = vpop.f32.mrf.mxu0
        %v4746 = vadd.f32 0.0, %v4745
        %v4747 = vpop.f32.mrf.mxu0
        %4748 = vmatprep.mubr.f32.mxu0 0.0
        %4749 = vmatmul.mubr.f32.gmra.mxu0 %v4374
        %v4750 = vpop.f32.mrf.mxu0
        %v4751 = vadd.f32 0.0, %v4750
        %v4752 = vpop.f32.mrf.mxu0
        %4753 = vmatprep.mubr.f32.mxu0 0.0
        %4754 = vmatmul.mubr.f32.gmra.mxu0 %v4376
        %v4755 = vpop.f32.mrf.mxu0
        %v4756 = vadd.f32 0.0, %v4755
        %v4757 = vpop.f32.mrf.mxu0
        %4758 = vmatprep.mubr.f32.mxu0 0.0
        %4759 = vmatmul.mubr.f32.gmra.mxu0 %v4378
        %v4760 = vpop.f32.mrf.mxu0
        %v4761 = vadd.f32 0.0, %v4760
        %v4762 = vpop.f32.mrf.mxu0
        %4763 = vmatprep.mubr.f32.mxu0 0.0
        %4764 = vmatmul.mubr.f32.gmra.mxu0 %v4380
        %v4765 = vpop.f32.mrf.mxu0
        %v4766 = vadd.f32 0.0, %v4765
        %v4767 = vpop.f32.mrf.mxu0
        %4768 = vmatprep.mubr.f32.mxu0 0.0
        %4769 = vmatmul.mubr.f32.gmra.mxu0 %v4382
        %v4770 = vpop.f32.mrf.mxu0
        %v4771 = vadd.f32 0.0, %v4770
        %v4772 = vpop.f32.mrf.mxu0
        %4773 = vmatprep.mubr.f32.mxu0 0.0
        %4774 = vmatmul.mubr.f32.gmra.mxu0 %v4384
        %v4775 = vpop.f32.mrf.mxu0
        %v4776 = vadd.f32 0.0, %v4775
        %v4777 = vpop.f32.mrf.mxu0
        %4778 = vmatprep.mubr.f32.mxu0 0.0
        %4779 = vmatmul.mubr.f32.gmra.mxu0 %v4386
        %v4780 = vpop.f32.mrf.mxu0
        %v4781 = vadd.f32 0.0, %v4780
        %v4782 = vpop.f32.mrf.mxu0
        %4783 = vmatprep.mubr.f32.mxu0 0.0
        %4784 = vmatmul.mubr.f32.gmra.mxu0 %v4388
        %v4785 = vpop.f32.mrf.mxu0
        %v4786 = vadd.f32 0.0, %v4785
        %v4787 = vpop.f32.mrf.mxu0
        %4788 = vmatprep.mubr.f32.mxu0 0.0
        %4789 = vmatmul.mubr.f32.gmra.mxu0 %v4390
        %v4790 = vpop.f32.mrf.mxu0
        %v4791 = vadd.f32 0.0, %v4790
        %v4792 = vpop.f32.mrf.mxu0
        %4793 = vmatprep.mubr.f32.mxu0 0.0
        %4794 = vmatmul.mubr.f32.gmra.mxu0 %v4392
        %v4795 = vpop.f32.mrf.mxu0
        %v4796 = vadd.f32 0.0, %v4795
        %v4797 = vpop.f32.mrf.mxu0
        %4798 = vmatprep.mubr.f32.mxu0 0.0
        %4799 = vmatmul.mubr.f32.gmra.mxu0 %v4394
        %v4800 = vpop.f32.mrf.mxu0
        %v4801 = vadd.f32 0.0, %v4800
        %v4802 = vpop.f32.mrf.mxu0
        %4803 = vmatprep.mubr.f32.mxu0 0.0
        %4804 = vmatmul.mubr.f32.gmra.mxu0 %v4396
        %v4805 = vpop.f32.mrf.mxu0
        %v4806 = vadd.f32 0.0, %v4805
        %v4807 = vpop.f32.mrf.mxu0
        %4808 = vmatprep.mubr.f32.mxu0 0.0
        %4809 = vmatmul.mubr.f32.gmra.mxu0 %v4398
        %v4810 = vpop.f32.mrf.mxu0
        %v4811 = vadd.f32 0.0, %v4810
        %v4812 = vpop.f32.mrf.mxu0
        %4813 = vmatprep.mubr.f32.mxu0 0.0
        %4814 = vmatmul.mubr.f32.gmra.mxu0 %v4400
        %v4815 = vpop.f32.mrf.mxu0
        %v4816 = vadd.f32 0.0, %v4815
        %v4817 = vpop.f32.mrf.mxu0
        %4818 = vmatprep.mubr.f32.mxu0 0.0
        %4819 = vmatmul.mubr.f32.gmra.mxu0 %v4402
        %v4820 = vpop.f32.mrf.mxu0
        %v4821 = vadd.f32 0.0, %v4820
        %v4822 = vpop.f32.mrf.mxu0
        %4823 = vmatprep.mubr.f32.mxu0 0.0
        %4824 = vmatmul.mubr.f32.gmra.mxu0 %v4404
        %v4825 = vpop.f32.mrf.mxu0
        %v4826 = vadd.f32 0.0, %v4825
        %v4827 = vpop.f32.mrf.mxu0
        %4828 = vmatprep.mubr.f32.mxu0 0.0
        %4829 = vmatmul.mubr.f32.gmra.mxu0 %v4406
        %v4830 = vpop.f32.mrf.mxu0
        %v4831 = vadd.f32 0.0, %v4830
        %v4832 = vpop.f32.mrf.mxu0
        %4833 = vmatprep.mubr.f32.mxu0 0.0
        %4834 = vmatmul.mubr.f32.gmra.mxu0 %v4408
        %v4835 = vpop.f32.mrf.mxu0
        %v4836 = vadd.f32 0.0, %v4835
        %v4837 = vpop.f32.mrf.mxu0
        %4838 = vmatprep.mubr.f32.mxu0 0.0
        %4839 = vmatmul.mubr.f32.gmra.mxu0 %v4410
        %v4840 = vpop.f32.mrf.mxu0
        %v4841 = vadd.f32 0.0, %v4840
        %v4842 = vpop.f32.mrf.mxu0
        %4843 = vmatprep.mubr.f32.mxu0 0.0
        %4844 = vmatmul.mubr.f32.gmra.mxu0 %v4412
        %v4845 = vpop.f32.mrf.mxu0
        %v4846 = vadd.f32 0.0, %v4845
        %v4847 = vpop.f32.mrf.mxu0
        %4848 = vmatprep.mubr.f32.mxu0 0.0
        %4849 = vmatmul.mubr.f32.gmra.mxu0 %v4414
        %v4850 = vpop.f32.mrf.mxu0
        %v4851 = vadd.f32 0.0, %v4850
        %v4852 = vpop.f32.mrf.mxu0
        %4853 = vmatprep.mubr.f32.mxu0 0.0
        %4854 = vmatmul.mubr.f32.gmra.mxu0 %v4416
        %v4855 = vpop.f32.mrf.mxu0
        %v4856 = vadd.f32 0.0, %v4855
        %v4857 = vpop.f32.mrf.mxu0
        %4858 = vmatprep.mubr.f32.mxu0 0.0
        %4859 = vmatmul.mubr.f32.gmra.mxu0 %v4418
        %v4860 = vpop.f32.mrf.mxu0
        %v4861 = vadd.f32 0.0, %v4860
        %v4862 = vpop.f32.mrf.mxu0
        %4863 = vmatprep.mubr.f32.mxu0 0.0
        %4864 = vmatmul.mubr.f32.gmra.mxu0 %v4420
        %v4865 = vpop.f32.mrf.mxu0
        %v4866 = vadd.f32 0.0, %v4865
        %v4867 = vpop.f32.mrf.mxu0
        %4868 = vmatprep.mubr.f32.mxu0 0.0
        %4869 = vmatmul.mubr.f32.gmra.mxu0 %v4422
        %v4870 = vpop.f32.mrf.mxu0
        %v4871 = vadd.f32 0.0, %v4870
        %v4872 = vpop.f32.mrf.mxu0
        %4873 = vmatprep.mubr.f32.mxu0 0.0
        %4874 = vmatmul.mubr.f32.gmra.mxu0 %v4424
        %v4875 = vpop.f32.mrf.mxu0
        %v4876 = vadd.f32 0.0, %v4875
        %v4877 = vpop.f32.mrf.mxu0
        %4878 = vdwg.mxu0
        %v4879 = vmax.f32 %v4493, %v4721
        %v4880 = vmax.f32 %v4498, %v4726
        %v4881 = vmax.f32 %v4503, %v4731
        %v4882 = vmax.f32 %v4508, %v4736
        %v4883 = vmax.f32 %v4513, %v4741
        %v4884 = vmax.f32 %v4518, %v4746
        %v4885 = vmax.f32 %v4523, %v4751
        %v4886 = vmax.f32 %v4528, %v4756
        %v4887 = vmax.f32 %v4533, %v4761
        %v4888 = vmax.f32 %v4538, %v4766
        %v4889 = vmax.f32 %v4543, %v4771
        %v4890 = vmax.f32 %v4548, %v4776
        %v4891 = vmax.f32 %v4553, %v4781
        %v4892 = vmax.f32 %v4558, %v4786
        %v4893 = vmax.f32 %v4563, %v4791
        %v4894 = vmax.f32 %v4568, %v4796
        %v4895 = vmax.f32 %v4573, %v4801
        %v4896 = vmax.f32 %v4578, %v4806
        %v4897 = vmax.f32 %v4583, %v4811
        %v4898 = vmax.f32 %v4588, %v4816
        %v4899 = vmax.f32 %v4593, %v4821
        %v4900 = vmax.f32 %v4598, %v4826
        %v4901 = vmax.f32 %v4603, %v4831
        %v4902 = vmax.f32 %v4608, %v4836
        %v4903 = vmax.f32 %v4613, %v4841
        %v4904 = vmax.f32 %v4618, %v4846
        %v4905 = vmax.f32 %v4623, %v4851
        %v4906 = vmax.f32 %v4628, %v4856
        %v4907 = vmax.f32 %v4633, %v4861
        %v4908 = vmax.f32 %v4638, %v4866
        %v4909 = vmax.f32 %v4643, %v4871
        %v4910 = vmax.f32 %v4648, %v4876
        %s4911 = sld [smem:[#allocation6]]
        %v4912 = vstv %s4911
        %v4913 = vmul.f32 %v4879, %v4912
        %v4914 = vmul.f32 %v4880, %v4912
        %v4915 = vmul.f32 %v4881, %v4912
        %v4916 = vmul.f32 %v4882, %v4912
        %v4917 = vmul.f32 %v4883, %v4912
        %v4918 = vmul.f32 %v4884, %v4912
        %v4919 = vmul.f32 %v4885, %v4912
        %v4920 = vmul.f32 %v4886, %v4912
        %s4921 = sld [smem:[#allocation6 + $0x1]]
        %v4922 = vstv %s4921
        %v4923 = vmul.f32 %v4887, %v4922
        %v4924 = vmul.f32 %v4888, %v4922
        %v4925 = vmul.f32 %v4889, %v4922
        %v4926 = vmul.f32 %v4890, %v4922
        %v4927 = vmul.f32 %v4891, %v4922
        %v4928 = vmul.f32 %v4892, %v4922
        %v4929 = vmul.f32 %v4893, %v4922
        %v4930 = vmul.f32 %v4894, %v4922
        %v4931 = vadd.f32 %v4913, %v4923
        %v4932 = vadd.f32 %v4914, %v4924
        %v4933 = vadd.f32 %v4915, %v4925
        %v4934 = vadd.f32 %v4916, %v4926
        %v4935 = vadd.f32 %v4917, %v4927
        %v4936 = vadd.f32 %v4918, %v4928
        %v4937 = vadd.f32 %v4919, %v4929
        %v4938 = vadd.f32 %v4920, %v4930
        %s4939 = sld [smem:[#allocation6 + $0x2]]
        %v4940 = vstv %s4939
        %v4941 = vmul.f32 %v4895, %v4940
        %v4942 = vmul.f32 %v4896, %v4940
        %v4943 = vmul.f32 %v4897, %v4940
        %v4944 = vmul.f32 %v4898, %v4940
        %v4945 = vmul.f32 %v4899, %v4940
        %v4946 = vmul.f32 %v4900, %v4940
        %v4947 = vmul.f32 %v4901, %v4940
        %v4948 = vmul.f32 %v4902, %v4940
        %v4949 = vadd.f32 %v4931, %v4941
        %v4950 = vadd.f32 %v4932, %v4942
        %v4951 = vadd.f32 %v4933, %v4943
        %v4952 = vadd.f32 %v4934, %v4944
        %v4953 = vadd.f32 %v4935, %v4945
        %v4954 = vadd.f32 %v4936, %v4946
        %v4955 = vadd.f32 %v4937, %v4947
        %v4956 = vadd.f32 %v4938, %v4948
        %s4957 = sld [smem:[#allocation6 + $0x3]]
        %v4958 = vstv %s4957
        %v4959 = vmul.f32 %v4903, %v4958
        %v4960 = vmul.f32 %v4904, %v4958
        %v4961 = vmul.f32 %v4905, %v4958
        %v4962 = vmul.f32 %v4906, %v4958
        %v4963 = vmul.f32 %v4907, %v4958
        %v4964 = vmul.f32 %v4908, %v4958
        %v4965 = vmul.f32 %v4909, %v4958
        %v4966 = vmul.f32 %v4910, %v4958
        %v4967 = vadd.f32 %v4949, %v4959
        %v4968 = vadd.f32 %v4950, %v4960
        %v4969 = vadd.f32 %v4951, %v4961
        %v4970 = vadd.f32 %v4952, %v4962
        %v4971 = vadd.f32 %v4953, %v4963
        %v4972 = vadd.f32 %v4954, %v4964
        %v4973 = vadd.f32 %v4955, %v4965
        %v4974 = vadd.f32 %v4956, %v4966
        %v4975 = vmax.f32 %v4967, 0.0
        %v4976 = vmax.f32 %v4968, 0.0
        %v4977 = vmax.f32 %v4969, 0.0
        %v4978 = vmax.f32 %v4970, 0.0
        %v4979 = vmax.f32 %v4971, 0.0
        %v4980 = vmax.f32 %v4972, 0.0
        %v4981 = vmax.f32 %v4973, 0.0
        %v4982 = vmax.f32 %v4974, 0.0
        %vm4983 = vcmask 64512
        %4984 = vst.msk [vmem:[%s221] sm:$0xff] %vm4983, %v4975
        %4985 = vst.msk [vmem:[%s221 + $0x8] sm:$0xff] %vm4983, %v4976
        %4986 = vst.msk [vmem:[%s221 + $0x10] sm:$0xff] %vm4983, %v4977
        %4987 = vst.msk [vmem:[%s221 + $0x18] sm:$0xff] %vm4983, %v4978
        %4988 = vst.msk [vmem:[%s221 + $0x20] sm:$0xff] %vm4983, %v4979
        %4989 = vst.msk [vmem:[%s221 + $0x28] sm:$0xff] %vm4983, %v4980
        %4990 = vst.msk [vmem:[%s221 + $0x30] sm:$0xff] %vm4983, %v4981
        %4991 = vst.msk [vmem:[%s221 + $0x38] sm:$0xff] %vm4983, %v4982
        %s4992 = sld [smem:[#allocation6 + $0x80]]
        %v4993 = vstv %s4992
        %v4994 = vmul.f32 %v4879, %v4993
        %v4995 = vmul.f32 %v4880, %v4993
        %v4996 = vmul.f32 %v4881, %v4993
        %v4997 = vmul.f32 %v4882, %v4993
        %v4998 = vmul.f32 %v4883, %v4993
        %v4999 = vmul.f32 %v4884, %v4993
        %v5000 = vmul.f32 %v4885, %v4993
        %v5001 = vmul.f32 %v4886, %v4993
        %s5002 = sld [smem:[#allocation6 + $0x81]]
        %v5003 = vstv %s5002
        %v5004 = vmul.f32 %v4887, %v5003
        %v5005 = vmul.f32 %v4888, %v5003
        %v5006 = vmul.f32 %v4889, %v5003
        %v5007 = vmul.f32 %v4890, %v5003
        %v5008 = vmul.f32 %v4891, %v5003
        %v5009 = vmul.f32 %v4892, %v5003
        %v5010 = vmul.f32 %v4893, %v5003
        %v5011 = vmul.f32 %v4894, %v5003
        %v5012 = vadd.f32 %v4994, %v5004
        %v5013 = vadd.f32 %v4995, %v5005
        %v5014 = vadd.f32 %v4996, %v5006
        %v5015 = vadd.f32 %v4997, %v5007
        %v5016 = vadd.f32 %v4998, %v5008
        %v5017 = vadd.f32 %v4999, %v5009
        %v5018 = vadd.f32 %v5000, %v5010
        %v5019 = vadd.f32 %v5001, %v5011
        %s5020 = sld [smem:[#allocation6 + $0x82]]
        %v5021 = vstv %s5020
        %v5022 = vmul.f32 %v4895, %v5021
        %v5023 = vmul.f32 %v4896, %v5021
        %v5024 = vmul.f32 %v4897, %v5021
        %v5025 = vmul.f32 %v4898, %v5021
        %v5026 = vmul.f32 %v4899, %v5021
        %v5027 = vmul.f32 %v4900, %v5021
        %v5028 = vmul.f32 %v4901, %v5021
        %v5029 = vmul.f32 %v4902, %v5021
        %v5030 = vadd.f32 %v5012, %v5022
        %v5031 = vadd.f32 %v5013, %v5023
        %v5032 = vadd.f32 %v5014, %v5024
        %v5033 = vadd.f32 %v5015, %v5025
        %v5034 = vadd.f32 %v5016, %v5026
        %v5035 = vadd.f32 %v5017, %v5027
        %v5036 = vadd.f32 %v5018, %v5028
        %v5037 = vadd.f32 %v5019, %v5029
        %s5038 = sld [smem:[#allocation6 + $0x83]]
        %v5039 = vstv %s5038
        %v5040 = vmul.f32 %v4903, %v5039
        %v5041 = vmul.f32 %v4904, %v5039
        %v5042 = vmul.f32 %v4905, %v5039
        %v5043 = vmul.f32 %v4906, %v5039
        %v5044 = vmul.f32 %v4907, %v5039
        %v5045 = vmul.f32 %v4908, %v5039
        %v5046 = vmul.f32 %v4909, %v5039
        %v5047 = vmul.f32 %v4910, %v5039
        %v5048 = vadd.f32 %v5030, %v5040
        %v5049 = vadd.f32 %v5031, %v5041
        %v5050 = vadd.f32 %v5032, %v5042
        %v5051 = vadd.f32 %v5033, %v5043
        %v5052 = vadd.f32 %v5034, %v5044
        %v5053 = vadd.f32 %v5035, %v5045
        %v5054 = vadd.f32 %v5036, %v5046
        %v5055 = vadd.f32 %v5037, %v5047
        %v5056 = vmax.f32 %v5048, 0.0
        %v5057 = vmax.f32 %v5049, 0.0
        %v5058 = vmax.f32 %v5050, 0.0
        %v5059 = vmax.f32 %v5051, 0.0
        %v5060 = vmax.f32 %v5052, 0.0
        %v5061 = vmax.f32 %v5053, 0.0
        %v5062 = vmax.f32 %v5054, 0.0
        %v5063 = vmax.f32 %v5055, 0.0
        %s5064 = scalar_lea.vmem %s221, 64 [#allocation7]
        %5065 = vst.msk [vmem:[%s5064] sm:$0xff] %vm4983, %v5056
        %5066 = vst.msk [vmem:[%s5064 + $0x8] sm:$0xff] %vm4983, %v5057
        %5067 = vst.msk [vmem:[%s5064 + $0x10] sm:$0xff] %vm4983, %v5058
        %5068 = vst.msk [vmem:[%s5064 + $0x18] sm:$0xff] %vm4983, %v5059
        %5069 = vst.msk [vmem:[%s5064 + $0x20] sm:$0xff] %vm4983, %v5060
        %5070 = vst.msk [vmem:[%s5064 + $0x28] sm:$0xff] %vm4983, %v5061
        %5071 = vst.msk [vmem:[%s5064 + $0x30] sm:$0xff] %vm4983, %v5062
        %5072 = vst.msk [vmem:[%s5064 + $0x38] sm:$0xff] %vm4983, %v5063
        %s5073 = sld [smem:[#allocation6 + $0x100]]
        %v5074 = vstv %s5073
        %v5075 = vmul.f32 %v4879, %v5074
        %v5076 = vmul.f32 %v4880, %v5074
        %v5077 = vmul.f32 %v4881, %v5074
        %v5078 = vmul.f32 %v4882, %v5074
        %v5079 = vmul.f32 %v4883, %v5074
        %v5080 = vmul.f32 %v4884, %v5074
        %v5081 = vmul.f32 %v4885, %v5074
        %v5082 = vmul.f32 %v4886, %v5074
        %s5083 = sld [smem:[#allocation6 + $0x101]]
        %v5084 = vstv %s5083
        %v5085 = vmul.f32 %v4887, %v5084
        %v5086 = vmul.f32 %v4888, %v5084
        %v5087 = vmul.f32 %v4889, %v5084
        %v5088 = vmul.f32 %v4890, %v5084
        %v5089 = vmul.f32 %v4891, %v5084
        %v5090 = vmul.f32 %v4892, %v5084
        %v5091 = vmul.f32 %v4893, %v5084
        %v5092 = vmul.f32 %v4894, %v5084
        %v5093 = vadd.f32 %v5075, %v5085
        %v5094 = vadd.f32 %v5076, %v5086
        %v5095 = vadd.f32 %v5077, %v5087
        %v5096 = vadd.f32 %v5078, %v5088
        %v5097 = vadd.f32 %v5079, %v5089
        %v5098 = vadd.f32 %v5080, %v5090
        %v5099 = vadd.f32 %v5081, %v5091
        %v5100 = vadd.f32 %v5082, %v5092
        %s5101 = sld [smem:[#allocation6 + $0x102]]
        %v5102 = vstv %s5101
        %v5103 = vmul.f32 %v4895, %v5102
        %v5104 = vmul.f32 %v4896, %v5102
        %v5105 = vmul.f32 %v4897, %v5102
        %v5106 = vmul.f32 %v4898, %v5102
        %v5107 = vmul.f32 %v4899, %v5102
        %v5108 = vmul.f32 %v4900, %v5102
        %v5109 = vmul.f32 %v4901, %v5102
        %v5110 = vmul.f32 %v4902, %v5102
        %v5111 = vadd.f32 %v5093, %v5103
        %v5112 = vadd.f32 %v5094, %v5104
        %v5113 = vadd.f32 %v5095, %v5105
        %v5114 = vadd.f32 %v5096, %v5106
        %v5115 = vadd.f32 %v5097, %v5107
        %v5116 = vadd.f32 %v5098, %v5108
        %v5117 = vadd.f32 %v5099, %v5109
        %v5118 = vadd.f32 %v5100, %v5110
        %s5119 = sld [smem:[#allocation6 + $0x103]]
        %v5120 = vstv %s5119
        %v5121 = vmul.f32 %v4903, %v5120
        %v5122 = vmul.f32 %v4904, %v5120
        %v5123 = vmul.f32 %v4905, %v5120
        %v5124 = vmul.f32 %v4906, %v5120
        %v5125 = vmul.f32 %v4907, %v5120
        %v5126 = vmul.f32 %v4908, %v5120
        %v5127 = vmul.f32 %v4909, %v5120
        %v5128 = vmul.f32 %v4910, %v5120
        %v5129 = vadd.f32 %v5111, %v5121
        %v5130 = vadd.f32 %v5112, %v5122
        %v5131 = vadd.f32 %v5113, %v5123
        %v5132 = vadd.f32 %v5114, %v5124
        %v5133 = vadd.f32 %v5115, %v5125
        %v5134 = vadd.f32 %v5116, %v5126
        %v5135 = vadd.f32 %v5117, %v5127
        %v5136 = vadd.f32 %v5118, %v5128
        %v5137 = vmax.f32 %v5129, 0.0
        %v5138 = vmax.f32 %v5130, 0.0
        %v5139 = vmax.f32 %v5131, 0.0
        %v5140 = vmax.f32 %v5132, 0.0
        %v5141 = vmax.f32 %v5133, 0.0
        %v5142 = vmax.f32 %v5134, 0.0
        %v5143 = vmax.f32 %v5135, 0.0
        %v5144 = vmax.f32 %v5136, 0.0
        %s5145 = scalar_lea.vmem %s221, 128 [#allocation7]
        %5146 = vst.msk [vmem:[%s5145] sm:$0xff] %vm4983, %v5137
        %5147 = vst.msk [vmem:[%s5145 + $0x8] sm:$0xff] %vm4983, %v5138
        %5148 = vst.msk [vmem:[%s5145 + $0x10] sm:$0xff] %vm4983, %v5139
        %5149 = vst.msk [vmem:[%s5145 + $0x18] sm:$0xff] %vm4983, %v5140
        %5150 = vst.msk [vmem:[%s5145 + $0x20] sm:$0xff] %vm4983, %v5141
        %5151 = vst.msk [vmem:[%s5145 + $0x28] sm:$0xff] %vm4983, %v5142
        %5152 = vst.msk [vmem:[%s5145 + $0x30] sm:$0xff] %vm4983, %v5143
        %5153 = vst.msk [vmem:[%s5145 + $0x38] sm:$0xff] %vm4983, %v5144
        %s5154 = sld [smem:[#allocation6 + $0x180]]
        %v5155 = vstv %s5154
        %v5156 = vmul.f32 %v4879, %v5155
        %v5157 = vmul.f32 %v4880, %v5155
        %v5158 = vmul.f32 %v4881, %v5155
        %v5159 = vmul.f32 %v4882, %v5155
        %v5160 = vmul.f32 %v4883, %v5155
        %v5161 = vmul.f32 %v4884, %v5155
        %v5162 = vmul.f32 %v4885, %v5155
        %v5163 = vmul.f32 %v4886, %v5155
        %s5164 = sld [smem:[#allocation6 + $0x181]]
        %v5165 = vstv %s5164
        %v5166 = vmul.f32 %v4887, %v5165
        %v5167 = vmul.f32 %v4888, %v5165
        %v5168 = vmul.f32 %v4889, %v5165
        %v5169 = vmul.f32 %v4890, %v5165
        %v5170 = vmul.f32 %v4891, %v5165
        %v5171 = vmul.f32 %v4892, %v5165
        %v5172 = vmul.f32 %v4893, %v5165
        %v5173 = vmul.f32 %v4894, %v5165
        %v5174 = vadd.f32 %v5156, %v5166
        %v5175 = vadd.f32 %v5157, %v5167
        %v5176 = vadd.f32 %v5158, %v5168
        %v5177 = vadd.f32 %v5159, %v5169
        %v5178 = vadd.f32 %v5160, %v5170
        %v5179 = vadd.f32 %v5161, %v5171
        %v5180 = vadd.f32 %v5162, %v5172
        %v5181 = vadd.f32 %v5163, %v5173
        %s5182 = sld [smem:[#allocation6 + $0x182]]
        %v5183 = vstv %s5182
        %v5184 = vmul.f32 %v4895, %v5183
        %v5185 = vmul.f32 %v4896, %v5183
        %v5186 = vmul.f32 %v4897, %v5183
        %v5187 = vmul.f32 %v4898, %v5183
        %v5188 = vmul.f32 %v4899, %v5183
        %v5189 = vmul.f32 %v4900, %v5183
        %v5190 = vmul.f32 %v4901, %v5183
        %v5191 = vmul.f32 %v4902, %v5183
        %v5192 = vadd.f32 %v5174, %v5184
        %v5193 = vadd.f32 %v5175, %v5185
        %v5194 = vadd.f32 %v5176, %v5186
        %v5195 = vadd.f32 %v5177, %v5187
        %v5196 = vadd.f32 %v5178, %v5188
        %v5197 = vadd.f32 %v5179, %v5189
        %v5198 = vadd.f32 %v5180, %v5190
        %v5199 = vadd.f32 %v5181, %v5191
        %s5200 = sld [smem:[#allocation6 + $0x183]]
        %v5201 = vstv %s5200
        %v5202 = vmul.f32 %v4903, %v5201
        %v5203 = vmul.f32 %v4904, %v5201
        %v5204 = vmul.f32 %v4905, %v5201
        %v5205 = vmul.f32 %v4906, %v5201
        %v5206 = vmul.f32 %v4907, %v5201
        %v5207 = vmul.f32 %v4908, %v5201
        %v5208 = vmul.f32 %v4909, %v5201
        %v5209 = vmul.f32 %v4910, %v5201
        %v5210 = vadd.f32 %v5192, %v5202
        %v5211 = vadd.f32 %v5193, %v5203
        %v5212 = vadd.f32 %v5194, %v5204
        %v5213 = vadd.f32 %v5195, %v5205
        %v5214 = vadd.f32 %v5196, %v5206
        %v5215 = vadd.f32 %v5197, %v5207
        %v5216 = vadd.f32 %v5198, %v5208
        %v5217 = vadd.f32 %v5199, %v5209
        %v5218 = vmax.f32 %v5210, 0.0
        %v5219 = vmax.f32 %v5211, 0.0
        %v5220 = vmax.f32 %v5212, 0.0
        %v5221 = vmax.f32 %v5213, 0.0
        %v5222 = vmax.f32 %v5214, 0.0
        %v5223 = vmax.f32 %v5215, 0.0
        %v5224 = vmax.f32 %v5216, 0.0
        %v5225 = vmax.f32 %v5217, 0.0
        %s5226 = scalar_lea.vmem %s221, 192 [#allocation7]
        %5227 = vst.msk [vmem:[%s5226] sm:$0xff] %vm4983, %v5218
        %5228 = vst.msk [vmem:[%s5226 + $0x8] sm:$0xff] %vm4983, %v5219
        %5229 = vst.msk [vmem:[%s5226 + $0x10] sm:$0xff] %vm4983, %v5220
        %5230 = vst.msk [vmem:[%s5226 + $0x18] sm:$0xff] %vm4983, %v5221
        %5231 = vst.msk [vmem:[%s5226 + $0x20] sm:$0xff] %vm4983, %v5222
        %5232 = vst.msk [vmem:[%s5226 + $0x28] sm:$0xff] %vm4983, %v5223
        %5233 = vst.msk [vmem:[%s5226 + $0x30] sm:$0xff] %vm4983, %v5224
        %5234 = vst.msk [vmem:[%s5226 + $0x38] sm:$0xff] %vm4983, %v5225
        %s5235 = sld [smem:[#allocation6 + $0x200]]
        %v5236 = vstv %s5235
        %v5237 = vmul.f32 %v4879, %v5236
        %v5238 = vmul.f32 %v4880, %v5236
        %v5239 = vmul.f32 %v4881, %v5236
        %v5240 = vmul.f32 %v4882, %v5236
        %v5241 = vmul.f32 %v4883, %v5236
        %v5242 = vmul.f32 %v4884, %v5236
        %v5243 = vmul.f32 %v4885, %v5236
        %v5244 = vmul.f32 %v4886, %v5236
        %s5245 = sld [smem:[#allocation6 + $0x201]]
        %v5246 = vstv %s5245
        %v5247 = vmul.f32 %v4887, %v5246
        %v5248 = vmul.f32 %v4888, %v5246
        %v5249 = vmul.f32 %v4889, %v5246
        %v5250 = vmul.f32 %v4890, %v5246
        %v5251 = vmul.f32 %v4891, %v5246
        %v5252 = vmul.f32 %v4892, %v5246
        %v5253 = vmul.f32 %v4893, %v5246
        %v5254 = vmul.f32 %v4894, %v5246
        %v5255 = vadd.f32 %v5237, %v5247
        %v5256 = vadd.f32 %v5238, %v5248
        %v5257 = vadd.f32 %v5239, %v5249
        %v5258 = vadd.f32 %v5240, %v5250
        %v5259 = vadd.f32 %v5241, %v5251
        %v5260 = vadd.f32 %v5242, %v5252
        %v5261 = vadd.f32 %v5243, %v5253
        %v5262 = vadd.f32 %v5244, %v5254
        %s5263 = sld [smem:[#allocation6 + $0x202]]
        %v5264 = vstv %s5263
        %v5265 = vmul.f32 %v4895, %v5264
        %v5266 = vmul.f32 %v4896, %v5264
        %v5267 = vmul.f32 %v4897, %v5264
        %v5268 = vmul.f32 %v4898, %v5264
        %v5269 = vmul.f32 %v4899, %v5264
        %v5270 = vmul.f32 %v4900, %v5264
        %v5271 = vmul.f32 %v4901, %v5264
        %v5272 = vmul.f32 %v4902, %v5264
        %v5273 = vadd.f32 %v5255, %v5265
        %v5274 = vadd.f32 %v5256, %v5266
        %v5275 = vadd.f32 %v5257, %v5267
        %v5276 = vadd.f32 %v5258, %v5268
        %v5277 = vadd.f32 %v5259, %v5269
        %v5278 = vadd.f32 %v5260, %v5270
        %v5279 = vadd.f32 %v5261, %v5271
        %v5280 = vadd.f32 %v5262, %v5272
        %s5281 = sld [smem:[#allocation6 + $0x203]]
        %v5282 = vstv %s5281
        %v5283 = vmul.f32 %v4903, %v5282
        %v5284 = vmul.f32 %v4904, %v5282
        %v5285 = vmul.f32 %v4905, %v5282
        %v5286 = vmul.f32 %v4906, %v5282
        %v5287 = vmul.f32 %v4907, %v5282
        %v5288 = vmul.f32 %v4908, %v5282
        %v5289 = vmul.f32 %v4909, %v5282
        %v5290 = vmul.f32 %v4910, %v5282
        %v5291 = vadd.f32 %v5273, %v5283
        %v5292 = vadd.f32 %v5274, %v5284
        %v5293 = vadd.f32 %v5275, %v5285
        %v5294 = vadd.f32 %v5276, %v5286
        %v5295 = vadd.f32 %v5277, %v5287
        %v5296 = vadd.f32 %v5278, %v5288
        %v5297 = vadd.f32 %v5279, %v5289
        %v5298 = vadd.f32 %v5280, %v5290
        %v5299 = vmax.f32 %v5291, 0.0
        %v5300 = vmax.f32 %v5292, 0.0
        %v5301 = vmax.f32 %v5293, 0.0
        %v5302 = vmax.f32 %v5294, 0.0
        %v5303 = vmax.f32 %v5295, 0.0
        %v5304 = vmax.f32 %v5296, 0.0
        %v5305 = vmax.f32 %v5297, 0.0
        %v5306 = vmax.f32 %v5298, 0.0
        %s5307 = scalar_lea.vmem %s221, 256 [#allocation7]
        %5308 = vst.msk [vmem:[%s5307] sm:$0xff] %vm4983, %v5299
        %5309 = vst.msk [vmem:[%s5307 + $0x8] sm:$0xff] %vm4983, %v5300
        %5310 = vst.msk [vmem:[%s5307 + $0x10] sm:$0xff] %vm4983, %v5301
        %5311 = vst.msk [vmem:[%s5307 + $0x18] sm:$0xff] %vm4983, %v5302
        %5312 = vst.msk [vmem:[%s5307 + $0x20] sm:$0xff] %vm4983, %v5303
        %5313 = vst.msk [vmem:[%s5307 + $0x28] sm:$0xff] %vm4983, %v5304
        %5314 = vst.msk [vmem:[%s5307 + $0x30] sm:$0xff] %vm4983, %v5305
        %5315 = vst.msk [vmem:[%s5307 + $0x38] sm:$0xff] %vm4983, %v5306
        %s5316 = sld [smem:[#allocation6 + $0x280]]
        %v5317 = vstv %s5316
        %v5318 = vmul.f32 %v4879, %v5317
        %v5319 = vmul.f32 %v4880, %v5317
        %v5320 = vmul.f32 %v4881, %v5317
        %v5321 = vmul.f32 %v4882, %v5317
        %v5322 = vmul.f32 %v4883, %v5317
        %v5323 = vmul.f32 %v4884, %v5317
        %v5324 = vmul.f32 %v4885, %v5317
        %v5325 = vmul.f32 %v4886, %v5317
        %s5326 = sld [smem:[#allocation6 + $0x281]]
        %v5327 = vstv %s5326
        %v5328 = vmul.f32 %v4887, %v5327
        %v5329 = vmul.f32 %v4888, %v5327
        %v5330 = vmul.f32 %v4889, %v5327
        %v5331 = vmul.f32 %v4890, %v5327
        %v5332 = vmul.f32 %v4891, %v5327
        %v5333 = vmul.f32 %v4892, %v5327
        %v5334 = vmul.f32 %v4893, %v5327
        %v5335 = vmul.f32 %v4894, %v5327
        %v5336 = vadd.f32 %v5318, %v5328
        %v5337 = vadd.f32 %v5319, %v5329
        %v5338 = vadd.f32 %v5320, %v5330
        %v5339 = vadd.f32 %v5321, %v5331
        %v5340 = vadd.f32 %v5322, %v5332
        %v5341 = vadd.f32 %v5323, %v5333
        %v5342 = vadd.f32 %v5324, %v5334
        %v5343 = vadd.f32 %v5325, %v5335
        %s5344 = sld [smem:[#allocation6 + $0x282]]
        %v5345 = vstv %s5344
        %v5346 = vmul.f32 %v4895, %v5345
        %v5347 = vmul.f32 %v4896, %v5345
        %v5348 = vmul.f32 %v4897, %v5345
        %v5349 = vmul.f32 %v4898, %v5345
        %v5350 = vmul.f32 %v4899, %v5345
        %v5351 = vmul.f32 %v4900, %v5345
        %v5352 = vmul.f32 %v4901, %v5345
        %v5353 = vmul.f32 %v4902, %v5345
        %v5354 = vadd.f32 %v5336, %v5346
        %v5355 = vadd.f32 %v5337, %v5347
        %v5356 = vadd.f32 %v5338, %v5348
        %v5357 = vadd.f32 %v5339, %v5349
        %v5358 = vadd.f32 %v5340, %v5350
        %v5359 = vadd.f32 %v5341, %v5351
        %v5360 = vadd.f32 %v5342, %v5352
        %v5361 = vadd.f32 %v5343, %v5353
        %s5362 = sld [smem:[#allocation6 + $0x283]]
        %v5363 = vstv %s5362
        %v5364 = vmul.f32 %v4903, %v5363
        %v5365 = vmul.f32 %v4904, %v5363
        %v5366 = vmul.f32 %v4905, %v5363
        %v5367 = vmul.f32 %v4906, %v5363
        %v5368 = vmul.f32 %v4907, %v5363
        %v5369 = vmul.f32 %v4908, %v5363
        %v5370 = vmul.f32 %v4909, %v5363
        %v5371 = vmul.f32 %v4910, %v5363
        %v5372 = vadd.f32 %v5354, %v5364
        %v5373 = vadd.f32 %v5355, %v5365
        %v5374 = vadd.f32 %v5356, %v5366
        %v5375 = vadd.f32 %v5357, %v5367
        %v5376 = vadd.f32 %v5358, %v5368
        %v5377 = vadd.f32 %v5359, %v5369
        %v5378 = vadd.f32 %v5360, %v5370
        %v5379 = vadd.f32 %v5361, %v5371
        %v5380 = vmax.f32 %v5372, 0.0
        %v5381 = vmax.f32 %v5373, 0.0
        %v5382 = vmax.f32 %v5374, 0.0
        %v5383 = vmax.f32 %v5375, 0.0
        %v5384 = vmax.f32 %v5376, 0.0
        %v5385 = vmax.f32 %v5377, 0.0
        %v5386 = vmax.f32 %v5378, 0.0
        %v5387 = vmax.f32 %v5379, 0.0
        %s5388 = scalar_lea.vmem %s221, 320 [#allocation7]
        %5389 = vst.msk [vmem:[%s5388] sm:$0xff] %vm4983, %v5380
        %5390 = vst.msk [vmem:[%s5388 + $0x8] sm:$0xff] %vm4983, %v5381
        %5391 = vst.msk [vmem:[%s5388 + $0x10] sm:$0xff] %vm4983, %v5382
        %5392 = vst.msk [vmem:[%s5388 + $0x18] sm:$0xff] %vm4983, %v5383
        %5393 = vst.msk [vmem:[%s5388 + $0x20] sm:$0xff] %vm4983, %v5384
        %5394 = vst.msk [vmem:[%s5388 + $0x28] sm:$0xff] %vm4983, %v5385
        %5395 = vst.msk [vmem:[%s5388 + $0x30] sm:$0xff] %vm4983, %v5386
        %5396 = vst.msk [vmem:[%s5388 + $0x38] sm:$0xff] %vm4983, %v5387
        %s5397 = sld [smem:[#allocation6 + $0x300]]
        %v5398 = vstv %s5397
        %v5399 = vmul.f32 %v4879, %v5398
        %v5400 = vmul.f32 %v4880, %v5398
        %v5401 = vmul.f32 %v4881, %v5398
        %v5402 = vmul.f32 %v4882, %v5398
        %v5403 = vmul.f32 %v4883, %v5398
        %v5404 = vmul.f32 %v4884, %v5398
        %v5405 = vmul.f32 %v4885, %v5398
        %v5406 = vmul.f32 %v4886, %v5398
        %s5407 = sld [smem:[#allocation6 + $0x301]]
        %v5408 = vstv %s5407
        %v5409 = vmul.f32 %v4887, %v5408
        %v5410 = vmul.f32 %v4888, %v5408
        %v5411 = vmul.f32 %v4889, %v5408
        %v5412 = vmul.f32 %v4890, %v5408
        %v5413 = vmul.f32 %v4891, %v5408
        %v5414 = vmul.f32 %v4892, %v5408
        %v5415 = vmul.f32 %v4893, %v5408
        %v5416 = vmul.f32 %v4894, %v5408
        %v5417 = vadd.f32 %v5399, %v5409
        %v5418 = vadd.f32 %v5400, %v5410
        %v5419 = vadd.f32 %v5401, %v5411
        %v5420 = vadd.f32 %v5402, %v5412
        %v5421 = vadd.f32 %v5403, %v5413
        %v5422 = vadd.f32 %v5404, %v5414
        %v5423 = vadd.f32 %v5405, %v5415
        %v5424 = vadd.f32 %v5406, %v5416
        %s5425 = sld [smem:[#allocation6 + $0x302]]
        %v5426 = vstv %s5425
        %v5427 = vmul.f32 %v4895, %v5426
        %v5428 = vmul.f32 %v4896, %v5426
        %v5429 = vmul.f32 %v4897, %v5426
        %v5430 = vmul.f32 %v4898, %v5426
        %v5431 = vmul.f32 %v4899, %v5426
        %v5432 = vmul.f32 %v4900, %v5426
        %v5433 = vmul.f32 %v4901, %v5426
        %v5434 = vmul.f32 %v4902, %v5426
        %v5435 = vadd.f32 %v5417, %v5427
        %v5436 = vadd.f32 %v5418, %v5428
        %v5437 = vadd.f32 %v5419, %v5429
        %v5438 = vadd.f32 %v5420, %v5430
        %v5439 = vadd.f32 %v5421, %v5431
        %v5440 = vadd.f32 %v5422, %v5432
        %v5441 = vadd.f32 %v5423, %v5433
        %v5442 = vadd.f32 %v5424, %v5434
        %s5443 = sld [smem:[#allocation6 + $0x303]]
        %v5444 = vstv %s5443
        %v5445 = vmul.f32 %v4903, %v5444
        %v5446 = vmul.f32 %v4904, %v5444
        %v5447 = vmul.f32 %v4905, %v5444
        %v5448 = vmul.f32 %v4906, %v5444
        %v5449 = vmul.f32 %v4907, %v5444
        %v5450 = vmul.f32 %v4908, %v5444
        %v5451 = vmul.f32 %v4909, %v5444
        %v5452 = vmul.f32 %v4910, %v5444
        %v5453 = vadd.f32 %v5435, %v5445
        %v5454 = vadd.f32 %v5436, %v5446
        %v5455 = vadd.f32 %v5437, %v5447
        %v5456 = vadd.f32 %v5438, %v5448
        %v5457 = vadd.f32 %v5439, %v5449
        %v5458 = vadd.f32 %v5440, %v5450
        %v5459 = vadd.f32 %v5441, %v5451
        %v5460 = vadd.f32 %v5442, %v5452
        %v5461 = vmax.f32 %v5453, 0.0
        %v5462 = vmax.f32 %v5454, 0.0
        %v5463 = vmax.f32 %v5455, 0.0
        %v5464 = vmax.f32 %v5456, 0.0
        %v5465 = vmax.f32 %v5457, 0.0
        %v5466 = vmax.f32 %v5458, 0.0
        %v5467 = vmax.f32 %v5459, 0.0
        %v5468 = vmax.f32 %v5460, 0.0
        %s5469 = scalar_lea.vmem %s221, 384 [#allocation7]
        %5470 = vst.msk [vmem:[%s5469] sm:$0xff] %vm4983, %v5461
        %5471 = vst.msk [vmem:[%s5469 + $0x8] sm:$0xff] %vm4983, %v5462
        %5472 = vst.msk [vmem:[%s5469 + $0x10] sm:$0xff] %vm4983, %v5463
        %5473 = vst.msk [vmem:[%s5469 + $0x18] sm:$0xff] %vm4983, %v5464
        %5474 = vst.msk [vmem:[%s5469 + $0x20] sm:$0xff] %vm4983, %v5465
        %5475 = vst.msk [vmem:[%s5469 + $0x28] sm:$0xff] %vm4983, %v5466
        %5476 = vst.msk [vmem:[%s5469 + $0x30] sm:$0xff] %vm4983, %v5467
        %5477 = vst.msk [vmem:[%s5469 + $0x38] sm:$0xff] %vm4983, %v5468
        %s5478 = sld [smem:[#allocation6 + $0x380]]
        %v5479 = vstv %s5478
        %v5480 = vmul.f32 %v4879, %v5479
        %v5481 = vmul.f32 %v4880, %v5479
        %v5482 = vmul.f32 %v4881, %v5479
        %v5483 = vmul.f32 %v4882, %v5479
        %v5484 = vmul.f32 %v4883, %v5479
        %v5485 = vmul.f32 %v4884, %v5479
        %v5486 = vmul.f32 %v4885, %v5479
        %v5487 = vmul.f32 %v4886, %v5479
        %s5488 = sld [smem:[#allocation6 + $0x381]]
        %v5489 = vstv %s5488
        %v5490 = vmul.f32 %v4887, %v5489
        %v5491 = vmul.f32 %v4888, %v5489
        %v5492 = vmul.f32 %v4889, %v5489
        %v5493 = vmul.f32 %v4890, %v5489
        %v5494 = vmul.f32 %v4891, %v5489
        %v5495 = vmul.f32 %v4892, %v5489
        %v5496 = vmul.f32 %v4893, %v5489
        %v5497 = vmul.f32 %v4894, %v5489
        %v5498 = vadd.f32 %v5480, %v5490
        %v5499 = vadd.f32 %v5481, %v5491
        %v5500 = vadd.f32 %v5482, %v5492
        %v5501 = vadd.f32 %v5483, %v5493
        %v5502 = vadd.f32 %v5484, %v5494
        %v5503 = vadd.f32 %v5485, %v5495
        %v5504 = vadd.f32 %v5486, %v5496
        %v5505 = vadd.f32 %v5487, %v5497
        %s5506 = sld [smem:[#allocation6 + $0x382]]
        %v5507 = vstv %s5506
        %v5508 = vmul.f32 %v4895, %v5507
        %v5509 = vmul.f32 %v4896, %v5507
        %v5510 = vmul.f32 %v4897, %v5507
        %v5511 = vmul.f32 %v4898, %v5507
        %v5512 = vmul.f32 %v4899, %v5507
        %v5513 = vmul.f32 %v4900, %v5507
        %v5514 = vmul.f32 %v4901, %v5507
        %v5515 = vmul.f32 %v4902, %v5507
        %v5516 = vadd.f32 %v5498, %v5508
        %v5517 = vadd.f32 %v5499, %v5509
        %v5518 = vadd.f32 %v5500, %v5510
        %v5519 = vadd.f32 %v5501, %v5511
        %v5520 = vadd.f32 %v5502, %v5512
        %v5521 = vadd.f32 %v5503, %v5513
        %v5522 = vadd.f32 %v5504, %v5514
        %v5523 = vadd.f32 %v5505, %v5515
        %s5524 = sld [smem:[#allocation6 + $0x383]]
        %v5525 = vstv %s5524
        %v5526 = vmul.f32 %v4903, %v5525
        %v5527 = vmul.f32 %v4904, %v5525
        %v5528 = vmul.f32 %v4905, %v5525
        %v5529 = vmul.f32 %v4906, %v5525
        %v5530 = vmul.f32 %v4907, %v5525
        %v5531 = vmul.f32 %v4908, %v5525
        %v5532 = vmul.f32 %v4909, %v5525
        %v5533 = vmul.f32 %v4910, %v5525
        %v5534 = vadd.f32 %v5516, %v5526
        %v5535 = vadd.f32 %v5517, %v5527
        %v5536 = vadd.f32 %v5518, %v5528
        %v5537 = vadd.f32 %v5519, %v5529
        %v5538 = vadd.f32 %v5520, %v5530
        %v5539 = vadd.f32 %v5521, %v5531
        %v5540 = vadd.f32 %v5522, %v5532
        %v5541 = vadd.f32 %v5523, %v5533
        %v5542 = vmax.f32 %v5534, 0.0
        %v5543 = vmax.f32 %v5535, 0.0
        %v5544 = vmax.f32 %v5536, 0.0
        %v5545 = vmax.f32 %v5537, 0.0
        %v5546 = vmax.f32 %v5538, 0.0
        %v5547 = vmax.f32 %v5539, 0.0
        %v5548 = vmax.f32 %v5540, 0.0
        %v5549 = vmax.f32 %v5541, 0.0
        %s5550 = scalar_lea.vmem %s221, 448 [#allocation7]
        %5551 = vst.msk [vmem:[%s5550] sm:$0xff] %vm4983, %v5542
        %5552 = vst.msk [vmem:[%s5550 + $0x8] sm:$0xff] %vm4983, %v5543
        %5553 = vst.msk [vmem:[%s5550 + $0x10] sm:$0xff] %vm4983, %v5544
        %5554 = vst.msk [vmem:[%s5550 + $0x18] sm:$0xff] %vm4983, %v5545
        %5555 = vst.msk [vmem:[%s5550 + $0x20] sm:$0xff] %vm4983, %v5546
        %5556 = vst.msk [vmem:[%s5550 + $0x28] sm:$0xff] %vm4983, %v5547
        %5557 = vst.msk [vmem:[%s5550 + $0x30] sm:$0xff] %vm4983, %v5548
        %5558 = vst.msk [vmem:[%s5550 + $0x38] sm:$0xff] %vm4983, %v5549
        %s5559 = sand.u32 %s113, 1
        %s5560 = scalar_lea.sflag [#allocation4], %s5559
        %s5561 = sand.u32 %s113, 1
        %s5562 = smul.addr %s5561, 512
        %s5563 = scalar_lea.vmem [#allocation7], %s5562
        // Predicated region
        $region41: #{tpu_custom_call.1} parent=31 // pred_check
          %p5564 = pneg %p123
        $region42: #{tpu_custom_call.1} parent=31 // pred_check_branch
          %5566 = sbr.rel (%p5564) target = $region44
        $region43: #{tpu_custom_call.1} parent=31 // pred_region
          %s5567 = smul.u32 8, %s26
          %s5569 = ssub.s32 8192, 8192
          %5570 = vsyncadd %s5560, %s5569
          %s5571 = smul.addr %s25, 64
          %s5572 = sadd.s32 %s5567, %s5571
          %s5573 = smul.addr %s5572, 128
          %s5574 = scalar_lea.hbm %s3, %s5573
          %s5575 = sshll.u32 %s5563, 4
          %s5576 = int_to_ptr.vmem [resolvable:$true] %s5575
          %5581 = dma.vmem_to_hbm [thread:$0]  %s5576, 8192, %s5574, %s5560, 128, 128, 8
        $region44: #{tpu_custom_call.1} parent=31 // pred_fallthru
          _
      $region32: #{tpu_custom_call.1} parent=5 // pred_fallthru
        _
      %p5582 = scmp.le.s32.totalorder 2, %s16
      // Predicated region
      $region45: #{tpu_custom_call.1} parent=5 // pred_check
        %p5583 = pneg %p5582
      $region46: #{tpu_custom_call.1} parent=5 // pred_check_branch
        %5585 = sbr.rel (%p5583) target = $region48
      $region47: #{tpu_custom_call.1} parent=5 // pred_region
        %s5586 = ssub.s32 %s16, 2
        // Predicated region
        $region49: #{tpu_custom_call.1} parent=47 // pred_check
          %p5587 = pneg %p129
        $region50: #{tpu_custom_call.1} parent=47 // pred_check_branch
          %5589 = sbr.rel (%p5587) target = $region52
        $region51: #{tpu_custom_call.1} parent=47 // pred_region
          %s5590 = sand.u32 %s114, 1
          %s5591 = scalar_lea.sflag [#allocation4], %s5590
          %s5592 = sand.u32 %s114, 1
          %s5593 = smul.addr %s5592, 512
          %s5594 = scalar_lea.vmem [#allocation7], %s5593
          %5595 = dma.done %s5591, 8192
        $region52: #{tpu_custom_call.1} parent=47 // pred_fallthru
          _
      $region48: #{tpu_custom_call.1} parent=5 // pred_fallthru
        _
    $region6: #{tpu_custom_call.1} parent=1 // loop_footer
      %s20 = sadd.s32 1, %s16
    $region7: #{tpu_custom_call.1} parent=1 // loop_footer_branch
      %15 = sbr.rel target = $region3
    $region8: #{tpu_custom_call.1} parent=1 // loop_exit
      _
    %5596 = vsyncpa [#allocation3], 1
    %s5597 = scalar_lea.sflag [#allocation3], 1
    %5598 = vsyncpa %s5597, 1
    %5599 = vsyncpa [#allocation4], 1
    %s5600 = scalar_lea.sflag [#allocation4], 1
    %5601 = vsyncpa %s5600, 1
    %5602 = vsyncpa [#allocation5], 1
    %s5603 = scalar_lea.sflag [#allocation5], 1
    %5604 = vsyncpa %s5603, 1

</llo_original>
